<compile_context>
chip_gen: v7x
topology: tpu7x:2x2x1
jax: 0.10.0
libtpu: 0.0.40
codegen_flags: <defaults>
</compile_context>

<pallas_src>
import functools

import jax
import jax.numpy as jnp
from jax.experimental import pallas as pl
from jax.experimental.pallas import tpu as pltpu

LANE = 128  # lane-padding width for features / hidden / classes


# ----------------------------------------------------------------------------- kernel
def gnn_kernel(ahat_ref, x_ref, pool_ref, w_ref, b_ref, out_ref, h_ref, m_ref,
               *, n_gcn, n_mlp, kb, tn, tg):
    """One grid step = kb independent 128-node diagonal blocks (kb*tg graphs)."""
    # Node features for this step's kb blocks into the persistent bf16 scratch.
    h_ref[...] = x_ref[...]                                   # [kb*tn, LANE] bf16

    # --- GCNConv stack: h = relu( Ahat @ (h @ W_l) + b_l ) ----------------------
    for l in range(n_gcn):
        w = w_ref[l * LANE:(l + 1) * LANE, :]                 # bf16 [LANE, LANE]
        b = b_ref[l:l + 1, :]                                 # f32  [1, LANE]
        # Weight-stationary tall-M matmul over all kb sub-blocks at once.
        hw = jnp.dot(h_ref[...], w, preferred_element_type=jnp.float32)
        # Ahat stays block-diagonal: one 128x128 matmul per sub-block; the f32
        # z, bias+ReLU and the bf16 pack of hw are chunked at 128 rows.
        for k in range(kb):
            hw_k = hw[k * tn:(k + 1) * tn, :].astype(jnp.bfloat16)
            a_k = ahat_ref[k * tn:(k + 1) * tn, :]            # bf16 [tn, tn]
            z = jnp.dot(a_k, hw_k, preferred_element_type=jnp.float32)
            h_ref[k * tn:(k + 1) * tn, :] = (
                jnp.maximum(z + b, 0.0).astype(jnp.bfloat16))

    # --- global_add_pool: exact per-graph segment sum via one-hot matmuls -------
    for k in range(kb):
        m_ref[k * tg:(k + 1) * tg, :] = jnp.dot(
            pool_ref[k * tg:(k + 1) * tg, :], h_ref[k * tn:(k + 1) * tn, :],
            preferred_element_type=jnp.float32)

    # --- MLP head: Lin -> ReLU -> Lin -> ReLU -> Lin -----------------------------
    m = m_ref[...]                                            # [kb*tg, LANE] f32
    for j in range(n_mlp):
        l = n_gcn + j
        w = w_ref[l * LANE:(l + 1) * LANE, :]
        b = b_ref[l:l + 1, :]
        z = jnp.dot(m.astype(jnp.bfloat16), w,
                    preferred_element_type=jnp.float32) + b
        m = jnp.maximum(z, 0.0) if j < n_mlp - 1 else z

    out_ref[...] = m                                          # lane-dense f32 store


# ----------------------------------------------------------------------------- wrapper
def gnn_forward(ahat_stack, x_pad, pool_stack, w_slab, b_slab, *,
                num_steps, kb, tn, tg, n_gcn, n_mlp, num_classes):
    num_graphs = num_steps * kb * tg
    kernel = functools.partial(gnn_kernel, n_gcn=n_gcn, n_mlp=n_mlp,
                               kb=kb, tn=tn, tg=tg)
    vmem = pltpu.MemorySpace.VMEM
    out = pl.pallas_call(
        kernel,
        grid=(num_steps,),
        in_specs=[
            # kb stacked diagonal blocks of the normalized adjacency per step
            pl.BlockSpec((kb * tn, tn), lambda t: (t, 0), memory_space=vmem),
            # node features (feature dim padded to 128 lanes)
            pl.BlockSpec((kb * tn, LANE), lambda t: (t, 0), memory_space=vmem),
            # one-hot pooling rows for the kb*tg graphs in this step
            pl.BlockSpec((kb * tg, tn), lambda t: (t, 0), memory_space=vmem),
            # packed weight slab: constant block index -> DMA'd once, VMEM-resident
            pl.BlockSpec(w_slab.shape, lambda t: (0, 0), memory_space=vmem),
            # packed bias slab: resident
            pl.BlockSpec(b_slab.shape, lambda t: (0, 0), memory_space=vmem),
        ],
        out_specs=pl.BlockSpec((kb * tg, LANE), lambda t: (t, 0), memory_space=vmem),
        out_shape=jax.ShapeDtypeStruct((num_graphs, LANE), jnp.float32),
        scratch_shapes=[
            pltpu.VMEM((kb * tn, LANE), jnp.bfloat16),   # running node features
            pltpu.VMEM((kb * tg, LANE), jnp.float32),    # pooled per-graph features
        ],
        compiler_params=pltpu.CompilerParams(
            dimension_semantics=("parallel",)),   # v7x: 2 TCs split the steps
    )(ahat_stack, x_pad, pool_stack, w_slab, b_slab)
    return out[:, :num_classes]


# ----------------------------------------------------------------------------- glue
def build_normalized_adjacency(src, dst, num_nodes):
    """Dense Ahat = D^-1/2 (A + I) D^-1/2 (PyG gcn_norm) for one block.

    Self-loops are set (not added); assumes a symmetric (bidirectional) edge list.
    """
    adj = jnp.zeros((num_nodes, num_nodes), jnp.float32).at[src, dst].set(1.0)
    adj = jnp.maximum(adj, jnp.eye(num_nodes, dtype=jnp.float32))
    deg = adj.sum(axis=1)
    dinv = jnp.where(deg > 0, 1.0 / jnp.sqrt(deg), 0.0)
    return dinv[:, None] * adj * dinv[None, :]


def init_params(key, num_features, hidden, num_classes, gnn_depth):
    """Deterministic synthetic parameters (shapes match the module __init__)."""
    params = []
    dims = [num_features] + [hidden] * gnn_depth
    keys = jax.random.split(key, gnn_depth + 3)
    for i in range(gnn_depth):                       # GCNConv: W [in,out], b [1,out]
        w = jax.random.normal(keys[i], (dims[i], dims[i + 1]), jnp.float32)
        w = w * (1.0 / jnp.sqrt(dims[i]))
        b = jnp.zeros((1, dims[i + 1]), jnp.float32)
        params += [w, b]
    mlp_dims = [(hidden, hidden), (hidden, hidden), (hidden, num_classes)]
    for j, (din, dout) in enumerate(mlp_dims):
        w = jax.random.normal(keys[gnn_depth + j], (din, dout), jnp.float32)
        w = w * (1.0 / jnp.sqrt(din))
        b = jnp.full((1, dout), 0.01, jnp.float32)
        params += [w, b]
    return params


def pack_params(params, n_layers):
    """Pack all layer weights/biases into two lane-padded slabs.

    Weights: [n_layers*128, 128] bf16, layer l occupies rows [l*128, (l+1)*128);
    unused rows/cols are zero so padded activation lanes stay exactly zero.
    Biases:  [8, 128] f32 (row l = layer l's bias, zero-padded).
    """
    w_slab = jnp.zeros((n_layers * LANE, LANE), jnp.float32)
    b_rows = max(8, ((n_layers + 7) // 8) * 8)
    b_slab = jnp.zeros((b_rows, LANE), jnp.float32)
    for l in range(n_layers):
        w, b = params[2 * l], params[2 * l + 1]
        din, dout = w.shape
        w_slab = w_slab.at[l * LANE:l * LANE + din, :dout].set(w)
        b_slab = b_slab.at[l, :dout].set(b[0])
    return w_slab.astype(jnp.bfloat16), b_slab


# ----------------------------------------------------------------------------- demo
if __name__ == "__main__":
    NUM_FEATURES = 8
    HIDDEN = 32
    NUM_CLASSES = 4
    GNN_DEPTH = 3
    N_MLP = 3
    NODES_PER_GRAPH = 8
    TN = 128                                   # nodes per diagonal block (MXU-native)
    TG = TN // NODES_PER_GRAPH                 # 16 graphs per block
    KB = 4                                     # blocks folded into one grid step
    NUM_STEPS = 16                             # grid length (even; 8/TC on v7x)
    NB = NUM_STEPS * KB                        # 64 blocks
    NUM_GRAPHS = NB * TG                       # 1024 molecules per call
    N_NODES = NUM_GRAPHS * NODES_PER_GRAPH     # 8192 nodes

    key = jax.random.PRNGKey(0)
    k_x, k_p = jax.random.split(key)

    # --- ring-molecule graphs (bidirectional edges), vectorized construction ----
    node = jnp.arange(N_NODES, dtype=jnp.int32)
    pos = node % NODES_PER_GRAPH
    nxt = (node - pos) + (pos + 1) % NODES_PER_GRAPH
    # interleave the two directions so edges stay grouped per node (hence per block)
    src = jnp.stack([node, nxt], axis=1).reshape(-1)
    dst = jnp.stack([nxt, node], axis=1).reshape(-1)
    batch = node // NODES_PER_GRAPH            # graph id per node

    # Node features, lane-padded to 128 and cast to bf16 for the MXU.
    x = jax.random.normal(k_x, (N_NODES, NUM_FEATURES), jnp.float32)
    x_pad = jnp.zeros((N_NODES, LANE), jnp.float32).at[:, :NUM_FEATURES].set(x)
    x_pad = x_pad.astype(jnp.bfloat16)

    # Per-block normalized adjacency (graphs never straddle a 128-node block).
    src_local = (src % TN).reshape(NB, 2 * TN)
    dst_local = (dst % TN).reshape(NB, 2 * TN)
    ahat_blocks_f32 = jax.vmap(
        lambda s, d: build_normalized_adjacency(s, d, TN))(src_local, dst_local)

    # Per-block one-hot pooling matrix (global_add_pool as a matmul).
    batch_blocks = batch.reshape(NB, TN)
    batch_local = batch_blocks - batch_blocks[:, :1]
    pool_blocks_f32 = (batch_local[:, None, :]
                       == jnp.arange(TG)[None, :, None]).astype(jnp.float32)

    # Stack the kb-foldable blocks along rows for the 2D kernel inputs.
    ahat_stack = ahat_blocks_f32.astype(jnp.bfloat16).reshape(NB * TN, TN)
    pool_stack = pool_blocks_f32.astype(jnp.bfloat16).reshape(NB * TG, TN)

    params = init_params(k_p, NUM_FEATURES, HIDDEN, NUM_CLASSES, GNN_DEPTH)
    n_layers = GNN_DEPTH + N_MLP
    w_slab, b_slab = pack_params(params, n_layers)

    out = gnn_forward(ahat_stack, x_pad, pool_stack, w_slab, b_slab,
                      num_steps=NUM_STEPS, kb=KB, tn=TN, tg=TG,
                      n_gcn=GNN_DEPTH, n_mlp=N_MLP, num_classes=NUM_CLASSES)
    out = jax.block_until_ready(out)
    assert out.shape == (NUM_GRAPHS, NUM_CLASSES)

    # --- Reference 1: plain-JAX mirror of the packed / blocked / bf16 math ------
    ahat_bf16_3d = ahat_blocks_f32.astype(jnp.bfloat16)      # [NB, TN, TN]
    pool_bf16_3d = pool_blocks_f32.astype(jnp.bfloat16)      # [NB, TG, TN]
    x_pad_3d = x_pad.reshape(NB, TN, LANE)                   # [NB, TN, LANE]

    def ref_block_bf16(a_b, x_b, p_b):
        h = x_b
        for l in range(GNN_DEPTH):
            w = w_slab[l * LANE:(l + 1) * LANE]
            b = b_slab[l:l + 1]
            hw = jnp.dot(h, w, preferred_element_type=jnp.float32)
            z = jnp.dot(a_b, hw.astype(jnp.bfloat16),
                        preferred_element_type=jnp.float32)
            h = jnp.maximum(z + b, 0.0).astype(jnp.bfloat16)
        m = jnp.dot(p_b, h, preferred_element_type=jnp.float32)
        for j in range(N_MLP):
            l = GNN_DEPTH + j
            w = w_slab[l * LANE:(l + 1) * LANE]
            b = b_slab[l:l + 1]
            z = jnp.dot(m.astype(jnp.bfloat16), w,
                        preferred_element_type=jnp.float32) + b
            m = jnp.maximum(z, 0.0) if j < N_MLP - 1 else z
        return m[:, :NUM_CLASSES]

    ref_bf16 = jax.vmap(ref_block_bf16)(ahat_bf16_3d, x_pad_3d, pool_bf16_3d)
    ref_bf16 = ref_bf16.reshape(NUM_GRAPHS, NUM_CLASSES)
    assert jnp.allclose(out, ref_bf16, atol=1e-2, rtol=1e-2)

    # --- Reference 2: original unpadded f32 math (loose tol for bf16 casts) -----
    x_3d = x.reshape(NB, TN, NUM_FEATURES)

    def ref_block_f32(a_b, x_b, p_b):
        h = x_b
        for l in range(GNN_DEPTH):
            w, b = params[2 * l], params[2 * l + 1]
            h = jnp.maximum(a_b @ (h @ w) + b, 0.0)
        m = p_b @ h
        mw1, mb1, mw2, mb2, mw3, mb3 = params[2 * GNN_DEPTH:]
        m = jnp.maximum(m @ mw1 + mb1, 0.0)
        m = jnp.maximum(m @ mw2 + mb2, 0.0)
        return m @ mw3 + mb3

    ref32 = jax.vmap(ref_block_f32)(ahat_blocks_f32, x_3d, pool_blocks_f32)
    ref32 = ref32.reshape(NUM_GRAPHS, NUM_CLASSES)
    assert jnp.allclose(out, ref32, atol=0.3, rtol=0.1)

    print("KERNEL_OK")
</pallas_src>

<mosaic_0001>
module attributes {stable_mosaic.version = 11 : i64} {
  func.func @gnn_kernel(%arg0: i32, %arg1: memref<512x128xbf16, #tpu.memory_space<vmem>>, %arg2: memref<512x128xbf16, #tpu.memory_space<vmem>>, %arg3: memref<64x128xbf16, #tpu.memory_space<vmem>>, %arg4: memref<768x128xbf16, #tpu.memory_space<vmem>>, %arg5: memref<8x128xf32, #tpu.memory_space<vmem>>, %arg6: memref<64x128xf32, #tpu.memory_space<vmem>>, %arg7: memref<512x128xbf16, #tpu.memory_space<vmem>>, %arg8: memref<64x128xf32, #tpu.memory_space<vmem>>) attributes {dimension_semantics = [#tpu.dimension_semantics<parallel>], iteration_bounds = array<i64: 16>, scalar_prefetch = 0 : i64, scratch_operands = 2 : i64, tpu.core_type = #tpu.core_type<tc>, window_params = [{transform_indices = @transform_0, window_bounds = array<i64: 512, 128>}, {transform_indices = @transform_1, window_bounds = array<i64: 512, 128>}, {transform_indices = @transform_2, window_bounds = array<i64: 64, 128>}, {pipeline_mode = #tpu.pipeline_mode<synchronous>, transform_indices = @transform_3, window_bounds = array<i64: 768, 128>}, {pipeline_mode = #tpu.pipeline_mode<synchronous>, transform_indices = @transform_4, window_bounds = array<i64: 8, 128>}, {transform_indices = @transform_5, window_bounds = array<i64: 64, 128>}]} {
    %c0 = arith.constant 0 : index
    %c0_0 = arith.constant 0 : index
    %0 = vector.load %arg2[%c0, %c0_0] : memref<512x128xbf16, #tpu.memory_space<vmem>>, vector<512x128xbf16>
    %c0_1 = arith.constant 0 : index
    %c0_2 = arith.constant 0 : index
    %1 = vector.load %arg7[%c0_1, %c0_2] : memref<512x128xbf16, #tpu.memory_space<vmem>>, vector<512x128xbf16>
    tpu.vector_store %arg7[%c0_1, %c0_2], %0 {strides = array<i32>} : memref<512x128xbf16, #tpu.memory_space<vmem>>, vector<512x128xbf16>,
    %c0_3 = arith.constant 0 : index
    %c0_4 = arith.constant 0 : index
    %2 = vector.load %arg4[%c0_3, %c0_4] : memref<768x128xbf16, #tpu.memory_space<vmem>>, vector<128x128xbf16>
    %c0_5 = arith.constant 0 : index
    %c0_6 = arith.constant 0 : index
    %3 = vector.load %arg5[%c0_5, %c0_6] : memref<8x128xf32, #tpu.memory_space<vmem>>, vector<1x128xf32>
    %c0_7 = arith.constant 0 : index
    %c0_8 = arith.constant 0 : index
    %4 = vector.load %arg7[%c0_7, %c0_8] : memref<512x128xbf16, #tpu.memory_space<vmem>>, vector<512x128xbf16>
    %cst = arith.constant dense<0.000000e+00> : vector<512x128xf32>
    %5 = tpu.matmul %4, %2, %cst {dimension_numbers = #tpu.dot_dimension_numbers<[1], [0], [0], [1], [0, 0, 1, 1], [], []>} : vector<512x128xbf16>, vector<128x128xbf16>, vector<512x128xf32> -> vector<512x128xf32>
    %6 = vector.extract_strided_slice %5 {offsets = [0, 0], sizes = [128, 128], strides = [1, 1]} : vector<512x128xf32> to vector<128x128xf32>
    %7 = arith.truncf %6 : vector<128x128xf32> to vector<128x128xbf16>
    %c0_9 = arith.constant 0 : index
    %c0_10 = arith.constant 0 : index
    %8 = vector.load %arg1[%c0_9, %c0_10] : memref<512x128xbf16, #tpu.memory_space<vmem>>, vector<128x128xbf16>
    %cst_11 = arith.constant dense<0.000000e+00> : vector<128x128xf32>
    %9 = tpu.matmul %8, %7, %cst_11 {dimension_numbers = #tpu.dot_dimension_numbers<[1], [0], [0], [1], [0, 0, 1, 1], [], []>} : vector<128x128xbf16>, vector<128x128xbf16>, vector<128x128xf32> -> vector<128x128xf32>
    %10 = vector.broadcast %3 : vector<1x128xf32> to vector<128x128xf32>
    %11 = arith.addf %9, %10 : vector<128x128xf32>
    %cst_12 = arith.constant 0.000000e+00 : f32
    %12 = vector.broadcast %cst_12 : f32 to vector<128x128xf32>
    %13 = arith.maximumf %11, %12 : vector<128x128xf32>
    %14 = arith.truncf %13 : vector<128x128xf32> to vector<128x128xbf16>
    %c0_13 = arith.constant 0 : index
    %c0_14 = arith.constant 0 : index
    %15 = vector.load %arg7[%c0_13, %c0_14] : memref<512x128xbf16, #tpu.memory_space<vmem>>, vector<128x128xbf16>
    tpu.vector_store %arg7[%c0_13, %c0_14], %14 {strides = array<i32>} : memref<512x128xbf16, #tpu.memory_space<vmem>>, vector<128x128xbf16>,
    %16 = vector.extract_strided_slice %5 {offsets = [128, 0], sizes = [128, 128], strides = [1, 1]} : vector<512x128xf32> to vector<128x128xf32>
    %17 = arith.truncf %16 : vector<128x128xf32> to vector<128x128xbf16>
    %c128 = arith.constant 128 : index
    %c0_15 = arith.constant 0 : index
    %18 = vector.load %arg1[%c128, %c0_15] : memref<512x128xbf16, #tpu.memory_space<vmem>>, vector<128x128xbf16>
    %cst_16 = arith.constant dense<0.000000e+00> : vector<128x128xf32>
    %19 = tpu.matmul %18, %17, %cst_16 {dimension_numbers = #tpu.dot_dimension_numbers<[1], [0], [0], [1], [0, 0, 1, 1], [], []>} : vector<128x128xbf16>, vector<128x128xbf16>, vector<128x128xf32> -> vector<128x128xf32>
    %20 = vector.broadcast %3 : vector<1x128xf32> to vector<128x128xf32>
    %21 = arith.addf %19, %20 : vector<128x128xf32>
    %cst_17 = arith.constant 0.000000e+00 : f32
    %22 = vector.broadcast %cst_17 : f32 to vector<128x128xf32>
    %23 = arith.maximumf %21, %22 : vector<128x128xf32>
    %24 = arith.truncf %23 : vector<128x128xf32> to vector<128x128xbf16>
    %c128_18 = arith.constant 128 : index
    %c0_19 = arith.constant 0 : index
    %25 = vector.load %arg7[%c128_18, %c0_19] : memref<512x128xbf16, #tpu.memory_space<vmem>>, vector<128x128xbf16>
    tpu.vector_store %arg7[%c128_18, %c0_19], %24 {strides = array<i32>} : memref<512x128xbf16, #tpu.memory_space<vmem>>, vector<128x128xbf16>,
    %26 = vector.extract_strided_slice %5 {offsets = [256, 0], sizes = [128, 128], strides = [1, 1]} : vector<512x128xf32> to vector<128x128xf32>
    %27 = arith.truncf %26 : vector<128x128xf32> to vector<128x128xbf16>
    %c256 = arith.constant 256 : index
    %c0_20 = arith.constant 0 : index
    %28 = vector.load %arg1[%c256, %c0_20] : memref<512x128xbf16, #tpu.memory_space<vmem>>, vector<128x128xbf16>
    %cst_21 = arith.constant dense<0.000000e+00> : vector<128x128xf32>
    %29 = tpu.matmul %28, %27, %cst_21 {dimension_numbers = #tpu.dot_dimension_numbers<[1], [0], [0], [1], [0, 0, 1, 1], [], []>} : vector<128x128xbf16>, vector<128x128xbf16>, vector<128x128xf32> -> vector<128x128xf32>
    %30 = vector.broadcast %3 : vector<1x128xf32> to vector<128x128xf32>
    %31 = arith.addf %29, %30 : vector<128x128xf32>
    %cst_22 = arith.constant 0.000000e+00 : f32
    %32 = vector.broadcast %cst_22 : f32 to vector<128x128xf32>
    %33 = arith.maximumf %31, %32 : vector<128x128xf32>
    %34 = arith.truncf %33 : vector<128x128xf32> to vector<128x128xbf16>
    %c256_23 = arith.constant 256 : index
    %c0_24 = arith.constant 0 : index
    %35 = vector.load %arg7[%c256_23, %c0_24] : memref<512x128xbf16, #tpu.memory_space<vmem>>, vector<128x128xbf16>
    tpu.vector_store %arg7[%c256_23, %c0_24], %34 {strides = array<i32>} : memref<512x128xbf16, #tpu.memory_space<vmem>>, vector<128x128xbf16>,
    %36 = vector.extract_strided_slice %5 {offsets = [384, 0], sizes = [128, 128], strides = [1, 1]} : vector<512x128xf32> to vector<128x128xf32>
    %37 = arith.truncf %36 : vector<128x128xf32> to vector<128x128xbf16>
    %c384 = arith.constant 384 : index
    %c0_25 = arith.constant 0 : index
    %38 = vector.load %arg1[%c384, %c0_25] : memref<512x128xbf16, #tpu.memory_space<vmem>>, vector<128x128xbf16>
    %cst_26 = arith.constant dense<0.000000e+00> : vector<128x128xf32>
    %39 = tpu.matmul %38, %37, %cst_26 {dimension_numbers = #tpu.dot_dimension_numbers<[1], [0], [0], [1], [0, 0, 1, 1], [], []>} : vector<128x128xbf16>, vector<128x128xbf16>, vector<128x128xf32> -> vector<128x128xf32>
    %40 = vector.broadcast %3 : vector<1x128xf32> to vector<128x128xf32>
    %41 = arith.addf %39, %40 : vector<128x128xf32>
    %cst_27 = arith.constant 0.000000e+00 : f32
    %42 = vector.broadcast %cst_27 : f32 to vector<128x128xf32>
    %43 = arith.maximumf %41, %42 : vector<128x128xf32>
    %44 = arith.truncf %43 : vector<128x128xf32> to vector<128x128xbf16>
    %c384_28 = arith.constant 384 : index
    %c0_29 = arith.constant 0 : index
    %45 = vector.load %arg7[%c384_28, %c0_29] : memref<512x128xbf16, #tpu.memory_space<vmem>>, vector<128x128xbf16>
    tpu.vector_store %arg7[%c384_28, %c0_29], %44 {strides = array<i32>} : memref<512x128xbf16, #tpu.memory_space<vmem>>, vector<128x128xbf16>,
    %c128_30 = arith.constant 128 : index
    %c0_31 = arith.constant 0 : index
    %46 = vector.load %arg4[%c128_30, %c0_31] : memref<768x128xbf16, #tpu.memory_space<vmem>>, vector<128x128xbf16>
    %c1 = arith.constant 1 : index
    %c0_32 = arith.constant 0 : index
    %47 = vector.load %arg5[%c1, %c0_32] : memref<8x128xf32, #tpu.memory_space<vmem>>, vector<1x128xf32>
    %c0_33 = arith.constant 0 : index
    %c0_34 = arith.constant 0 : index
    %48 = vector.load %arg7[%c0_33, %c0_34] : memref<512x128xbf16, #tpu.memory_space<vmem>>, vector<512x128xbf16>
    %cst_35 = arith.constant dense<0.000000e+00> : vector<512x128xf32>
    %49 = tpu.matmul %48, %46, %cst_35 {dimension_numbers = #tpu.dot_dimension_numbers<[1], [0], [0], [1], [0, 0, 1, 1], [], []>} : vector<512x128xbf16>, vector<128x128xbf16>, vector<512x128xf32> -> vector<512x128xf32>
    %50 = vector.extract_strided_slice %49 {offsets = [0, 0], sizes = [128, 128], strides = [1, 1]} : vector<512x128xf32> to vector<128x128xf32>
    %51 = arith.truncf %50 : vector<128x128xf32> to vector<128x128xbf16>
    %c0_36 = arith.constant 0 : index
    %c0_37 = arith.constant 0 : index
    %52 = vector.load %arg1[%c0_36, %c0_37] : memref<512x128xbf16, #tpu.memory_space<vmem>>, vector<128x128xbf16>
    %cst_38 = arith.constant dense<0.000000e+00> : vector<128x128xf32>
    %53 = tpu.matmul %52, %51, %cst_38 {dimension_numbers = #tpu.dot_dimension_numbers<[1], [0], [0], [1], [0, 0, 1, 1], [], []>} : vector<128x128xbf16>, vector<128x128xbf16>, vector<128x128xf32> -> vector<128x128xf32>
    %54 = vector.broadcast %47 : vector<1x128xf32> to vector<128x128xf32>
    %55 = arith.addf %53, %54 : vector<128x128xf32>
    %cst_39 = arith.constant 0.000000e+00 : f32
    %56 = vector.broadcast %cst_39 : f32 to vector<128x128xf32>
    %57 = arith.maximumf %55, %56 : vector<128x128xf32>
    %58 = arith.truncf %57 : vector<128x128xf32> to vector<128x128xbf16>
    %c0_40 = arith.constant 0 : index
    %c0_41 = arith.constant 0 : index
    %59 = vector.load %arg7[%c0_40, %c0_41] : memref<512x128xbf16, #tpu.memory_space<vmem>>, vector<128x128xbf16>
    tpu.vector_store %arg7[%c0_40, %c0_41], %58 {strides = array<i32>} : memref<512x128xbf16, #tpu.memory_space<vmem>>, vector<128x128xbf16>,
    %60 = vector.extract_strided_slice %49 {offsets = [128, 0], sizes = [128, 128], strides = [1, 1]} : vector<512x128xf32> to vector<128x128xf32>
    %61 = arith.truncf %60 : vector<128x128xf32> to vector<128x128xbf16>
    %c128_42 = arith.constant 128 : index
    %c0_43 = arith.constant 0 : index
    %62 = vector.load %arg1[%c128_42, %c0_43] : memref<512x128xbf16, #tpu.memory_space<vmem>>, vector<128x128xbf16>
    %cst_44 = arith.constant dense<0.000000e+00> : vector<128x128xf32>
    %63 = tpu.matmul %62, %61, %cst_44 {dimension_numbers = #tpu.dot_dimension_numbers<[1], [0], [0], [1], [0, 0, 1, 1], [], []>} : vector<128x128xbf16>, vector<128x128xbf16>, vector<128x128xf32> -> vector<128x128xf32>
    %64 = vector.broadcast %47 : vector<1x128xf32> to vector<128x128xf32>
    %65 = arith.addf %63, %64 : vector<128x128xf32>
    %cst_45 = arith.constant 0.000000e+00 : f32
    %66 = vector.broadcast %cst_45 : f32 to vector<128x128xf32>
    %67 = arith.maximumf %65, %66 : vector<128x128xf32>
    %68 = arith.truncf %67 : vector<128x128xf32> to vector<128x128xbf16>
    %c128_46 = arith.constant 128 : index
    %c0_47 = arith.constant 0 : index
    %69 = vector.load %arg7[%c128_46, %c0_47] : memref<512x128xbf16, #tpu.memory_space<vmem>>, vector<128x128xbf16>
    tpu.vector_store %arg7[%c128_46, %c0_47], %68 {strides = array<i32>} : memref<512x128xbf16, #tpu.memory_space<vmem>>, vector<128x128xbf16>,
    %70 = vector.extract_strided_slice %49 {offsets = [256, 0], sizes = [128, 128], strides = [1, 1]} : vector<512x128xf32> to vector<128x128xf32>
    %71 = arith.truncf %70 : vector<128x128xf32> to vector<128x128xbf16>
    %c256_48 = arith.constant 256 : index
    %c0_49 = arith.constant 0 : index
    %72 = vector.load %arg1[%c256_48, %c0_49] : memref<512x128xbf16, #tpu.memory_space<vmem>>, vector<128x128xbf16>
    %cst_50 = arith.constant dense<0.000000e+00> : vector<128x128xf32>
    %73 = tpu.matmul %72, %71, %cst_50 {dimension_numbers = #tpu.dot_dimension_numbers<[1], [0], [0], [1], [0, 0, 1, 1], [], []>} : vector<128x128xbf16>, vector<128x128xbf16>, vector<128x128xf32> -> vector<128x128xf32>
    %74 = vector.broadcast %47 : vector<1x128xf32> to vector<128x128xf32>
    %75 = arith.addf %73, %74 : vector<128x128xf32>
    %cst_51 = arith.constant 0.000000e+00 : f32
    %76 = vector.broadcast %cst_51 : f32 to vector<128x128xf32>
    %77 = arith.maximumf %75, %76 : vector<128x128xf32>
    %78 = arith.truncf %77 : vector<128x128xf32> to vector<128x128xbf16>
    %c256_52 = arith.constant 256 : index
    %c0_53 = arith.constant 0 : index
    %79 = vector.load %arg7[%c256_52, %c0_53] : memref<512x128xbf16, #tpu.memory_space<vmem>>, vector<128x128xbf16>
    tpu.vector_store %arg7[%c256_52, %c0_53], %78 {strides = array<i32>} : memref<512x128xbf16, #tpu.memory_space<vmem>>, vector<128x128xbf16>,
    %80 = vector.extract_strided_slice %49 {offsets = [384, 0], sizes = [128, 128], strides = [1, 1]} : vector<512x128xf32> to vector<128x128xf32>
    %81 = arith.truncf %80 : vector<128x128xf32> to vector<128x128xbf16>
    %c384_54 = arith.constant 384 : index
    %c0_55 = arith.constant 0 : index
    %82 = vector.load %arg1[%c384_54, %c0_55] : memref<512x128xbf16, #tpu.memory_space<vmem>>, vector<128x128xbf16>
    %cst_56 = arith.constant dense<0.000000e+00> : vector<128x128xf32>
    %83 = tpu.matmul %82, %81, %cst_56 {dimension_numbers = #tpu.dot_dimension_numbers<[1], [0], [0], [1], [0, 0, 1, 1], [], []>} : vector<128x128xbf16>, vector<128x128xbf16>, vector<128x128xf32> -> vector<128x128xf32>
    %84 = vector.broadcast %47 : vector<1x128xf32> to vector<128x128xf32>
    %85 = arith.addf %83, %84 : vector<128x128xf32>
    %cst_57 = arith.constant 0.000000e+00 : f32
    %86 = vector.broadcast %cst_57 : f32 to vector<128x128xf32>
    %87 = arith.maximumf %85, %86 : vector<128x128xf32>
    %88 = arith.truncf %87 : vector<128x128xf32> to vector<128x128xbf16>
    %c384_58 = arith.constant 384 : index
    %c0_59 = arith.constant 0 : index
    %89 = vector.load %arg7[%c384_58, %c0_59] : memref<512x128xbf16, #tpu.memory_space<vmem>>, vector<128x128xbf16>
    tpu.vector_store %arg7[%c384_58, %c0_59], %88 {strides = array<i32>} : memref<512x128xbf16, #tpu.memory_space<vmem>>, vector<128x128xbf16>,
    %c256_60 = arith.constant 256 : index
    %c0_61 = arith.constant 0 : index
    %90 = vector.load %arg4[%c256_60, %c0_61] : memref<768x128xbf16, #tpu.memory_space<vmem>>, vector<128x128xbf16>
    %c2 = arith.constant 2 : index
    %c0_62 = arith.constant 0 : index
    %91 = vector.load %arg5[%c2, %c0_62] : memref<8x128xf32, #tpu.memory_space<vmem>>, vector<1x128xf32>
    %c0_63 = arith.constant 0 : index
    %c0_64 = arith.constant 0 : index
    %92 = vector.load %arg7[%c0_63, %c0_64] : memref<512x128xbf16, #tpu.memory_space<vmem>>, vector<512x128xbf16>
    %cst_65 = arith.constant dense<0.000000e+00> : vector<512x128xf32>
    %93 = tpu.matmul %92, %90, %cst_65 {dimension_numbers = #tpu.dot_dimension_numbers<[1], [0], [0], [1], [0, 0, 1, 1], [], []>} : vector<512x128xbf16>, vector<128x128xbf16>, vector<512x128xf32> -> vector<512x128xf32>
    %94 = vector.extract_strided_slice %93 {offsets = [0, 0], sizes = [128, 128], strides = [1, 1]} : vector<512x128xf32> to vector<128x128xf32>
    %95 = arith.truncf %94 : vector<128x128xf32> to vector<128x128xbf16>
    %c0_66 = arith.constant 0 : index
    %c0_67 = arith.constant 0 : index
    %96 = vector.load %arg1[%c0_66, %c0_67] : memref<512x128xbf16, #tpu.memory_space<vmem>>, vector<128x128xbf16>
    %cst_68 = arith.constant dense<0.000000e+00> : vector<128x128xf32>
    %97 = tpu.matmul %96, %95, %cst_68 {dimension_numbers = #tpu.dot_dimension_numbers<[1], [0], [0], [1], [0, 0, 1, 1], [], []>} : vector<128x128xbf16>, vector<128x128xbf16>, vector<128x128xf32> -> vector<128x128xf32>
    %98 = vector.broadcast %91 : vector<1x128xf32> to vector<128x128xf32>
    %99 = arith.addf %97, %98 : vector<128x128xf32>
    %cst_69 = arith.constant 0.000000e+00 : f32
    %100 = vector.broadcast %cst_69 : f32 to vector<128x128xf32>
    %101 = arith.maximumf %99, %100 : vector<128x128xf32>
    %102 = arith.truncf %101 : vector<128x128xf32> to vector<128x128xbf16>
    %c0_70 = arith.constant 0 : index
    %c0_71 = arith.constant 0 : index
    %103 = vector.load %arg7[%c0_70, %c0_71] : memref<512x128xbf16, #tpu.memory_space<vmem>>, vector<128x128xbf16>
    tpu.vector_store %arg7[%c0_70, %c0_71], %102 {strides = array<i32>} : memref<512x128xbf16, #tpu.memory_space<vmem>>, vector<128x128xbf16>,
    %104 = vector.extract_strided_slice %93 {offsets = [128, 0], sizes = [128, 128], strides = [1, 1]} : vector<512x128xf32> to vector<128x128xf32>
    %105 = arith.truncf %104 : vector<128x128xf32> to vector<128x128xbf16>
    %c128_72 = arith.constant 128 : index
    %c0_73 = arith.constant 0 : index
    %106 = vector.load %arg1[%c128_72, %c0_73] : memref<512x128xbf16, #tpu.memory_space<vmem>>, vector<128x128xbf16>
    %cst_74 = arith.constant dense<0.000000e+00> : vector<128x128xf32>
    %107 = tpu.matmul %106, %105, %cst_74 {dimension_numbers = #tpu.dot_dimension_numbers<[1], [0], [0], [1], [0, 0, 1, 1], [], []>} : vector<128x128xbf16>, vector<128x128xbf16>, vector<128x128xf32> -> vector<128x128xf32>
    %108 = vector.broadcast %91 : vector<1x128xf32> to vector<128x128xf32>
    %109 = arith.addf %107, %108 : vector<128x128xf32>
    %cst_75 = arith.constant 0.000000e+00 : f32
    %110 = vector.broadcast %cst_75 : f32 to vector<128x128xf32>
    %111 = arith.maximumf %109, %110 : vector<128x128xf32>
    %112 = arith.truncf %111 : vector<128x128xf32> to vector<128x128xbf16>
    %c128_76 = arith.constant 128 : index
    %c0_77 = arith.constant 0 : index
    %113 = vector.load %arg7[%c128_76, %c0_77] : memref<512x128xbf16, #tpu.memory_space<vmem>>, vector<128x128xbf16>
    tpu.vector_store %arg7[%c128_76, %c0_77], %112 {strides = array<i32>} : memref<512x128xbf16, #tpu.memory_space<vmem>>, vector<128x128xbf16>,
    %114 = vector.extract_strided_slice %93 {offsets = [256, 0], sizes = [128, 128], strides = [1, 1]} : vector<512x128xf32> to vector<128x128xf32>
    %115 = arith.truncf %114 : vector<128x128xf32> to vector<128x128xbf16>
    %c256_78 = arith.constant 256 : index
    %c0_79 = arith.constant 0 : index
    %116 = vector.load %arg1[%c256_78, %c0_79] : memref<512x128xbf16, #tpu.memory_space<vmem>>, vector<128x128xbf16>
    %cst_80 = arith.constant dense<0.000000e+00> : vector<128x128xf32>
    %117 = tpu.matmul %116, %115, %cst_80 {dimension_numbers = #tpu.dot_dimension_numbers<[1], [0], [0], [1], [0, 0, 1, 1], [], []>} : vector<128x128xbf16>, vector<128x128xbf16>, vector<128x128xf32> -> vector<128x128xf32>
    %118 = vector.broadcast %91 : vector<1x128xf32> to vector<128x128xf32>
    %119 = arith.addf %117, %118 : vector<128x128xf32>
    %cst_81 = arith.constant 0.000000e+00 : f32
    %120 = vector.broadcast %cst_81 : f32 to vector<128x128xf32>
    %121 = arith.maximumf %119, %120 : vector<128x128xf32>
    %122 = arith.truncf %121 : vector<128x128xf32> to vector<128x128xbf16>
    %c256_82 = arith.constant 256 : index
    %c0_83 = arith.constant 0 : index
    %123 = vector.load %arg7[%c256_82, %c0_83] : memref<512x128xbf16, #tpu.memory_space<vmem>>, vector<128x128xbf16>
    tpu.vector_store %arg7[%c256_82, %c0_83], %122 {strides = array<i32>} : memref<512x128xbf16, #tpu.memory_space<vmem>>, vector<128x128xbf16>,
    %124 = vector.extract_strided_slice %93 {offsets = [384, 0], sizes = [128, 128], strides = [1, 1]} : vector<512x128xf32> to vector<128x128xf32>
    %125 = arith.truncf %124 : vector<128x128xf32> to vector<128x128xbf16>
    %c384_84 = arith.constant 384 : index
    %c0_85 = arith.constant 0 : index
    %126 = vector.load %arg1[%c384_84, %c0_85] : memref<512x128xbf16, #tpu.memory_space<vmem>>, vector<128x128xbf16>
    %cst_86 = arith.constant dense<0.000000e+00> : vector<128x128xf32>
    %127 = tpu.matmul %126, %125, %cst_86 {dimension_numbers = #tpu.dot_dimension_numbers<[1], [0], [0], [1], [0, 0, 1, 1], [], []>} : vector<128x128xbf16>, vector<128x128xbf16>, vector<128x128xf32> -> vector<128x128xf32>
    %128 = vector.broadcast %91 : vector<1x128xf32> to vector<128x128xf32>
    %129 = arith.addf %127, %128 : vector<128x128xf32>
    %cst_87 = arith.constant 0.000000e+00 : f32
    %130 = vector.broadcast %cst_87 : f32 to vector<128x128xf32>
    %131 = arith.maximumf %129, %130 : vector<128x128xf32>
    %132 = arith.truncf %131 : vector<128x128xf32> to vector<128x128xbf16>
    %c384_88 = arith.constant 384 : index
    %c0_89 = arith.constant 0 : index
    %133 = vector.load %arg7[%c384_88, %c0_89] : memref<512x128xbf16, #tpu.memory_space<vmem>>, vector<128x128xbf16>
    tpu.vector_store %arg7[%c384_88, %c0_89], %132 {strides = array<i32>} : memref<512x128xbf16, #tpu.memory_space<vmem>>, vector<128x128xbf16>,
    %c0_90 = arith.constant 0 : index
    %c0_91 = arith.constant 0 : index
    %134 = vector.load %arg3[%c0_90, %c0_91] : memref<64x128xbf16, #tpu.memory_space<vmem>>, vector<16x128xbf16>
    %c0_92 = arith.constant 0 : index
    %c0_93 = arith.constant 0 : index
    %135 = vector.load %arg7[%c0_92, %c0_93] : memref<512x128xbf16, #tpu.memory_space<vmem>>, vector<128x128xbf16>
    %cst_94 = arith.constant dense<0.000000e+00> : vector<16x128xf32>
    %136 = tpu.matmul %134, %135, %cst_94 {dimension_numbers = #tpu.dot_dimension_numbers<[1], [0], [0], [1], [0, 0, 1, 1], [], []>} : vector<16x128xbf16>, vector<128x128xbf16>, vector<16x128xf32> -> vector<16x128xf32>
    %c0_95 = arith.constant 0 : index
    %c0_96 = arith.constant 0 : index
    %137 = vector.load %arg8[%c0_95, %c0_96] : memref<64x128xf32, #tpu.memory_space<vmem>>, vector<16x128xf32>
    tpu.vector_store %arg8[%c0_95, %c0_96], %136 {strides = array<i32>} : memref<64x128xf32, #tpu.memory_space<vmem>>, vector<16x128xf32>,
    %c16 = arith.constant 16 : index
    %c0_97 = arith.constant 0 : index
    %138 = vector.load %arg3[%c16, %c0_97] : memref<64x128xbf16, #tpu.memory_space<vmem>>, vector<16x128xbf16>
    %c128_98 = arith.constant 128 : index
    %c0_99 = arith.constant 0 : index
    %139 = vector.load %arg7[%c128_98, %c0_99] : memref<512x128xbf16, #tpu.memory_space<vmem>>, vector<128x128xbf16>
    %cst_100 = arith.constant dense<0.000000e+00> : vector<16x128xf32>
    %140 = tpu.matmul %138, %139, %cst_100 {dimension_numbers = #tpu.dot_dimension_numbers<[1], [0], [0], [1], [0, 0, 1, 1], [], []>} : vector<16x128xbf16>, vector<128x128xbf16>, vector<16x128xf32> -> vector<16x128xf32>
    %c16_101 = arith.constant 16 : index
    %c0_102 = arith.constant 0 : index
    %141 = vector.load %arg8[%c16_101, %c0_102] : memref<64x128xf32, #tpu.memory_space<vmem>>, vector<16x128xf32>
    tpu.vector_store %arg8[%c16_101, %c0_102], %140 {strides = array<i32>} : memref<64x128xf32, #tpu.memory_space<vmem>>, vector<16x128xf32>,
    %c32 = arith.constant 32 : index
    %c0_103 = arith.constant 0 : index
    %142 = vector.load %arg3[%c32, %c0_103] : memref<64x128xbf16, #tpu.memory_space<vmem>>, vector<16x128xbf16>
    %c256_104 = arith.constant 256 : index
    %c0_105 = arith.constant 0 : index
    %143 = vector.load %arg7[%c256_104, %c0_105] : memref<512x128xbf16, #tpu.memory_space<vmem>>, vector<128x128xbf16>
    %cst_106 = arith.constant dense<0.000000e+00> : vector<16x128xf32>
    %144 = tpu.matmul %142, %143, %cst_106 {dimension_numbers = #tpu.dot_dimension_numbers<[1], [0], [0], [1], [0, 0, 1, 1], [], []>} : vector<16x128xbf16>, vector<128x128xbf16>, vector<16x128xf32> -> vector<16x128xf32>
    %c32_107 = arith.constant 32 : index
    %c0_108 = arith.constant 0 : index
    %145 = vector.load %arg8[%c32_107, %c0_108] : memref<64x128xf32, #tpu.memory_space<vmem>>, vector<16x128xf32>
    tpu.vector_store %arg8[%c32_107, %c0_108], %144 {strides = array<i32>} : memref<64x128xf32, #tpu.memory_space<vmem>>, vector<16x128xf32>,
    %c48 = arith.constant 48 : index
    %c0_109 = arith.constant 0 : index
    %146 = vector.load %arg3[%c48, %c0_109] : memref<64x128xbf16, #tpu.memory_space<vmem>>, vector<16x128xbf16>
    %c384_110 = arith.constant 384 : index
    %c0_111 = arith.constant 0 : index
    %147 = vector.load %arg7[%c384_110, %c0_111] : memref<512x128xbf16, #tpu.memory_space<vmem>>, vector<128x128xbf16>
    %cst_112 = arith.constant dense<0.000000e+00> : vector<16x128xf32>
    %148 = tpu.matmul %146, %147, %cst_112 {dimension_numbers = #tpu.dot_dimension_numbers<[1], [0], [0], [1], [0, 0, 1, 1], [], []>} : vector<16x128xbf16>, vector<128x128xbf16>, vector<16x128xf32> -> vector<16x128xf32>
    %c48_113 = arith.constant 48 : index
    %c0_114 = arith.constant 0 : index
    %149 = vector.load %arg8[%c48_113, %c0_114] : memref<64x128xf32, #tpu.memory_space<vmem>>, vector<16x128xf32>
    tpu.vector_store %arg8[%c48_113, %c0_114], %148 {strides = array<i32>} : memref<64x128xf32, #tpu.memory_space<vmem>>, vector<16x128xf32>,
    %c0_115 = arith.constant 0 : index
    %c0_116 = arith.constant 0 : index
    %150 = vector.load %arg8[%c0_115, %c0_116] : memref<64x128xf32, #tpu.memory_space<vmem>>, vector<64x128xf32>
    %c384_117 = arith.constant 384 : index
    %c0_118 = arith.constant 0 : index
    %151 = vector.load %arg4[%c384_117, %c0_118] : memref<768x128xbf16, #tpu.memory_space<vmem>>, vector<128x128xbf16>
    %c3 = arith.constant 3 : index
    %c0_119 = arith.constant 0 : index
    %152 = vector.load %arg5[%c3, %c0_119] : memref<8x128xf32, #tpu.memory_space<vmem>>, vector<1x128xf32>
    %153 = arith.truncf %150 : vector<64x128xf32> to vector<64x128xbf16>
    %cst_120 = arith.constant dense<0.000000e+00> : vector<64x128xf32>
    %154 = tpu.matmul %153, %151, %cst_120 {dimension_numbers = #tpu.dot_dimension_numbers<[1], [0], [0], [1], [0, 0, 1, 1], [], []>} : vector<64x128xbf16>, vector<128x128xbf16>, vector<64x128xf32> -> vector<64x128xf32>
    %155 = vector.broadcast %152 : vector<1x128xf32> to vector<64x128xf32>
    %156 = arith.addf %154, %155 : vector<64x128xf32>
    %cst_121 = arith.constant 0.000000e+00 : f32
    %157 = vector.broadcast %cst_121 : f32 to vector<64x128xf32>
    %158 = arith.maximumf %156, %157 : vector<64x128xf32>
    %c512 = arith.constant 512 : index
    %c0_122 = arith.constant 0 : index
    %159 = vector.load %arg4[%c512, %c0_122] : memref<768x128xbf16, #tpu.memory_space<vmem>>, vector<128x128xbf16>
    %c4 = arith.constant 4 : index
    %c0_123 = arith.constant 0 : index
    %160 = vector.load %arg5[%c4, %c0_123] : memref<8x128xf32, #tpu.memory_space<vmem>>, vector<1x128xf32>
    %161 = arith.truncf %158 : vector<64x128xf32> to vector<64x128xbf16>
    %cst_124 = arith.constant dense<0.000000e+00> : vector<64x128xf32>
    %162 = tpu.matmul %161, %159, %cst_124 {dimension_numbers = #tpu.dot_dimension_numbers<[1], [0], [0], [1], [0, 0, 1, 1], [], []>} : vector<64x128xbf16>, vector<128x128xbf16>, vector<64x128xf32> -> vector<64x128xf32>
    %163 = vector.broadcast %160 : vector<1x128xf32> to vector<64x128xf32>
    %164 = arith.addf %162, %163 : vector<64x128xf32>
    %cst_125 = arith.constant 0.000000e+00 : f32
    %165 = vector.broadcast %cst_125 : f32 to vector<64x128xf32>
    %166 = arith.maximumf %164, %165 : vector<64x128xf32>
    %c640 = arith.constant 640 : index
    %c0_126 = arith.constant 0 : index
    %167 = vector.load %arg4[%c640, %c0_126] : memref<768x128xbf16, #tpu.memory_space<vmem>>, vector<128x128xbf16>
    %c5 = arith.constant 5 : index
    %c0_127 = arith.constant 0 : index
    %168 = vector.load %arg5[%c5, %c0_127] : memref<8x128xf32, #tpu.memory_space<vmem>>, vector<1x128xf32>
    %169 = arith.truncf %166 : vector<64x128xf32> to vector<64x128xbf16>
    %cst_128 = arith.constant dense<0.000000e+00> : vector<64x128xf32>
    %170 = tpu.matmul %169, %167, %cst_128 {dimension_numbers = #tpu.dot_dimension_numbers<[1], [0], [0], [1], [0, 0, 1, 1], [], []>} : vector<64x128xbf16>, vector<128x128xbf16>, vector<64x128xf32> -> vector<64x128xf32>
    %171 = vector.broadcast %168 : vector<1x128xf32> to vector<64x128xf32>
    %172 = arith.addf %170, %171 : vector<64x128xf32>
    %c0_129 = arith.constant 0 : index
    %c0_130 = arith.constant 0 : index
    %173 = vector.load %arg6[%c0_129, %c0_130] : memref<64x128xf32, #tpu.memory_space<vmem>>, vector<64x128xf32>
    tpu.vector_store %arg6[%c0_129, %c0_130], %172 {strides = array<i32>} : memref<64x128xf32, #tpu.memory_space<vmem>>, vector<64x128xf32>,
    return
  }
  func.func @transform_0(%arg0: i32) -> (i32, i32) {
    %c0_i32 = arith.constant 0 : i32
    %c0_i32_0 = arith.constant 0 : i32
    return %arg0, %c0_i32 : i32, i32
  }
  func.func @transform_1(%arg0: i32) -> (i32, i32) {
    %c0_i32 = arith.constant 0 : i32
    %c0_i32_0 = arith.constant 0 : i32
    return %arg0, %c0_i32 : i32, i32
  }
  func.func @transform_2(%arg0: i32) -> (i32, i32) {
    %c0_i32 = arith.constant 0 : i32
    %c0_i32_0 = arith.constant 0 : i32
    return %arg0, %c0_i32 : i32, i32
  }
  func.func @transform_3(%arg0: i32) -> (i32, i32) {
    %c0_i32 = arith.constant 0 : i32
    %c0_i32_0 = arith.constant 0 : i32
    %c0_i32_1 = arith.constant 0 : i32
    return %c0_i32, %c0_i32_0 : i32, i32
  }
  func.func @transform_4(%arg0: i32) -> (i32, i32) {
    %c0_i32 = arith.constant 0 : i32
    %c0_i32_0 = arith.constant 0 : i32
    %c0_i32_1 = arith.constant 0 : i32
    return %c0_i32, %c0_i32_0 : i32, i32
  }
  func.func @transform_5(%arg0: i32) -> (i32, i32) {
    %c0_i32 = arith.constant 0 : i32
    %c0_i32_0 = arith.constant 0 : i32
    return %arg0, %c0_i32 : i32, i32
  }
}

</mosaic_0001>

<llo_original>
// kernel: tpu_custom_call.1
$region0: #{tpu_custom_call.1}
  #allocation0 [shape = 'u32[]', space=smem, size = 0x4, offset = 0x4, fixed_abs, tag = 'smem constant byte address 0x4 - core index']
  #allocation1 [shape = 'u32[144,128]{1,0:T(1,128)}', space=vmem, size = 0x12000, scoped, tag = 'internal scratch']
  #allocation2 [shape = 'bf16[512,128]{1,0:T(16,128)(2,1)}', space=vmem, size = 0x20000, scoped, tag = 'scratch operand']
  #allocation3 [shape = 'f32[64,128]{1,0:T(8,128)}', space=vmem, size = 0x8000, scoped, tag = 'scratch operand']
  %s0 = inlined_call_operand.hbm [shape: bf16[8192,128], index: 0, kind: input, shape index: {}]
  %s1 = inlined_call_operand.hbm [shape: bf16[8192,128], index: 1, kind: input, shape index: {}]
  %s2 = inlined_call_operand.hbm [shape: bf16[1024,128], index: 2, kind: input, shape index: {}]
  %s3 = inlined_call_operand.hbm [shape: bf16[768,128], index: 3, kind: input, shape index: {}]
  %s4 = inlined_call_operand.hbm [shape: f32[8,128], index: 4, kind: input, shape index: {}]
  %s5 = inlined_call_operand.hbm [shape: f32[1024,128], index: 5, kind: output, shape index: {}]
  %s6 = sld [smem:[#allocation0]]
  $region73: #{tpu_custom_call.1} parent=0
    _
  %s8 = ssub.s32 1, %s6
  %s9 = scalar_select 0, %s8, %s6
  $region1: #{tpu_custom_call.1} parent=0
    #allocation4 [shape = 'u8[262144]{0}', space=vmem, size = 0x40000, scoped, tag = 'input window, operand 0']
    #allocation5 [shape = 's32[2]{0}', space=sflag, size = 0x8, scoped, tag = 'scoped memory for tpu_custom_call.1']
    #allocation6 [shape = 's32[2]{0}', space=sflag, size = 0x8, scoped, tag = 'scoped memory for tpu_custom_call.1']
    #allocation7 [shape = 'u8[262144]{0}', space=vmem, size = 0x40000, scoped, tag = 'input window, operand 1']
    #allocation8 [shape = 's32[2]{0}', space=sflag, size = 0x8, scoped, tag = 'scoped memory for tpu_custom_call.1']
    #allocation9 [shape = 'u8[32768]{0}', space=vmem, size = 0x8000, scoped, tag = 'input window, operand 2']
    #allocation10 [shape = 'u8[196608]{0}', space=vmem, size = 0x30000, scoped, tag = 'input window, operand 3, single buffered']
    #allocation11 [shape = 's32[1]{0}', space=sflag, size = 0x4, scoped, tag = 'scoped memory for tpu_custom_call.1']
    #allocation12 [shape = 'u8[4096]{0}', space=vmem, size = 0x1000, scoped, tag = 'input window, operand 4, single buffered']
    #allocation13 [shape = 'u8[65536]{0}', space=vmem, size = 0x10000, scoped, tag = 'output window, operand 0']
    %10 = vsyncpa [#allocation5], 0
    %s11 = scalar_lea.sflag [#allocation5], 1
    %12 = vsyncpa %s11, 0
    %13 = vsyncpa [#allocation8], 0
    %s14 = scalar_lea.sflag [#allocation8], 1
    %15 = vsyncpa %s14, 0
    %16 = vsyncpa [#allocation11], 0
    %17 = vsyncpa [#allocation6], 0
    %s18 = scalar_lea.sflag [#allocation6], 1
    %19 = vsyncpa %s18, 0
    loop: start=0, step=1, limit=18
    $region2: #{tpu_custom_call.1} parent=1 // loop_pre_header
      _
    $region3: #{tpu_custom_call.1} parent=1 // loop_header
      %s21 = sphi 0, %s25
      %p22 = scmp.ge.s32.totalorder %s21, 18
      %s31 = sphi 0, %s33
      %s34 = sphi 0, %s31
      %s35 = sphi 0, %s34
      %s51 = sphi 0, %s35
      %s57 = sphi 0, %s59
      %s60 = sphi 0, %s57
      %s61 = sphi 0, %s60
      %s77 = sphi 0, %s61
      %s83 = sphi 0, %s85
      %s86 = sphi 0, %s83
      %s87 = sphi 0, %s86
      %s103 = sphi 0, %s87
      %s107 = sphi 0, %s107
      %s109 = sphi 0, %s107
      %s110 = sphi 0, %s109
      %s124 = sphi 0, %s110
      %s128 = sphi 0, %s128
      %s130 = sphi 0, %s128
      %s131 = sphi 0, %s130
      %s145 = sphi 0, %s131
      %s151 = sphi 0, %s153
      %s154 = sphi 0, %s151
      %s155 = sphi 0, %s154
      %s171 = sphi 0, %s155
    $region4: #{tpu_custom_call.1} parent=1 // loop_header_branch
      %24 = sbr.rel (%p22) target = $region8
    $region5: #{tpu_custom_call.1} parent=1 // loop_body
      %s26 = ssub.s32 %s21, 1
      %s27 = ssub.s32 %s21, 2
      %s28 = sadd.s32 %s21, 1
      %s29 = ssub.s32 %s21, %s28
      %p30 = scmp.eq.s32.totalorder %s29, 0
      %s32 = sadd.s32 %s31, 1
      %s33 = scalar_select %p30, %s31, %s32
      %p36 = pneg %p30
      %p37 = scmp.eq.s32.totalorder %s21, 15
      %p38 = por %p36, %p37
      %p39 = scmp.ne.s32.totalorder %s31, %s34
      %p40 = scmp.eq.s32.totalorder %s21, 0
      %p41 = por %p39, %p40
      %p42 = scmp.ne.s32.totalorder %s31, %s34
      %p43 = scmp.eq.s32.totalorder %s26, 15
      %p44 = por %p42, %p43
      %p45 = scmp.ne.s32.totalorder %s34, %s35
      %p46 = scmp.eq.s32.totalorder %s26, 0
      %p47 = por %p45, %p46
      %p48 = scmp.ne.s32.totalorder %s34, %s35
      %p49 = scmp.eq.s32.totalorder %s27, 15
      %p50 = por %p48, %p49
      %p52 = scmp.ne.s32.totalorder %s35, %s51
      %p53 = scmp.eq.s32.totalorder %s27, 0
      %p54 = por %p52, %p53
      %s55 = ssub.s32 %s21, %s28
      %p56 = scmp.eq.s32.totalorder %s55, 0
      %s58 = sadd.s32 %s57, 1
      %s59 = scalar_select %p56, %s57, %s58
      %p62 = pneg %p56
      %p63 = scmp.eq.s32.totalorder %s21, 15
      %p64 = por %p62, %p63
      %p65 = scmp.ne.s32.totalorder %s57, %s60
      %p66 = scmp.eq.s32.totalorder %s21, 0
      %p67 = por %p65, %p66
      %p68 = scmp.ne.s32.totalorder %s57, %s60
      %p69 = scmp.eq.s32.totalorder %s26, 15
      %p70 = por %p68, %p69
      %p71 = scmp.ne.s32.totalorder %s60, %s61
      %p72 = scmp.eq.s32.totalorder %s26, 0
      %p73 = por %p71, %p72
      %p74 = scmp.ne.s32.totalorder %s60, %s61
      %p75 = scmp.eq.s32.totalorder %s27, 15
      %p76 = por %p74, %p75
      %p78 = scmp.ne.s32.totalorder %s61, %s77
      %p79 = scmp.eq.s32.totalorder %s27, 0
      %p80 = por %p78, %p79
      %s81 = ssub.s32 %s21, %s28
      %p82 = scmp.eq.s32.totalorder %s81, 0
      %s84 = sadd.s32 %s83, 1
      %s85 = scalar_select %p82, %s83, %s84
      %p88 = pneg %p82
      %p89 = scmp.eq.s32.totalorder %s21, 15
      %p90 = por %p88, %p89
      %p91 = scmp.ne.s32.totalorder %s83, %s86
      %p92 = scmp.eq.s32.totalorder %s21, 0
      %p93 = por %p91, %p92
      %p94 = scmp.ne.s32.totalorder %s83, %s86
      %p95 = scmp.eq.s32.totalorder %s26, 15
      %p96 = por %p94, %p95
      %p97 = scmp.ne.s32.totalorder %s86, %s87
      %p98 = scmp.eq.s32.totalorder %s26, 0
      %p99 = por %p97, %p98
      %p100 = scmp.ne.s32.totalorder %s86, %s87
      %p101 = scmp.eq.s32.totalorder %s27, 15
      %p102 = por %p100, %p101
      %p104 = scmp.ne.s32.totalorder %s87, %s103
      %p105 = scmp.eq.s32.totalorder %s27, 0
      %p106 = por %p104, %p105
      %s108 = sadd.s32 %s107, 1
      %p111 = scmp.eq.s32.totalorder %s21, 15
      %p112 = scmp.ne.s32.totalorder %s107, %s109
      %p113 = scmp.eq.s32.totalorder %s21, 0
      %p114 = por %p112, %p113
      %p115 = scmp.ne.s32.totalorder %s107, %s109
      %p116 = scmp.eq.s32.totalorder %s26, 15
      %p117 = por %p115, %p116
      %p118 = scmp.ne.s32.totalorder %s109, %s110
      %p119 = scmp.eq.s32.totalorder %s26, 0
      %p120 = por %p118, %p119
      %p121 = scmp.ne.s32.totalorder %s109, %s110
      %p122 = scmp.eq.s32.totalorder %s27, 15
      %p123 = por %p121, %p122
      %p125 = scmp.ne.s32.totalorder %s110, %s124
      %p126 = scmp.eq.s32.totalorder %s27, 0
      %p127 = por %p125, %p126
      %s129 = sadd.s32 %s128, 1
      %p132 = scmp.eq.s32.totalorder %s21, 15
      %p133 = scmp.ne.s32.totalorder %s128, %s130
      %p134 = scmp.eq.s32.totalorder %s21, 0
      %p135 = por %p133, %p134
      %p136 = scmp.ne.s32.totalorder %s128, %s130
      %p137 = scmp.eq.s32.totalorder %s26, 15
      %p138 = por %p136, %p137
      %p139 = scmp.ne.s32.totalorder %s130, %s131
      %p140 = scmp.eq.s32.totalorder %s26, 0
      %p141 = por %p139, %p140
      %p142 = scmp.ne.s32.totalorder %s130, %s131
      %p143 = scmp.eq.s32.totalorder %s27, 15
      %p144 = por %p142, %p143
      %p146 = scmp.ne.s32.totalorder %s131, %s145
      %p147 = scmp.eq.s32.totalorder %s27, 0
      %p148 = por %p146, %p147
      %s149 = ssub.s32 %s21, %s28
      %p150 = scmp.eq.s32.totalorder %s149, 0
      %s152 = sadd.s32 %s151, 1
      %s153 = scalar_select %p150, %s151, %s152
      %p156 = pneg %p150
      %p157 = scmp.eq.s32.totalorder %s21, 15
      %p158 = por %p156, %p157
      %p159 = scmp.ne.s32.totalorder %s151, %s154
      %p160 = scmp.eq.s32.totalorder %s21, 0
      %p161 = por %p159, %p160
      %p162 = scmp.ne.s32.totalorder %s151, %s154
      %p163 = scmp.eq.s32.totalorder %s26, 15
      %p164 = por %p162, %p163
      %p165 = scmp.ne.s32.totalorder %s154, %s155
      %p166 = scmp.eq.s32.totalorder %s26, 0
      %p167 = por %p165, %p166
      %p168 = scmp.ne.s32.totalorder %s154, %s155
      %p169 = scmp.eq.s32.totalorder %s27, 15
      %p170 = por %p168, %p169
      %p172 = scmp.ne.s32.totalorder %s155, %s171
      %p173 = scmp.eq.s32.totalorder %s27, 0
      %p174 = por %p172, %p173
      %p175 = scmp.le.s32.totalorder 1, %s21
      %p176 = scmp.lt.s32.totalorder %s21, 17
      %p177 = pnand %p175, %p176
      %p178 = pneg %p177
      // Predicated region
      $region9: #{tpu_custom_call.1} parent=5 // pred_check
        _
      $region10: #{tpu_custom_call.1} parent=5 // pred_check_branch
        %180 = sbr.rel (%p177) target = $region12
      $region11: #{tpu_custom_call.1} parent=5 // pred_region
        %s181 = ssub.s32 %s21, 1
        // Predicated region
        $region13: #{tpu_custom_call.1} parent=11 // pred_check
          %p182 = pneg %p120
        $region14: #{tpu_custom_call.1} parent=11 // pred_check_branch
          %184 = sbr.rel (%p182) target = $region16
        $region15: #{tpu_custom_call.1} parent=11 // pred_region
          %s186 = ssub.s32 6144, 6144
          %187 = vsyncadd [#allocation11], %s186
          %s188 = sshll.u32 [#allocation10], 4
          %s189 = int_to_ptr.vmem [resolvable:$true] %s188
          %194 = dma.hbm_to_vmem [thread:$0]  %s3, 6144, %s189, [#allocation11], 64, 64, 4
        $region16: #{tpu_custom_call.1} parent=11 // pred_fallthru
          _
        // Predicated region
        $region17: #{tpu_custom_call.1} parent=11 // pred_check
          %p195 = pneg %p141
        $region18: #{tpu_custom_call.1} parent=11 // pred_check_branch
          %197 = sbr.rel (%p195) target = $region20
        $region19: #{tpu_custom_call.1} parent=11 // pred_region
          %s199 = ssub.s32 128, 128
          %200 = vsyncadd [#allocation11], %s199
          %s202 = sshll.u32 [#allocation12], 4
          %s203 = int_to_ptr.vmem [resolvable:$true] %s202
          %205 = dma.hbm_to_vmem [thread:$0]  %s4, 128, %s203, [#allocation11]
        $region20: #{tpu_custom_call.1} parent=11 // pred_fallthru
          _
      $region12: #{tpu_custom_call.1} parent=5 // pred_fallthru
        _
      %p206 = scmp.lt.s32.totalorder %s21, 16
      // Predicated region
      $region21: #{tpu_custom_call.1} parent=5 // pred_check
        %p207 = pneg %p206
      $region22: #{tpu_custom_call.1} parent=5 // pred_check_branch
        %209 = sbr.rel (%p207) target = $region24
      $region23: #{tpu_custom_call.1} parent=5 // pred_region
        // Predicated region
        $region25: #{tpu_custom_call.1} parent=23 // pred_check
          %p210 = pneg %p41
        $region26: #{tpu_custom_call.1} parent=23 // pred_check_branch
          %212 = sbr.rel (%p210) target = $region28
        $region27: #{tpu_custom_call.1} parent=23 // pred_region
          %s213 = sand.u32 %s31, 1
          %s214 = scalar_lea.sflag [#allocation5], %s213
          %s215 = sand.u32 %s31, 1
          %s216 = smul.addr %s215, 256
          %s217 = scalar_lea.vmem [#allocation4], %s216
          %s218 = smul.u32 64, %s21
          %s220 = ssub.s32 4096, 4096
          %221 = vsyncadd %s214, %s220
          %s222 = smul.addr %s218, 64
          %s223 = scalar_lea.hbm %s0, %s222
          %s224 = sshll.u32 %s217, 4
          %s225 = int_to_ptr.vmem [resolvable:$true] %s224
          %230 = dma.hbm_to_vmem [thread:$0]  %s223, 4096, %s225, %s214, 64, 64, 4
        $region28: #{tpu_custom_call.1} parent=23 // pred_fallthru
          _
        // Predicated region
        $region29: #{tpu_custom_call.1} parent=23 // pred_check
          %p231 = pneg %p67
        $region30: #{tpu_custom_call.1} parent=23 // pred_check_branch
          %233 = sbr.rel (%p231) target = $region32
        $region31: #{tpu_custom_call.1} parent=23 // pred_region
          %s234 = sand.u32 %s21, 1
          %s235 = scalar_lea.sflag [#allocation8], %s234
          %s236 = sand.u32 %s57, 1
          %s237 = smul.addr %s236, 256
          %s238 = scalar_lea.vmem [#allocation7], %s237
          %s239 = smul.u32 64, %s21
          %s241 = ssub.s32 4096, 4096
          %242 = vsyncadd %s235, %s241
          %s243 = smul.addr %s239, 64
          %s244 = scalar_lea.hbm %s1, %s243
          %s245 = sshll.u32 %s238, 4
          %s246 = int_to_ptr.vmem [resolvable:$true] %s245
          %251 = dma.hbm_to_vmem [thread:$0]  %s244, 4096, %s246, %s235, 64, 64, 4
        $region32: #{tpu_custom_call.1} parent=23 // pred_fallthru
          _
        // Predicated region
        $region33: #{tpu_custom_call.1} parent=23 // pred_check
          %p252 = pneg %p93
        $region34: #{tpu_custom_call.1} parent=23 // pred_check_branch
          %254 = sbr.rel (%p252) target = $region36
        $region35: #{tpu_custom_call.1} parent=23 // pred_region
          %s255 = sand.u32 %s21, 1
          %s256 = scalar_lea.sflag [#allocation8], %s255
          %s257 = sand.u32 %s83, 1
          %s258 = smul.addr %s257, 32
          %s259 = scalar_lea.vmem [#allocation9], %s258
          %s260 = smul.u32 8, %s21
          %s262 = ssub.s32 512, 512
          %263 = vsyncadd %s256, %s262
          %s264 = smul.addr %s260, 64
          %s265 = scalar_lea.hbm %s2, %s264
          %s266 = sshll.u32 %s259, 4
          %s267 = int_to_ptr.vmem [resolvable:$true] %s266
          %272 = dma.hbm_to_vmem [thread:$0]  %s265, 512, %s267, %s256, 64, 64, 4
        $region36: #{tpu_custom_call.1} parent=23 // pred_fallthru
          _
      $region24: #{tpu_custom_call.1} parent=5 // pred_fallthru
        _
      %p273 = scmp.le.s32.totalorder 1, %s21
      %p274 = scmp.lt.s32.totalorder %s21, 17
      %p275 = pnand %p273, %p274
      %p276 = pneg %p275
      // Predicated region
      $region37: #{tpu_custom_call.1} parent=5 // pred_check
        _
      $region38: #{tpu_custom_call.1} parent=5 // pred_check_branch
        %278 = sbr.rel (%p275) target = $region40
      $region39: #{tpu_custom_call.1} parent=5 // pred_region
        %s279 = ssub.s32 %s21, 1
        %s280 = sand.u32 %s34, 1
        %s281 = scalar_lea.sflag [#allocation5], %s280
        %s282 = sand.u32 %s34, 1
        %s283 = smul.addr %s282, 256
        %s284 = scalar_lea.vmem [#allocation4], %s283
        // Predicated region
        $region41: #{tpu_custom_call.1} parent=39 // pred_check
          %p285 = pneg %p47
        $region42: #{tpu_custom_call.1} parent=39 // pred_check_branch
          %287 = sbr.rel (%p285) target = $region44
        $region43: #{tpu_custom_call.1} parent=39 // pred_region
          %288 = dma.done %s281, 4096
        $region44: #{tpu_custom_call.1} parent=39 // pred_fallthru
          _
        %s289 = sand.u32 %s26, 1
        %s290 = scalar_lea.sflag [#allocation8], %s289
        %s291 = sand.u32 %s60, 1
        %s292 = smul.addr %s291, 256
        %s293 = scalar_lea.vmem [#allocation7], %s292
        // Predicated region
        $region45: #{tpu_custom_call.1} parent=39 // pred_check
          %p294 = pneg %p73
        $region46: #{tpu_custom_call.1} parent=39 // pred_check_branch
          %296 = sbr.rel (%p294) target = $region48
        $region47: #{tpu_custom_call.1} parent=39 // pred_region
          %297 = dma.done %s290, 4096
        $region48: #{tpu_custom_call.1} parent=39 // pred_fallthru
          _
        %s298 = sand.u32 %s26, 1
        %s299 = scalar_lea.sflag [#allocation8], %s298
        %s300 = sand.u32 %s86, 1
        %s301 = smul.addr %s300, 32
        %s302 = scalar_lea.vmem [#allocation9], %s301
        // Predicated region
        $region49: #{tpu_custom_call.1} parent=39 // pred_check
          %p303 = pneg %p99
        $region50: #{tpu_custom_call.1} parent=39 // pred_check_branch
          %305 = sbr.rel (%p303) target = $region52
        $region51: #{tpu_custom_call.1} parent=39 // pred_region
          %306 = dma.done %s299, 512
        $region52: #{tpu_custom_call.1} parent=39 // pred_fallthru
          _
        // Predicated region
        $region53: #{tpu_custom_call.1} parent=39 // pred_check
          %p307 = pneg %p120
        $region54: #{tpu_custom_call.1} parent=39 // pred_check_branch
          %309 = sbr.rel (%p307) target = $region56
        $region55: #{tpu_custom_call.1} parent=39 // pred_region
          %310 = dma.done [#allocation11], 6144
        $region56: #{tpu_custom_call.1} parent=39 // pred_fallthru
          _
        // Predicated region
        $region57: #{tpu_custom_call.1} parent=39 // pred_check
          %p311 = pneg %p141
        $region58: #{tpu_custom_call.1} parent=39 // pred_check_branch
          %313 = sbr.rel (%p311) target = $region60
        $region59: #{tpu_custom_call.1} parent=39 // pred_region
          %314 = dma.done [#allocation11], 128
        $region60: #{tpu_custom_call.1} parent=39 // pred_fallthru
          _
        %s315 = sand.u32 %s34, 1
        %s316 = scalar_lea.sflag [#allocation5], %s315
        %s317 = sand.u32 %s34, 1
        %s318 = smul.addr %s317, 256
        %s319 = scalar_lea.vmem [#allocation4], %s318
        %p320 = pneg %p47
        %p321 = pneg %p44
        %s322 = sand.u32 %s26, 1
        %s323 = scalar_lea.sflag [#allocation8], %s322
        %s324 = sand.u32 %s60, 1
        %s325 = smul.addr %s324, 256
        %s326 = scalar_lea.vmem [#allocation7], %s325
        %p327 = pneg %p73
        %p328 = pneg %p70
        %s329 = sand.u32 %s26, 1
        %s330 = scalar_lea.sflag [#allocation8], %s329
        %s331 = sand.u32 %s86, 1
        %s332 = smul.addr %s331, 32
        %s333 = scalar_lea.vmem [#allocation9], %s332
        %p334 = pneg %p99
        %p335 = pneg %p96
        %p336 = pneg %p120
        %p337 = pneg %p117
        %p338 = pneg %p141
        %p339 = pneg %p138
        %p340 = pneg %p167
        %p341 = pneg %p164
        %s342 = sand.u32 %s154, 1
        %s343 = scalar_lea.sflag [#allocation6], %s342
        %s344 = sand.u32 %s154, 1
        %s345 = smul.addr %s344, 64
        %s346 = scalar_lea.vmem [#allocation13], %s345
        %s347 = smul.u32 64, %s26
        %s348 = smul.u32 64, %s26
        %s349 = smul.u32 8, %s26
        %s350 = smul.u32 8, %s26
        %v352 = vld [vmem:[%s293] sm:$0xf]
        %v353 = vld [vmem:[%s293 + $0x4] sm:$0xf]
        %v354 = vld [vmem:[%s293 + $0x8] sm:$0xf]
        %v355 = vld [vmem:[%s293 + $0xc] sm:$0xf]
        %v356 = vld [vmem:[%s293 + $0x10] sm:$0xf]
        %v357 = vld [vmem:[%s293 + $0x14] sm:$0xf]
        %v358 = vld [vmem:[%s293 + $0x18] sm:$0xf]
        %v359 = vld [vmem:[%s293 + $0x1c] sm:$0xf]
        %v360 = vld [vmem:[%s293 + $0x20] sm:$0xf]
        %v361 = vld [vmem:[%s293 + $0x24] sm:$0xf]
        %v362 = vld [vmem:[%s293 + $0x28] sm:$0xf]
        %v363 = vld [vmem:[%s293 + $0x2c] sm:$0xf]
        %v364 = vld [vmem:[%s293 + $0x30] sm:$0xf]
        %v365 = vld [vmem:[%s293 + $0x34] sm:$0xf]
        %v366 = vld [vmem:[%s293 + $0x38] sm:$0xf]
        %v367 = vld [vmem:[%s293 + $0x3c] sm:$0xf]
        %v368 = vld [vmem:[%s293 + $0x40] sm:$0xf]
        %v369 = vld [vmem:[%s293 + $0x44] sm:$0xf]
        %v370 = vld [vmem:[%s293 + $0x48] sm:$0xf]
        %v371 = vld [vmem:[%s293 + $0x4c] sm:$0xf]
        %v372 = vld [vmem:[%s293 + $0x50] sm:$0xf]
        %v373 = vld [vmem:[%s293 + $0x54] sm:$0xf]
        %v374 = vld [vmem:[%s293 + $0x58] sm:$0xf]
        %v375 = vld [vmem:[%s293 + $0x5c] sm:$0xf]
        %v376 = vld [vmem:[%s293 + $0x60] sm:$0xf]
        %v377 = vld [vmem:[%s293 + $0x64] sm:$0xf]
        %v378 = vld [vmem:[%s293 + $0x68] sm:$0xf]
        %v379 = vld [vmem:[%s293 + $0x6c] sm:$0xf]
        %v380 = vld [vmem:[%s293 + $0x70] sm:$0xf]
        %v381 = vld [vmem:[%s293 + $0x74] sm:$0xf]
        %v382 = vld [vmem:[%s293 + $0x78] sm:$0xf]
        %v383 = vld [vmem:[%s293 + $0x7c] sm:$0xf]
        %v384 = vld [vmem:[%s293 + $0x80] sm:$0xf]
        %v385 = vld [vmem:[%s293 + $0x84] sm:$0xf]
        %v386 = vld [vmem:[%s293 + $0x88] sm:$0xf]
        %v387 = vld [vmem:[%s293 + $0x8c] sm:$0xf]
        %v388 = vld [vmem:[%s293 + $0x90] sm:$0xf]
        %v389 = vld [vmem:[%s293 + $0x94] sm:$0xf]
        %v390 = vld [vmem:[%s293 + $0x98] sm:$0xf]
        %v391 = vld [vmem:[%s293 + $0x9c] sm:$0xf]
        %v392 = vld [vmem:[%s293 + $0xa0] sm:$0xf]
        %v393 = vld [vmem:[%s293 + $0xa4] sm:$0xf]
        %v394 = vld [vmem:[%s293 + $0xa8] sm:$0xf]
        %v395 = vld [vmem:[%s293 + $0xac] sm:$0xf]
        %v396 = vld [vmem:[%s293 + $0xb0] sm:$0xf]
        %v397 = vld [vmem:[%s293 + $0xb4] sm:$0xf]
        %v398 = vld [vmem:[%s293 + $0xb8] sm:$0xf]
        %v399 = vld [vmem:[%s293 + $0xbc] sm:$0xf]
        %v400 = vld [vmem:[%s293 + $0xc0] sm:$0xf]
        %v401 = vld [vmem:[%s293 + $0xc4] sm:$0xf]
        %v402 = vld [vmem:[%s293 + $0xc8] sm:$0xf]
        %v403 = vld [vmem:[%s293 + $0xcc] sm:$0xf]
        %v404 = vld [vmem:[%s293 + $0xd0] sm:$0xf]
        %v405 = vld [vmem:[%s293 + $0xd4] sm:$0xf]
        %v406 = vld [vmem:[%s293 + $0xd8] sm:$0xf]
        %v407 = vld [vmem:[%s293 + $0xdc] sm:$0xf]
        %v408 = vld [vmem:[%s293 + $0xe0] sm:$0xf]
        %v409 = vld [vmem:[%s293 + $0xe4] sm:$0xf]
        %v410 = vld [vmem:[%s293 + $0xe8] sm:$0xf]
        %v411 = vld [vmem:[%s293 + $0xec] sm:$0xf]
        %v412 = vld [vmem:[%s293 + $0xf0] sm:$0xf]
        %v413 = vld [vmem:[%s293 + $0xf4] sm:$0xf]
        %v414 = vld [vmem:[%s293 + $0xf8] sm:$0xf]
        %v415 = vld [vmem:[%s293 + $0xfc] sm:$0xf]
        %v480 = vunpack.c.l.b16 %v352
        %v481 = vunpack.c.l.b16 %v353
        %v482 = vunpack.c.l.b16 %v354
        %v483 = vunpack.c.l.b16 %v355
        %v484 = vunpack.c.l.b16 %v356
        %v485 = vunpack.c.l.b16 %v357
        %v486 = vunpack.c.l.b16 %v358
        %v487 = vunpack.c.l.b16 %v359
        %v488 = vunpack.c.l.b16 %v360
        %v489 = vunpack.c.l.b16 %v361
        %v490 = vunpack.c.l.b16 %v362
        %v491 = vunpack.c.l.b16 %v363
        %v492 = vunpack.c.l.b16 %v364
        %v493 = vunpack.c.l.b16 %v365
        %v494 = vunpack.c.l.b16 %v366
        %v495 = vunpack.c.l.b16 %v367
        %v496 = vunpack.c.l.b16 %v368
        %v497 = vunpack.c.l.b16 %v369
        %v498 = vunpack.c.l.b16 %v370
        %v499 = vunpack.c.l.b16 %v371
        %v500 = vunpack.c.l.b16 %v372
        %v501 = vunpack.c.l.b16 %v373
        %v502 = vunpack.c.l.b16 %v374
        %v503 = vunpack.c.l.b16 %v375
        %v504 = vunpack.c.l.b16 %v376
        %v505 = vunpack.c.l.b16 %v377
        %v506 = vunpack.c.l.b16 %v378
        %v507 = vunpack.c.l.b16 %v379
        %v508 = vunpack.c.l.b16 %v380
        %v509 = vunpack.c.l.b16 %v381
        %v510 = vunpack.c.l.b16 %v382
        %v511 = vunpack.c.l.b16 %v383
        %v512 = vunpack.c.l.b16 %v384
        %v513 = vunpack.c.l.b16 %v385
        %v514 = vunpack.c.l.b16 %v386
        %v515 = vunpack.c.l.b16 %v387
        %v516 = vunpack.c.l.b16 %v388
        %v517 = vunpack.c.l.b16 %v389
        %v518 = vunpack.c.l.b16 %v390
        %v519 = vunpack.c.l.b16 %v391
        %v520 = vunpack.c.l.b16 %v392
        %v521 = vunpack.c.l.b16 %v393
        %v522 = vunpack.c.l.b16 %v394
        %v523 = vunpack.c.l.b16 %v395
        %v524 = vunpack.c.l.b16 %v396
        %v525 = vunpack.c.l.b16 %v397
        %v526 = vunpack.c.l.b16 %v398
        %v527 = vunpack.c.l.b16 %v399
        %v528 = vunpack.c.l.b16 %v400
        %v529 = vunpack.c.l.b16 %v401
        %v530 = vunpack.c.l.b16 %v402
        %v531 = vunpack.c.l.b16 %v403
        %v532 = vunpack.c.l.b16 %v404
        %v533 = vunpack.c.l.b16 %v405
        %v534 = vunpack.c.l.b16 %v406
        %v535 = vunpack.c.l.b16 %v407
        %v536 = vunpack.c.l.b16 %v408
        %v537 = vunpack.c.l.b16 %v409
        %v538 = vunpack.c.l.b16 %v410
        %v539 = vunpack.c.l.b16 %v411
        %v540 = vunpack.c.l.b16 %v412
        %v541 = vunpack.c.l.b16 %v413
        %v542 = vunpack.c.l.b16 %v414
        %v543 = vunpack.c.l.b16 %v415
        %v544 = vpack.c.b16 %v481, %v480
        %v545 = vpack.c.b16 %v483, %v482
        %v546 = vpack.c.b16 %v485, %v484
        %v547 = vpack.c.b16 %v487, %v486
        %v548 = vpack.c.b16 %v489, %v488
        %v549 = vpack.c.b16 %v491, %v490
        %v550 = vpack.c.b16 %v493, %v492
        %v551 = vpack.c.b16 %v495, %v494
        %v552 = vpack.c.b16 %v497, %v496
        %v553 = vpack.c.b16 %v499, %v498
        %v554 = vpack.c.b16 %v501, %v500
        %v555 = vpack.c.b16 %v503, %v502
        %v556 = vpack.c.b16 %v505, %v504
        %v557 = vpack.c.b16 %v507, %v506
        %v558 = vpack.c.b16 %v509, %v508
        %v559 = vpack.c.b16 %v511, %v510
        %v560 = vpack.c.b16 %v513, %v512
        %v561 = vpack.c.b16 %v515, %v514
        %v562 = vpack.c.b16 %v517, %v516
        %v563 = vpack.c.b16 %v519, %v518
        %v564 = vpack.c.b16 %v521, %v520
        %v565 = vpack.c.b16 %v523, %v522
        %v566 = vpack.c.b16 %v525, %v524
        %v567 = vpack.c.b16 %v527, %v526
        %v568 = vpack.c.b16 %v529, %v528
        %v569 = vpack.c.b16 %v531, %v530
        %v570 = vpack.c.b16 %v533, %v532
        %v571 = vpack.c.b16 %v535, %v534
        %v572 = vpack.c.b16 %v537, %v536
        %v573 = vpack.c.b16 %v539, %v538
        %v574 = vpack.c.b16 %v541, %v540
        %v575 = vpack.c.b16 %v543, %v542
        %608 = vst [vmem:[#allocation2] sm:$0xff] %v544
        %609 = vst [vmem:[#allocation2 + $0x8] sm:$0xff] %v545
        %610 = vst [vmem:[#allocation2 + $0x10] sm:$0xff] %v546
        %611 = vst [vmem:[#allocation2 + $0x18] sm:$0xff] %v547
        %612 = vst [vmem:[#allocation2 + $0x20] sm:$0xff] %v548
        %613 = vst [vmem:[#allocation2 + $0x28] sm:$0xff] %v549
        %614 = vst [vmem:[#allocation2 + $0x30] sm:$0xff] %v550
        %615 = vst [vmem:[#allocation2 + $0x38] sm:$0xff] %v551
        %616 = vst [vmem:[#allocation2 + $0x40] sm:$0xff] %v552
        %617 = vst [vmem:[#allocation2 + $0x48] sm:$0xff] %v553
        %618 = vst [vmem:[#allocation2 + $0x50] sm:$0xff] %v554
        %619 = vst [vmem:[#allocation2 + $0x58] sm:$0xff] %v555
        %620 = vst [vmem:[#allocation2 + $0x60] sm:$0xff] %v556
        %621 = vst [vmem:[#allocation2 + $0x68] sm:$0xff] %v557
        %622 = vst [vmem:[#allocation2 + $0x70] sm:$0xff] %v558
        %623 = vst [vmem:[#allocation2 + $0x78] sm:$0xff] %v559
        %624 = vst [vmem:[#allocation2 + $0x80] sm:$0xff] %v560
        %625 = vst [vmem:[#allocation2 + $0x88] sm:$0xff] %v561
        %626 = vst [vmem:[#allocation2 + $0x90] sm:$0xff] %v562
        %627 = vst [vmem:[#allocation2 + $0x98] sm:$0xff] %v563
        %628 = vst [vmem:[#allocation2 + $0xa0] sm:$0xff] %v564
        %629 = vst [vmem:[#allocation2 + $0xa8] sm:$0xff] %v565
        %630 = vst [vmem:[#allocation2 + $0xb0] sm:$0xff] %v566
        %631 = vst [vmem:[#allocation2 + $0xb8] sm:$0xff] %v567
        %632 = vst [vmem:[#allocation2 + $0xc0] sm:$0xff] %v568
        %633 = vst [vmem:[#allocation2 + $0xc8] sm:$0xff] %v569
        %634 = vst [vmem:[#allocation2 + $0xd0] sm:$0xff] %v570
        %635 = vst [vmem:[#allocation2 + $0xd8] sm:$0xff] %v571
        %636 = vst [vmem:[#allocation2 + $0xe0] sm:$0xff] %v572
        %637 = vst [vmem:[#allocation2 + $0xe8] sm:$0xff] %v573
        %638 = vst [vmem:[#allocation2 + $0xf0] sm:$0xff] %v574
        %639 = vst [vmem:[#allocation2 + $0xf8] sm:$0xff] %v575
        %v640 = vld [vmem:[#allocation10] sm:$0xf]
        %v641 = vld [vmem:[#allocation10 + $0x4] sm:$0xf]
        %v642 = vld [vmem:[#allocation10 + $0x8] sm:$0xf]
        %v643 = vld [vmem:[#allocation10 + $0xc] sm:$0xf]
        %v644 = vld [vmem:[#allocation10 + $0x10] sm:$0xf]
        %v645 = vld [vmem:[#allocation10 + $0x14] sm:$0xf]
        %v646 = vld [vmem:[#allocation10 + $0x18] sm:$0xf]
        %v647 = vld [vmem:[#allocation10 + $0x1c] sm:$0xf]
        %v648 = vld [vmem:[#allocation10 + $0x20] sm:$0xf]
        %v649 = vld [vmem:[#allocation10 + $0x24] sm:$0xf]
        %v650 = vld [vmem:[#allocation10 + $0x28] sm:$0xf]
        %v651 = vld [vmem:[#allocation10 + $0x2c] sm:$0xf]
        %v652 = vld [vmem:[#allocation10 + $0x30] sm:$0xf]
        %v653 = vld [vmem:[#allocation10 + $0x34] sm:$0xf]
        %v654 = vld [vmem:[#allocation10 + $0x38] sm:$0xf]
        %v655 = vld [vmem:[#allocation10 + $0x3c] sm:$0xf]
        %v656 = vld [vmem:[#allocation12] sm:$0x1]
        %v657 = vld [vmem:[#allocation2] sm:$0xff]
        %v658 = vld [vmem:[#allocation2 + $0x8] sm:$0xff]
        %v659 = vld [vmem:[#allocation2 + $0x10] sm:$0xff]
        %v660 = vld [vmem:[#allocation2 + $0x18] sm:$0xff]
        %v661 = vld [vmem:[#allocation2 + $0x20] sm:$0xff]
        %v662 = vld [vmem:[#allocation2 + $0x28] sm:$0xff]
        %v663 = vld [vmem:[#allocation2 + $0x30] sm:$0xff]
        %v664 = vld [vmem:[#allocation2 + $0x38] sm:$0xff]
        %v665 = vld [vmem:[#allocation2 + $0x40] sm:$0xff]
        %v666 = vld [vmem:[#allocation2 + $0x48] sm:$0xff]
        %v667 = vld [vmem:[#allocation2 + $0x50] sm:$0xff]
        %v668 = vld [vmem:[#allocation2 + $0x58] sm:$0xff]
        %v669 = vld [vmem:[#allocation2 + $0x60] sm:$0xff]
        %v670 = vld [vmem:[#allocation2 + $0x68] sm:$0xff]
        %v671 = vld [vmem:[#allocation2 + $0x70] sm:$0xff]
        %v672 = vld [vmem:[#allocation2 + $0x78] sm:$0xff]
        %v673 = vld [vmem:[#allocation2 + $0x80] sm:$0xff]
        %v674 = vld [vmem:[#allocation2 + $0x88] sm:$0xff]
        %v675 = vld [vmem:[#allocation2 + $0x90] sm:$0xff]
        %v676 = vld [vmem:[#allocation2 + $0x98] sm:$0xff]
        %v677 = vld [vmem:[#allocation2 + $0xa0] sm:$0xff]
        %v678 = vld [vmem:[#allocation2 + $0xa8] sm:$0xff]
        %v679 = vld [vmem:[#allocation2 + $0xb0] sm:$0xff]
        %v680 = vld [vmem:[#allocation2 + $0xb8] sm:$0xff]
        %v681 = vld [vmem:[#allocation2 + $0xc0] sm:$0xff]
        %v682 = vld [vmem:[#allocation2 + $0xc8] sm:$0xff]
        %v683 = vld [vmem:[#allocation2 + $0xd0] sm:$0xff]
        %v684 = vld [vmem:[#allocation2 + $0xd8] sm:$0xff]
        %v685 = vld [vmem:[#allocation2 + $0xe0] sm:$0xff]
        %v686 = vld [vmem:[#allocation2 + $0xe8] sm:$0xff]
        %v687 = vld [vmem:[#allocation2 + $0xf0] sm:$0xff]
        %v688 = vld [vmem:[#allocation2 + $0xf8] sm:$0xff]
        %v705 = vunpack.c.l.b16 %v640
        %v706 = vunpack.c.l.b16 %v641
        %v707 = vunpack.c.l.b16 %v642
        %v708 = vunpack.c.l.b16 %v643
        %v709 = vunpack.c.l.b16 %v644
        %v710 = vunpack.c.l.b16 %v645
        %v711 = vunpack.c.l.b16 %v646
        %v712 = vunpack.c.l.b16 %v647
        %v713 = vunpack.c.l.b16 %v648
        %v714 = vunpack.c.l.b16 %v649
        %v715 = vunpack.c.l.b16 %v650
        %v716 = vunpack.c.l.b16 %v651
        %v717 = vunpack.c.l.b16 %v652
        %v718 = vunpack.c.l.b16 %v653
        %v719 = vunpack.c.l.b16 %v654
        %v720 = vunpack.c.l.b16 %v655
        %v721 = vpack.c.b16 %v706, %v705
        %v722 = vpack.c.b16 %v708, %v707
        %v723 = vpack.c.b16 %v710, %v709
        %v724 = vpack.c.b16 %v712, %v711
        %v725 = vpack.c.b16 %v714, %v713
        %v726 = vpack.c.b16 %v716, %v715
        %v727 = vpack.c.b16 %v718, %v717
        %v728 = vpack.c.b16 %v720, %v719
        %737 = vmatprep.subr.bf16.mxu0 0
        %738 = vmatpush1.bf16.msra.mxu0 %v721
        %739 = vmatprep.subr.bf16.mxu0 0
        %740 = vmatpush1.bf16.msra.mxu0 %v722
        %741 = vmatprep.subr.bf16.mxu0 0
        %742 = vmatpush1.bf16.msra.mxu0 %v723
        %743 = vmatprep.subr.bf16.mxu0 0
        %744 = vmatpush1.bf16.msra.mxu0 %v724
        %745 = vmatprep.subr.bf16.mxu0 0
        %746 = vmatpush1.bf16.msra.mxu0 %v725
        %747 = vmatprep.subr.bf16.mxu0 0
        %748 = vmatpush1.bf16.msra.mxu0 %v726
        %749 = vmatprep.subr.bf16.mxu0 0
        %750 = vmatpush1.bf16.msra.mxu0 %v727
        %751 = vmatprep.subr.bf16.mxu0 0
        %752 = vmatpush1.bf16.msra.mxu0 %v728
        %753 = vmatprep.subr.bf16.mxu0 0
        %754 = vmatpush1.bf16.msra.mxu0 0
        %755 = vmatprep.subr.bf16.mxu0 0
        %756 = vmatpush1.bf16.msra.mxu0 0
        %757 = vmatprep.subr.bf16.mxu0 0
        %758 = vmatpush1.bf16.msra.mxu0 0
        %759 = vmatprep.subr.bf16.mxu0 0
        %760 = vmatpush1.bf16.msra.mxu0 0
        %761 = vmatprep.subr.bf16.mxu0 0
        %762 = vmatpush1.bf16.msra.mxu0 0
        %763 = vmatprep.subr.bf16.mxu0 0
        %764 = vmatpush1.bf16.msra.mxu0 0
        %765 = vmatprep.subr.bf16.mxu0 0
        %766 = vmatpush1.bf16.msra.mxu0 0
        %767 = vmatprep.subr.bf16.mxu0 0
        %768 = vmatpush1.bf16.msra.mxu0 0
        %769 = vmatprep.mubr.bf16.mxu0 0
        %770 = vmatmul.mubr.bf16.gmra.mrb[0].mxu0 %v657
        %v771 = vpop.f32.mrb[0].mxu0
        %v772 = vadd.f32 0.0, %v771
        %v773 = vpop.f32.mrb[0].mxu0
        %v774 = vpop.f32.mrb[0].mxu0
        %v775 = vadd.f32 0.0, %v774
        %v776 = vpop.f32.mrb[0].mxu0
        %777 = vmatprep.mubr.bf16.mxu0 0
        %778 = vmatmul.mubr.bf16.gmra.mrb[0].mxu0 %v658
        %v779 = vpop.f32.mrb[0].mxu0
        %v780 = vadd.f32 0.0, %v779
        %v781 = vpop.f32.mrb[0].mxu0
        %v782 = vpop.f32.mrb[0].mxu0
        %v783 = vadd.f32 0.0, %v782
        %v784 = vpop.f32.mrb[0].mxu0
        %785 = vmatprep.mubr.bf16.mxu0 0
        %786 = vmatmul.mubr.bf16.gmra.mrb[0].mxu0 %v659
        %v787 = vpop.f32.mrb[0].mxu0
        %v788 = vadd.f32 0.0, %v787
        %v789 = vpop.f32.mrb[0].mxu0
        %v790 = vpop.f32.mrb[0].mxu0
        %v791 = vadd.f32 0.0, %v790
        %v792 = vpop.f32.mrb[0].mxu0
        %793 = vmatprep.mubr.bf16.mxu0 0
        %794 = vmatmul.mubr.bf16.gmra.mrb[0].mxu0 %v660
        %v795 = vpop.f32.mrb[0].mxu0
        %v796 = vadd.f32 0.0, %v795
        %v797 = vpop.f32.mrb[0].mxu0
        %v798 = vpop.f32.mrb[0].mxu0
        %v799 = vadd.f32 0.0, %v798
        %v800 = vpop.f32.mrb[0].mxu0
        %801 = vmatprep.mubr.bf16.mxu0 0
        %802 = vmatmul.mubr.bf16.gmra.mrb[0].mxu0 %v661
        %v803 = vpop.f32.mrb[0].mxu0
        %v804 = vadd.f32 0.0, %v803
        %v805 = vpop.f32.mrb[0].mxu0
        %v806 = vpop.f32.mrb[0].mxu0
        %v807 = vadd.f32 0.0, %v806
        %v808 = vpop.f32.mrb[0].mxu0
        %809 = vmatprep.mubr.bf16.mxu0 0
        %810 = vmatmul.mubr.bf16.gmra.mrb[0].mxu0 %v662
        %v811 = vpop.f32.mrb[0].mxu0
        %v812 = vadd.f32 0.0, %v811
        %v813 = vpop.f32.mrb[0].mxu0
        %v814 = vpop.f32.mrb[0].mxu0
        %v815 = vadd.f32 0.0, %v814
        %v816 = vpop.f32.mrb[0].mxu0
        %817 = vmatprep.mubr.bf16.mxu0 0
        %818 = vmatmul.mubr.bf16.gmra.mrb[0].mxu0 %v663
        %v819 = vpop.f32.mrb[0].mxu0
        %v820 = vadd.f32 0.0, %v819
        %v821 = vpop.f32.mrb[0].mxu0
        %v822 = vpop.f32.mrb[0].mxu0
        %v823 = vadd.f32 0.0, %v822
        %v824 = vpop.f32.mrb[0].mxu0
        %825 = vmatprep.mubr.bf16.mxu0 0
        %826 = vmatmul.mubr.bf16.gmra.mrb[0].mxu0 %v664
        %v827 = vpop.f32.mrb[0].mxu0
        %v828 = vadd.f32 0.0, %v827
        %v829 = vpop.f32.mrb[0].mxu0
        %v830 = vpop.f32.mrb[0].mxu0
        %v831 = vadd.f32 0.0, %v830
        %v832 = vpop.f32.mrb[0].mxu0
        %833 = vmatprep.mubr.bf16.mxu0 0
        %834 = vmatmul.mubr.bf16.gmra.mrb[0].mxu0 %v665
        %v835 = vpop.f32.mrb[0].mxu0
        %v836 = vadd.f32 0.0, %v835
        %v837 = vpop.f32.mrb[0].mxu0
        %v838 = vpop.f32.mrb[0].mxu0
        %v839 = vadd.f32 0.0, %v838
        %v840 = vpop.f32.mrb[0].mxu0
        %841 = vmatprep.mubr.bf16.mxu0 0
        %842 = vmatmul.mubr.bf16.gmra.mrb[0].mxu0 %v666
        %v843 = vpop.f32.mrb[0].mxu0
        %v844 = vadd.f32 0.0, %v843
        %v845 = vpop.f32.mrb[0].mxu0
        %v846 = vpop.f32.mrb[0].mxu0
        %v847 = vadd.f32 0.0, %v846
        %v848 = vpop.f32.mrb[0].mxu0
        %849 = vmatprep.mubr.bf16.mxu0 0
        %850 = vmatmul.mubr.bf16.gmra.mrb[0].mxu0 %v667
        %v851 = vpop.f32.mrb[0].mxu0
        %v852 = vadd.f32 0.0, %v851
        %v853 = vpop.f32.mrb[0].mxu0
        %v854 = vpop.f32.mrb[0].mxu0
        %v855 = vadd.f32 0.0, %v854
        %v856 = vpop.f32.mrb[0].mxu0
        %857 = vmatprep.mubr.bf16.mxu0 0
        %858 = vmatmul.mubr.bf16.gmra.mrb[0].mxu0 %v668
        %v859 = vpop.f32.mrb[0].mxu0
        %v860 = vadd.f32 0.0, %v859
        %v861 = vpop.f32.mrb[0].mxu0
        %v862 = vpop.f32.mrb[0].mxu0
        %v863 = vadd.f32 0.0, %v862
        %v864 = vpop.f32.mrb[0].mxu0
        %865 = vmatprep.mubr.bf16.mxu0 0
        %866 = vmatmul.mubr.bf16.gmra.mrb[0].mxu0 %v669
        %v867 = vpop.f32.mrb[0].mxu0
        %v868 = vadd.f32 0.0, %v867
        %v869 = vpop.f32.mrb[0].mxu0
        %v870 = vpop.f32.mrb[0].mxu0
        %v871 = vadd.f32 0.0, %v870
        %v872 = vpop.f32.mrb[0].mxu0
        %873 = vmatprep.mubr.bf16.mxu0 0
        %874 = vmatmul.mubr.bf16.gmra.mrb[0].mxu0 %v670
        %v875 = vpop.f32.mrb[0].mxu0
        %v876 = vadd.f32 0.0, %v875
        %v877 = vpop.f32.mrb[0].mxu0
        %v878 = vpop.f32.mrb[0].mxu0
        %v879 = vadd.f32 0.0, %v878
        %v880 = vpop.f32.mrb[0].mxu0
        %881 = vmatprep.mubr.bf16.mxu0 0
        %882 = vmatmul.mubr.bf16.gmra.mrb[0].mxu0 %v671
        %v883 = vpop.f32.mrb[0].mxu0
        %v884 = vadd.f32 0.0, %v883
        %v885 = vpop.f32.mrb[0].mxu0
        %v886 = vpop.f32.mrb[0].mxu0
        %v887 = vadd.f32 0.0, %v886
        %v888 = vpop.f32.mrb[0].mxu0
        %889 = vmatprep.mubr.bf16.mxu0 0
        %890 = vmatmul.mubr.bf16.gmra.mrb[0].mxu0 %v672
        %v891 = vpop.f32.mrb[0].mxu0
        %v892 = vadd.f32 0.0, %v891
        %v893 = vpop.f32.mrb[0].mxu0
        %v894 = vpop.f32.mrb[0].mxu0
        %v895 = vadd.f32 0.0, %v894
        %v896 = vpop.f32.mrb[0].mxu0
        %897 = vmatprep.mubr.bf16.mxu0 0
        %898 = vmatmul.mubr.bf16.gmra.mrb[0].mxu0 %v673
        %v899 = vpop.f32.mrb[0].mxu0
        %v900 = vadd.f32 0.0, %v899
        %v901 = vpop.f32.mrb[0].mxu0
        %v902 = vpop.f32.mrb[0].mxu0
        %v903 = vadd.f32 0.0, %v902
        %v904 = vpop.f32.mrb[0].mxu0
        %905 = vmatprep.mubr.bf16.mxu0 0
        %906 = vmatmul.mubr.bf16.gmra.mrb[0].mxu0 %v674
        %v907 = vpop.f32.mrb[0].mxu0
        %v908 = vadd.f32 0.0, %v907
        %v909 = vpop.f32.mrb[0].mxu0
        %v910 = vpop.f32.mrb[0].mxu0
        %v911 = vadd.f32 0.0, %v910
        %v912 = vpop.f32.mrb[0].mxu0
        %913 = vmatprep.mubr.bf16.mxu0 0
        %914 = vmatmul.mubr.bf16.gmra.mrb[0].mxu0 %v675
        %v915 = vpop.f32.mrb[0].mxu0
        %v916 = vadd.f32 0.0, %v915
        %v917 = vpop.f32.mrb[0].mxu0
        %v918 = vpop.f32.mrb[0].mxu0
        %v919 = vadd.f32 0.0, %v918
        %v920 = vpop.f32.mrb[0].mxu0
        %921 = vmatprep.mubr.bf16.mxu0 0
        %922 = vmatmul.mubr.bf16.gmra.mrb[0].mxu0 %v676
        %v923 = vpop.f32.mrb[0].mxu0
        %v924 = vadd.f32 0.0, %v923
        %v925 = vpop.f32.mrb[0].mxu0
        %v926 = vpop.f32.mrb[0].mxu0
        %v927 = vadd.f32 0.0, %v926
        %v928 = vpop.f32.mrb[0].mxu0
        %929 = vmatprep.mubr.bf16.mxu0 0
        %930 = vmatmul.mubr.bf16.gmra.mrb[0].mxu0 %v677
        %v931 = vpop.f32.mrb[0].mxu0
        %v932 = vadd.f32 0.0, %v931
        %v933 = vpop.f32.mrb[0].mxu0
        %v934 = vpop.f32.mrb[0].mxu0
        %v935 = vadd.f32 0.0, %v934
        %v936 = vpop.f32.mrb[0].mxu0
        %937 = vmatprep.mubr.bf16.mxu0 0
        %938 = vmatmul.mubr.bf16.gmra.mrb[0].mxu0 %v678
        %v939 = vpop.f32.mrb[0].mxu0
        %v940 = vadd.f32 0.0, %v939
        %v941 = vpop.f32.mrb[0].mxu0
        %v942 = vpop.f32.mrb[0].mxu0
        %v943 = vadd.f32 0.0, %v942
        %v944 = vpop.f32.mrb[0].mxu0
        %945 = vmatprep.mubr.bf16.mxu0 0
        %946 = vmatmul.mubr.bf16.gmra.mrb[0].mxu0 %v679
        %v947 = vpop.f32.mrb[0].mxu0
        %v948 = vadd.f32 0.0, %v947
        %v949 = vpop.f32.mrb[0].mxu0
        %v950 = vpop.f32.mrb[0].mxu0
        %v951 = vadd.f32 0.0, %v950
        %v952 = vpop.f32.mrb[0].mxu0
        %953 = vmatprep.mubr.bf16.mxu0 0
        %954 = vmatmul.mubr.bf16.gmra.mrb[0].mxu0 %v680
        %v955 = vpop.f32.mrb[0].mxu0
        %v956 = vadd.f32 0.0, %v955
        %v957 = vpop.f32.mrb[0].mxu0
        %v958 = vpop.f32.mrb[0].mxu0
        %v959 = vadd.f32 0.0, %v958
        %v960 = vpop.f32.mrb[0].mxu0
        %961 = vmatprep.mubr.bf16.mxu0 0
        %962 = vmatmul.mubr.bf16.gmra.mrb[0].mxu0 %v681
        %v963 = vpop.f32.mrb[0].mxu0
        %v964 = vadd.f32 0.0, %v963
        %v965 = vpop.f32.mrb[0].mxu0
        %v966 = vpop.f32.mrb[0].mxu0
        %v967 = vadd.f32 0.0, %v966
        %v968 = vpop.f32.mrb[0].mxu0
        %969 = vmatprep.mubr.bf16.mxu0 0
        %970 = vmatmul.mubr.bf16.gmra.mrb[0].mxu0 %v682
        %v971 = vpop.f32.mrb[0].mxu0
        %v972 = vadd.f32 0.0, %v971
        %v973 = vpop.f32.mrb[0].mxu0
        %v974 = vpop.f32.mrb[0].mxu0
        %v975 = vadd.f32 0.0, %v974
        %v976 = vpop.f32.mrb[0].mxu0
        %977 = vmatprep.mubr.bf16.mxu0 0
        %978 = vmatmul.mubr.bf16.gmra.mrb[0].mxu0 %v683
        %v979 = vpop.f32.mrb[0].mxu0
        %v980 = vadd.f32 0.0, %v979
        %v981 = vpop.f32.mrb[0].mxu0
        %v982 = vpop.f32.mrb[0].mxu0
        %v983 = vadd.f32 0.0, %v982
        %v984 = vpop.f32.mrb[0].mxu0
        %985 = vmatprep.mubr.bf16.mxu0 0
        %986 = vmatmul.mubr.bf16.gmra.mrb[0].mxu0 %v684
        %v987 = vpop.f32.mrb[0].mxu0
        %v988 = vadd.f32 0.0, %v987
        %v989 = vpop.f32.mrb[0].mxu0
        %v990 = vpop.f32.mrb[0].mxu0
        %v991 = vadd.f32 0.0, %v990
        %v992 = vpop.f32.mrb[0].mxu0
        %993 = vmatprep.mubr.bf16.mxu0 0
        %994 = vmatmul.mubr.bf16.gmra.mrb[0].mxu0 %v685
        %v995 = vpop.f32.mrb[0].mxu0
        %v996 = vadd.f32 0.0, %v995
        %v997 = vpop.f32.mrb[0].mxu0
        %v998 = vpop.f32.mrb[0].mxu0
        %v999 = vadd.f32 0.0, %v998
        %v1000 = vpop.f32.mrb[0].mxu0
        %1001 = vmatprep.mubr.bf16.mxu0 0
        %1002 = vmatmul.mubr.bf16.gmra.mrb[0].mxu0 %v686
        %v1003 = vpop.f32.mrb[0].mxu0
        %v1004 = vadd.f32 0.0, %v1003
        %v1005 = vpop.f32.mrb[0].mxu0
        %v1006 = vpop.f32.mrb[0].mxu0
        %v1007 = vadd.f32 0.0, %v1006
        %v1008 = vpop.f32.mrb[0].mxu0
        %1009 = vmatprep.mubr.bf16.mxu0 0
        %1010 = vmatmul.mubr.bf16.gmra.mrb[0].mxu0 %v687
        %v1011 = vpop.f32.mrb[0].mxu0
        %v1012 = vadd.f32 0.0, %v1011
        %v1013 = vpop.f32.mrb[0].mxu0
        %v1014 = vpop.f32.mrb[0].mxu0
        %v1015 = vadd.f32 0.0, %v1014
        %v1016 = vpop.f32.mrb[0].mxu0
        %1017 = vmatprep.mubr.bf16.mxu0 0
        %1018 = vmatmul.mubr.bf16.gmra.mrb[0].mxu0 %v688
        %v1019 = vpop.f32.mrb[0].mxu0
        %v1020 = vadd.f32 0.0, %v1019
        %v1021 = vpop.f32.mrb[0].mxu0
        %v1022 = vpop.f32.mrb[0].mxu0
        %v1023 = vadd.f32 0.0, %v1022
        %v1024 = vpop.f32.mrb[0].mxu0
        %1025 = vdwg.mxu0
        %v1026 = vpack.c.bf16 %v775, %v772
        %v1027 = vpack.c.bf16 %v783, %v780
        %v1028 = vpack.c.bf16 %v791, %v788
        %v1029 = vpack.c.bf16 %v799, %v796
        %v1030 = vpack.c.bf16 %v807, %v804
        %v1031 = vpack.c.bf16 %v815, %v812
        %v1032 = vpack.c.bf16 %v823, %v820
        %v1033 = vpack.c.bf16 %v831, %v828
        %v1034 = vld [vmem:[%s284] sm:$0xf]
        %v1035 = vld [vmem:[%s284 + $0x4] sm:$0xf]
        %v1036 = vld [vmem:[%s284 + $0x8] sm:$0xf]
        %v1037 = vld [vmem:[%s284 + $0xc] sm:$0xf]
        %v1038 = vld [vmem:[%s284 + $0x10] sm:$0xf]
        %v1039 = vld [vmem:[%s284 + $0x14] sm:$0xf]
        %v1040 = vld [vmem:[%s284 + $0x18] sm:$0xf]
        %v1041 = vld [vmem:[%s284 + $0x1c] sm:$0xf]
        %v1042 = vld [vmem:[%s284 + $0x20] sm:$0xf]
        %v1043 = vld [vmem:[%s284 + $0x24] sm:$0xf]
        %v1044 = vld [vmem:[%s284 + $0x28] sm:$0xf]
        %v1045 = vld [vmem:[%s284 + $0x2c] sm:$0xf]
        %v1046 = vld [vmem:[%s284 + $0x30] sm:$0xf]
        %v1047 = vld [vmem:[%s284 + $0x34] sm:$0xf]
        %v1048 = vld [vmem:[%s284 + $0x38] sm:$0xf]
        %v1049 = vld [vmem:[%s284 + $0x3c] sm:$0xf]
        %v1050 = vlaneseq
        %v1051 = vshrl.u32 %v1050, 7
        %v1052 = vsub.s32 0, %v1051
        %v1053 = vrot.slane %v656, %v1052
        %v1070 = vunpack.c.l.b16 %v1034
        %v1071 = vunpack.c.l.b16 %v1035
        %v1072 = vunpack.c.l.b16 %v1036
        %v1073 = vunpack.c.l.b16 %v1037
        %v1074 = vunpack.c.l.b16 %v1038
        %v1075 = vunpack.c.l.b16 %v1039
        %v1076 = vunpack.c.l.b16 %v1040
        %v1077 = vunpack.c.l.b16 %v1041
        %v1078 = vunpack.c.l.b16 %v1042
        %v1079 = vunpack.c.l.b16 %v1043
        %v1080 = vunpack.c.l.b16 %v1044
        %v1081 = vunpack.c.l.b16 %v1045
        %v1082 = vunpack.c.l.b16 %v1046
        %v1083 = vunpack.c.l.b16 %v1047
        %v1084 = vunpack.c.l.b16 %v1048
        %v1085 = vunpack.c.l.b16 %v1049
        %v1086 = vpack.c.b16 %v1071, %v1070
        %v1087 = vpack.c.b16 %v1073, %v1072
        %v1088 = vpack.c.b16 %v1075, %v1074
        %v1089 = vpack.c.b16 %v1077, %v1076
        %v1090 = vpack.c.b16 %v1079, %v1078
        %v1091 = vpack.c.b16 %v1081, %v1080
        %v1092 = vpack.c.b16 %v1083, %v1082
        %v1093 = vpack.c.b16 %v1085, %v1084
        %1102 = vmatprep.subr.bf16.mxu0 0
        %1103 = vmatpush1.bf16.msra.mxu0 %v1026
        %1104 = vmatprep.subr.bf16.mxu0 0
        %1105 = vmatpush1.bf16.msra.mxu0 %v1027
        %1106 = vmatprep.subr.bf16.mxu0 0
        %1107 = vmatpush1.bf16.msra.mxu0 %v1028
        %1108 = vmatprep.subr.bf16.mxu0 0
        %1109 = vmatpush1.bf16.msra.mxu0 %v1029
        %1110 = vmatprep.subr.bf16.mxu0 0
        %1111 = vmatpush1.bf16.msra.mxu0 %v1030
        %1112 = vmatprep.subr.bf16.mxu0 0
        %1113 = vmatpush1.bf16.msra.mxu0 %v1031
        %1114 = vmatprep.subr.bf16.mxu0 0
        %1115 = vmatpush1.bf16.msra.mxu0 %v1032
        %1116 = vmatprep.subr.bf16.mxu0 0
        %1117 = vmatpush1.bf16.msra.mxu0 %v1033
        %1118 = vmatprep.subr.bf16.mxu0 0
        %1119 = vmatpush1.bf16.msra.mxu0 0
        %1120 = vmatprep.subr.bf16.mxu0 0
        %1121 = vmatpush1.bf16.msra.mxu0 0
        %1122 = vmatprep.subr.bf16.mxu0 0
        %1123 = vmatpush1.bf16.msra.mxu0 0
        %1124 = vmatprep.subr.bf16.mxu0 0
        %1125 = vmatpush1.bf16.msra.mxu0 0
        %1126 = vmatprep.subr.bf16.mxu0 0
        %1127 = vmatpush1.bf16.msra.mxu0 0
        %1128 = vmatprep.subr.bf16.mxu0 0
        %1129 = vmatpush1.bf16.msra.mxu0 0
        %1130 = vmatprep.subr.bf16.mxu0 0
        %1131 = vmatpush1.bf16.msra.mxu0 0
        %1132 = vmatprep.subr.bf16.mxu0 0
        %1133 = vmatpush1.bf16.msra.mxu0 0
        %1134 = vmatprep.mubr.bf16.mxu0 0
        %1135 = vmatmul.mubr.bf16.gmra.mrb[0].mxu0 %v1086
        %v1136 = vpop.f32.mrb[0].mxu0
        %v1137 = vadd.f32 %v1053, %v1136
        %v1138 = vpop.f32.mrb[0].mxu0
        %v1139 = vpop.f32.mrb[0].mxu0
        %v1140 = vadd.f32 %v1053, %v1139
        %v1141 = vpop.f32.mrb[0].mxu0
        %1142 = vmatprep.mubr.bf16.mxu0 0
        %1143 = vmatmul.mubr.bf16.gmra.mrb[0].mxu0 %v1087
        %v1144 = vpop.f32.mrb[0].mxu0
        %v1145 = vadd.f32 %v1053, %v1144
        %v1146 = vpop.f32.mrb[0].mxu0
        %v1147 = vpop.f32.mrb[0].mxu0
        %v1148 = vadd.f32 %v1053, %v1147
        %v1149 = vpop.f32.mrb[0].mxu0
        %1150 = vmatprep.mubr.bf16.mxu0 0
        %1151 = vmatmul.mubr.bf16.gmra.mrb[0].mxu0 %v1088
        %v1152 = vpop.f32.mrb[0].mxu0
        %v1153 = vadd.f32 %v1053, %v1152
        %v1154 = vpop.f32.mrb[0].mxu0
        %v1155 = vpop.f32.mrb[0].mxu0
        %v1156 = vadd.f32 %v1053, %v1155
        %v1157 = vpop.f32.mrb[0].mxu0
        %1158 = vmatprep.mubr.bf16.mxu0 0
        %1159 = vmatmul.mubr.bf16.gmra.mrb[0].mxu0 %v1089
        %v1160 = vpop.f32.mrb[0].mxu0
        %v1161 = vadd.f32 %v1053, %v1160
        %v1162 = vpop.f32.mrb[0].mxu0
        %v1163 = vpop.f32.mrb[0].mxu0
        %v1164 = vadd.f32 %v1053, %v1163
        %v1165 = vpop.f32.mrb[0].mxu0
        %1166 = vmatprep.mubr.bf16.mxu0 0
        %1167 = vmatmul.mubr.bf16.gmra.mrb[0].mxu0 %v1090
        %v1168 = vpop.f32.mrb[0].mxu0
        %v1169 = vadd.f32 %v1053, %v1168
        %v1170 = vpop.f32.mrb[0].mxu0
        %v1171 = vpop.f32.mrb[0].mxu0
        %v1172 = vadd.f32 %v1053, %v1171
        %v1173 = vpop.f32.mrb[0].mxu0
        %1174 = vmatprep.mubr.bf16.mxu0 0
        %1175 = vmatmul.mubr.bf16.gmra.mrb[0].mxu0 %v1091
        %v1176 = vpop.f32.mrb[0].mxu0
        %v1177 = vadd.f32 %v1053, %v1176
        %v1178 = vpop.f32.mrb[0].mxu0
        %v1179 = vpop.f32.mrb[0].mxu0
        %v1180 = vadd.f32 %v1053, %v1179
        %v1181 = vpop.f32.mrb[0].mxu0
        %1182 = vmatprep.mubr.bf16.mxu0 0
        %1183 = vmatmul.mubr.bf16.gmra.mrb[0].mxu0 %v1092
        %v1184 = vpop.f32.mrb[0].mxu0
        %v1185 = vadd.f32 %v1053, %v1184
        %v1186 = vpop.f32.mrb[0].mxu0
        %v1187 = vpop.f32.mrb[0].mxu0
        %v1188 = vadd.f32 %v1053, %v1187
        %v1189 = vpop.f32.mrb[0].mxu0
        %1190 = vmatprep.mubr.bf16.mxu0 0
        %1191 = vmatmul.mubr.bf16.gmra.mrb[0].mxu0 %v1093
        %v1192 = vpop.f32.mrb[0].mxu0
        %v1193 = vadd.f32 %v1053, %v1192
        %v1194 = vpop.f32.mrb[0].mxu0
        %v1195 = vpop.f32.mrb[0].mxu0
        %v1196 = vadd.f32 %v1053, %v1195
        %v1197 = vpop.f32.mrb[0].mxu0
        %1198 = vdwg.mxu0
        %v1199 = vmax.f32 %v1137, 0.0
        %v1200 = vmax.f32 %v1140, 0.0
        %v1201 = vmax.f32 %v1145, 0.0
        %v1202 = vmax.f32 %v1148, 0.0
        %v1203 = vmax.f32 %v1153, 0.0
        %v1204 = vmax.f32 %v1156, 0.0
        %v1205 = vmax.f32 %v1161, 0.0
        %v1206 = vmax.f32 %v1164, 0.0
        %v1207 = vmax.f32 %v1169, 0.0
        %v1208 = vmax.f32 %v1172, 0.0
        %v1209 = vmax.f32 %v1177, 0.0
        %v1210 = vmax.f32 %v1180, 0.0
        %v1211 = vmax.f32 %v1185, 0.0
        %v1212 = vmax.f32 %v1188, 0.0
        %v1213 = vmax.f32 %v1193, 0.0
        %v1214 = vmax.f32 %v1196, 0.0
        %v1215 = vpack.c.bf16 %v1200, %v1199
        %v1216 = vpack.c.bf16 %v1202, %v1201
        %v1217 = vpack.c.bf16 %v1204, %v1203
        %v1218 = vpack.c.bf16 %v1206, %v1205
        %v1219 = vpack.c.bf16 %v1208, %v1207
        %v1220 = vpack.c.bf16 %v1210, %v1209
        %v1221 = vpack.c.bf16 %v1212, %v1211
        %v1222 = vpack.c.bf16 %v1214, %v1213
        %1223 = vst [vmem:[#allocation2] sm:$0xff] %v1215
        %1224 = vst [vmem:[#allocation2 + $0x8] sm:$0xff] %v1216
        %1225 = vst [vmem:[#allocation2 + $0x10] sm:$0xff] %v1217
        %1226 = vst [vmem:[#allocation2 + $0x18] sm:$0xff] %v1218
        %1227 = vst [vmem:[#allocation2 + $0x20] sm:$0xff] %v1219
        %1228 = vst [vmem:[#allocation2 + $0x28] sm:$0xff] %v1220
        %1229 = vst [vmem:[#allocation2 + $0x30] sm:$0xff] %v1221
        %1230 = vst [vmem:[#allocation2 + $0x38] sm:$0xff] %v1222
        %v1231 = vpack.c.bf16 %v839, %v836
        %v1232 = vpack.c.bf16 %v847, %v844
        %v1233 = vpack.c.bf16 %v855, %v852
        %v1234 = vpack.c.bf16 %v863, %v860
        %v1235 = vpack.c.bf16 %v871, %v868
        %v1236 = vpack.c.bf16 %v879, %v876
        %v1237 = vpack.c.bf16 %v887, %v884
        %v1238 = vpack.c.bf16 %v895, %v892
        %v1239 = vld [vmem:[%s284 + $0x40] sm:$0xf]
        %v1240 = vld [vmem:[%s284 + $0x44] sm:$0xf]
        %v1241 = vld [vmem:[%s284 + $0x48] sm:$0xf]
        %v1242 = vld [vmem:[%s284 + $0x4c] sm:$0xf]
        %v1243 = vld [vmem:[%s284 + $0x50] sm:$0xf]
        %v1244 = vld [vmem:[%s284 + $0x54] sm:$0xf]
        %v1245 = vld [vmem:[%s284 + $0x58] sm:$0xf]
        %v1246 = vld [vmem:[%s284 + $0x5c] sm:$0xf]
        %v1247 = vld [vmem:[%s284 + $0x60] sm:$0xf]
        %v1248 = vld [vmem:[%s284 + $0x64] sm:$0xf]
        %v1249 = vld [vmem:[%s284 + $0x68] sm:$0xf]
        %v1250 = vld [vmem:[%s284 + $0x6c] sm:$0xf]
        %v1251 = vld [vmem:[%s284 + $0x70] sm:$0xf]
        %v1252 = vld [vmem:[%s284 + $0x74] sm:$0xf]
        %v1253 = vld [vmem:[%s284 + $0x78] sm:$0xf]
        %v1254 = vld [vmem:[%s284 + $0x7c] sm:$0xf]
        %v1271 = vunpack.c.l.b16 %v1239
        %v1272 = vunpack.c.l.b16 %v1240
        %v1273 = vunpack.c.l.b16 %v1241
        %v1274 = vunpack.c.l.b16 %v1242
        %v1275 = vunpack.c.l.b16 %v1243
        %v1276 = vunpack.c.l.b16 %v1244
        %v1277 = vunpack.c.l.b16 %v1245
        %v1278 = vunpack.c.l.b16 %v1246
        %v1279 = vunpack.c.l.b16 %v1247
        %v1280 = vunpack.c.l.b16 %v1248
        %v1281 = vunpack.c.l.b16 %v1249
        %v1282 = vunpack.c.l.b16 %v1250
        %v1283 = vunpack.c.l.b16 %v1251
        %v1284 = vunpack.c.l.b16 %v1252
        %v1285 = vunpack.c.l.b16 %v1253
        %v1286 = vunpack.c.l.b16 %v1254
        %v1287 = vpack.c.b16 %v1272, %v1271
        %v1288 = vpack.c.b16 %v1274, %v1273
        %v1289 = vpack.c.b16 %v1276, %v1275
        %v1290 = vpack.c.b16 %v1278, %v1277
        %v1291 = vpack.c.b16 %v1280, %v1279
        %v1292 = vpack.c.b16 %v1282, %v1281
        %v1293 = vpack.c.b16 %v1284, %v1283
        %v1294 = vpack.c.b16 %v1286, %v1285
        %1303 = vmatprep.subr.bf16.mxu0 0
        %1304 = vmatpush1.bf16.msra.mxu0 %v1231
        %1305 = vmatprep.subr.bf16.mxu0 0
        %1306 = vmatpush1.bf16.msra.mxu0 %v1232
        %1307 = vmatprep.subr.bf16.mxu0 0
        %1308 = vmatpush1.bf16.msra.mxu0 %v1233
        %1309 = vmatprep.subr.bf16.mxu0 0
        %1310 = vmatpush1.bf16.msra.mxu0 %v1234
        %1311 = vmatprep.subr.bf16.mxu0 0
        %1312 = vmatpush1.bf16.msra.mxu0 %v1235
        %1313 = vmatprep.subr.bf16.mxu0 0
        %1314 = vmatpush1.bf16.msra.mxu0 %v1236
        %1315 = vmatprep.subr.bf16.mxu0 0
        %1316 = vmatpush1.bf16.msra.mxu0 %v1237
        %1317 = vmatprep.subr.bf16.mxu0 0
        %1318 = vmatpush1.bf16.msra.mxu0 %v1238
        %1319 = vmatprep.subr.bf16.mxu0 0
        %1320 = vmatpush1.bf16.msra.mxu0 0
        %1321 = vmatprep.subr.bf16.mxu0 0
        %1322 = vmatpush1.bf16.msra.mxu0 0
        %1323 = vmatprep.subr.bf16.mxu0 0
        %1324 = vmatpush1.bf16.msra.mxu0 0
        %1325 = vmatprep.subr.bf16.mxu0 0
        %1326 = vmatpush1.bf16.msra.mxu0 0
        %1327 = vmatprep.subr.bf16.mxu0 0
        %1328 = vmatpush1.bf16.msra.mxu0 0
        %1329 = vmatprep.subr.bf16.mxu0 0
        %1330 = vmatpush1.bf16.msra.mxu0 0
        %1331 = vmatprep.subr.bf16.mxu0 0
        %1332 = vmatpush1.bf16.msra.mxu0 0
        %1333 = vmatprep.subr.bf16.mxu0 0
        %1334 = vmatpush1.bf16.msra.mxu0 0
        %1335 = vmatprep.mubr.bf16.mxu0 0
        %1336 = vmatmul.mubr.bf16.gmra.mrb[0].mxu0 %v1287
        %v1337 = vpop.f32.mrb[0].mxu0
        %v1338 = vadd.f32 %v1053, %v1337
        %v1339 = vpop.f32.mrb[0].mxu0
        %v1340 = vpop.f32.mrb[0].mxu0
        %v1341 = vadd.f32 %v1053, %v1340
        %v1342 = vpop.f32.mrb[0].mxu0
        %1343 = vmatprep.mubr.bf16.mxu0 0
        %1344 = vmatmul.mubr.bf16.gmra.mrb[0].mxu0 %v1288
        %v1345 = vpop.f32.mrb[0].mxu0
        %v1346 = vadd.f32 %v1053, %v1345
        %v1347 = vpop.f32.mrb[0].mxu0
        %v1348 = vpop.f32.mrb[0].mxu0
        %v1349 = vadd.f32 %v1053, %v1348
        %v1350 = vpop.f32.mrb[0].mxu0
        %1351 = vmatprep.mubr.bf16.mxu0 0
        %1352 = vmatmul.mubr.bf16.gmra.mrb[0].mxu0 %v1289
        %v1353 = vpop.f32.mrb[0].mxu0
        %v1354 = vadd.f32 %v1053, %v1353
        %v1355 = vpop.f32.mrb[0].mxu0
        %v1356 = vpop.f32.mrb[0].mxu0
        %v1357 = vadd.f32 %v1053, %v1356
        %v1358 = vpop.f32.mrb[0].mxu0
        %1359 = vmatprep.mubr.bf16.mxu0 0
        %1360 = vmatmul.mubr.bf16.gmra.mrb[0].mxu0 %v1290
        %v1361 = vpop.f32.mrb[0].mxu0
        %v1362 = vadd.f32 %v1053, %v1361
        %v1363 = vpop.f32.mrb[0].mxu0
        %v1364 = vpop.f32.mrb[0].mxu0
        %v1365 = vadd.f32 %v1053, %v1364
        %v1366 = vpop.f32.mrb[0].mxu0
        %1367 = vmatprep.mubr.bf16.mxu0 0
        %1368 = vmatmul.mubr.bf16.gmra.mrb[0].mxu0 %v1291
        %v1369 = vpop.f32.mrb[0].mxu0
        %v1370 = vadd.f32 %v1053, %v1369
        %v1371 = vpop.f32.mrb[0].mxu0
        %v1372 = vpop.f32.mrb[0].mxu0
        %v1373 = vadd.f32 %v1053, %v1372
        %v1374 = vpop.f32.mrb[0].mxu0
        %1375 = vmatprep.mubr.bf16.mxu0 0
        %1376 = vmatmul.mubr.bf16.gmra.mrb[0].mxu0 %v1292
        %v1377 = vpop.f32.mrb[0].mxu0
        %v1378 = vadd.f32 %v1053, %v1377
        %v1379 = vpop.f32.mrb[0].mxu0
        %v1380 = vpop.f32.mrb[0].mxu0
        %v1381 = vadd.f32 %v1053, %v1380
        %v1382 = vpop.f32.mrb[0].mxu0
        %1383 = vmatprep.mubr.bf16.mxu0 0
        %1384 = vmatmul.mubr.bf16.gmra.mrb[0].mxu0 %v1293
        %v1385 = vpop.f32.mrb[0].mxu0
        %v1386 = vadd.f32 %v1053, %v1385
        %v1387 = vpop.f32.mrb[0].mxu0
        %v1388 = vpop.f32.mrb[0].mxu0
        %v1389 = vadd.f32 %v1053, %v1388
        %v1390 = vpop.f32.mrb[0].mxu0
        %1391 = vmatprep.mubr.bf16.mxu0 0
        %1392 = vmatmul.mubr.bf16.gmra.mrb[0].mxu0 %v1294
        %v1393 = vpop.f32.mrb[0].mxu0
        %v1394 = vadd.f32 %v1053, %v1393
        %v1395 = vpop.f32.mrb[0].mxu0
        %v1396 = vpop.f32.mrb[0].mxu0
        %v1397 = vadd.f32 %v1053, %v1396
        %v1398 = vpop.f32.mrb[0].mxu0
        %1399 = vdwg.mxu0
        %v1400 = vmax.f32 %v1338, 0.0
        %v1401 = vmax.f32 %v1341, 0.0
        %v1402 = vmax.f32 %v1346, 0.0
        %v1403 = vmax.f32 %v1349, 0.0
        %v1404 = vmax.f32 %v1354, 0.0
        %v1405 = vmax.f32 %v1357, 0.0
        %v1406 = vmax.f32 %v1362, 0.0
        %v1407 = vmax.f32 %v1365, 0.0
        %v1408 = vmax.f32 %v1370, 0.0
        %v1409 = vmax.f32 %v1373, 0.0
        %v1410 = vmax.f32 %v1378, 0.0
        %v1411 = vmax.f32 %v1381, 0.0
        %v1412 = vmax.f32 %v1386, 0.0
        %v1413 = vmax.f32 %v1389, 0.0
        %v1414 = vmax.f32 %v1394, 0.0
        %v1415 = vmax.f32 %v1397, 0.0
        %v1416 = vpack.c.bf16 %v1401, %v1400
        %v1417 = vpack.c.bf16 %v1403, %v1402
        %v1418 = vpack.c.bf16 %v1405, %v1404
        %v1419 = vpack.c.bf16 %v1407, %v1406
        %v1420 = vpack.c.bf16 %v1409, %v1408
        %v1421 = vpack.c.bf16 %v1411, %v1410
        %v1422 = vpack.c.bf16 %v1413, %v1412
        %v1423 = vpack.c.bf16 %v1415, %v1414
        %1424 = vst [vmem:[#allocation2 + $0x40] sm:$0xff] %v1416
        %1425 = vst [vmem:[#allocation2 + $0x48] sm:$0xff] %v1417
        %1426 = vst [vmem:[#allocation2 + $0x50] sm:$0xff] %v1418
        %1427 = vst [vmem:[#allocation2 + $0x58] sm:$0xff] %v1419
        %1428 = vst [vmem:[#allocation2 + $0x60] sm:$0xff] %v1420
        %1429 = vst [vmem:[#allocation2 + $0x68] sm:$0xff] %v1421
        %1430 = vst [vmem:[#allocation2 + $0x70] sm:$0xff] %v1422
        %1431 = vst [vmem:[#allocation2 + $0x78] sm:$0xff] %v1423
        %v1432 = vpack.c.bf16 %v903, %v900
        %v1433 = vpack.c.bf16 %v911, %v908
        %v1434 = vpack.c.bf16 %v919, %v916
        %v1435 = vpack.c.bf16 %v927, %v924
        %v1436 = vpack.c.bf16 %v935, %v932
        %v1437 = vpack.c.bf16 %v943, %v940
        %v1438 = vpack.c.bf16 %v951, %v948
        %v1439 = vpack.c.bf16 %v959, %v956
        %v1440 = vld [vmem:[%s284 + $0x80] sm:$0xf]
        %v1441 = vld [vmem:[%s284 + $0x84] sm:$0xf]
        %v1442 = vld [vmem:[%s284 + $0x88] sm:$0xf]
        %v1443 = vld [vmem:[%s284 + $0x8c] sm:$0xf]
        %v1444 = vld [vmem:[%s284 + $0x90] sm:$0xf]
        %v1445 = vld [vmem:[%s284 + $0x94] sm:$0xf]
        %v1446 = vld [vmem:[%s284 + $0x98] sm:$0xf]
        %v1447 = vld [vmem:[%s284 + $0x9c] sm:$0xf]
        %v1448 = vld [vmem:[%s284 + $0xa0] sm:$0xf]
        %v1449 = vld [vmem:[%s284 + $0xa4] sm:$0xf]
        %v1450 = vld [vmem:[%s284 + $0xa8] sm:$0xf]
        %v1451 = vld [vmem:[%s284 + $0xac] sm:$0xf]
        %v1452 = vld [vmem:[%s284 + $0xb0] sm:$0xf]
        %v1453 = vld [vmem:[%s284 + $0xb4] sm:$0xf]
        %v1454 = vld [vmem:[%s284 + $0xb8] sm:$0xf]
        %v1455 = vld [vmem:[%s284 + $0xbc] sm:$0xf]
        %v1472 = vunpack.c.l.b16 %v1440
        %v1473 = vunpack.c.l.b16 %v1441
        %v1474 = vunpack.c.l.b16 %v1442
        %v1475 = vunpack.c.l.b16 %v1443
        %v1476 = vunpack.c.l.b16 %v1444
        %v1477 = vunpack.c.l.b16 %v1445
        %v1478 = vunpack.c.l.b16 %v1446
        %v1479 = vunpack.c.l.b16 %v1447
        %v1480 = vunpack.c.l.b16 %v1448
        %v1481 = vunpack.c.l.b16 %v1449
        %v1482 = vunpack.c.l.b16 %v1450
        %v1483 = vunpack.c.l.b16 %v1451
        %v1484 = vunpack.c.l.b16 %v1452
        %v1485 = vunpack.c.l.b16 %v1453
        %v1486 = vunpack.c.l.b16 %v1454
        %v1487 = vunpack.c.l.b16 %v1455
        %v1488 = vpack.c.b16 %v1473, %v1472
        %v1489 = vpack.c.b16 %v1475, %v1474
        %v1490 = vpack.c.b16 %v1477, %v1476
        %v1491 = vpack.c.b16 %v1479, %v1478
        %v1492 = vpack.c.b16 %v1481, %v1480
        %v1493 = vpack.c.b16 %v1483, %v1482
        %v1494 = vpack.c.b16 %v1485, %v1484
        %v1495 = vpack.c.b16 %v1487, %v1486
        %1504 = vmatprep.subr.bf16.mxu0 0
        %1505 = vmatpush1.bf16.msra.mxu0 %v1432
        %1506 = vmatprep.subr.bf16.mxu0 0
        %1507 = vmatpush1.bf16.msra.mxu0 %v1433
        %1508 = vmatprep.subr.bf16.mxu0 0
        %1509 = vmatpush1.bf16.msra.mxu0 %v1434
        %1510 = vmatprep.subr.bf16.mxu0 0
        %1511 = vmatpush1.bf16.msra.mxu0 %v1435
        %1512 = vmatprep.subr.bf16.mxu0 0
        %1513 = vmatpush1.bf16.msra.mxu0 %v1436
        %1514 = vmatprep.subr.bf16.mxu0 0
        %1515 = vmatpush1.bf16.msra.mxu0 %v1437
        %1516 = vmatprep.subr.bf16.mxu0 0
        %1517 = vmatpush1.bf16.msra.mxu0 %v1438
        %1518 = vmatprep.subr.bf16.mxu0 0
        %1519 = vmatpush1.bf16.msra.mxu0 %v1439
        %1520 = vmatprep.subr.bf16.mxu0 0
        %1521 = vmatpush1.bf16.msra.mxu0 0
        %1522 = vmatprep.subr.bf16.mxu0 0
        %1523 = vmatpush1.bf16.msra.mxu0 0
        %1524 = vmatprep.subr.bf16.mxu0 0
        %1525 = vmatpush1.bf16.msra.mxu0 0
        %1526 = vmatprep.subr.bf16.mxu0 0
        %1527 = vmatpush1.bf16.msra.mxu0 0
        %1528 = vmatprep.subr.bf16.mxu0 0
        %1529 = vmatpush1.bf16.msra.mxu0 0
        %1530 = vmatprep.subr.bf16.mxu0 0
        %1531 = vmatpush1.bf16.msra.mxu0 0
        %1532 = vmatprep.subr.bf16.mxu0 0
        %1533 = vmatpush1.bf16.msra.mxu0 0
        %1534 = vmatprep.subr.bf16.mxu0 0
        %1535 = vmatpush1.bf16.msra.mxu0 0
        %1536 = vmatprep.mubr.bf16.mxu0 0
        %1537 = vmatmul.mubr.bf16.gmra.mrb[0].mxu0 %v1488
        %v1538 = vpop.f32.mrb[0].mxu0
        %v1539 = vadd.f32 %v1053, %v1538
        %v1540 = vpop.f32.mrb[0].mxu0
        %v1541 = vpop.f32.mrb[0].mxu0
        %v1542 = vadd.f32 %v1053, %v1541
        %v1543 = vpop.f32.mrb[0].mxu0
        %1544 = vmatprep.mubr.bf16.mxu0 0
        %1545 = vmatmul.mubr.bf16.gmra.mrb[0].mxu0 %v1489
        %v1546 = vpop.f32.mrb[0].mxu0
        %v1547 = vadd.f32 %v1053, %v1546
        %v1548 = vpop.f32.mrb[0].mxu0
        %v1549 = vpop.f32.mrb[0].mxu0
        %v1550 = vadd.f32 %v1053, %v1549
        %v1551 = vpop.f32.mrb[0].mxu0
        %1552 = vmatprep.mubr.bf16.mxu0 0
        %1553 = vmatmul.mubr.bf16.gmra.mrb[0].mxu0 %v1490
        %v1554 = vpop.f32.mrb[0].mxu0
        %v1555 = vadd.f32 %v1053, %v1554
        %v1556 = vpop.f32.mrb[0].mxu0
        %v1557 = vpop.f32.mrb[0].mxu0
        %v1558 = vadd.f32 %v1053, %v1557
        %v1559 = vpop.f32.mrb[0].mxu0
        %1560 = vmatprep.mubr.bf16.mxu0 0
        %1561 = vmatmul.mubr.bf16.gmra.mrb[0].mxu0 %v1491
        %v1562 = vpop.f32.mrb[0].mxu0
        %v1563 = vadd.f32 %v1053, %v1562
        %v1564 = vpop.f32.mrb[0].mxu0
        %v1565 = vpop.f32.mrb[0].mxu0
        %v1566 = vadd.f32 %v1053, %v1565
        %v1567 = vpop.f32.mrb[0].mxu0
        %1568 = vmatprep.mubr.bf16.mxu0 0
        %1569 = vmatmul.mubr.bf16.gmra.mrb[0].mxu0 %v1492
        %v1570 = vpop.f32.mrb[0].mxu0
        %v1571 = vadd.f32 %v1053, %v1570
        %v1572 = vpop.f32.mrb[0].mxu0
        %v1573 = vpop.f32.mrb[0].mxu0
        %v1574 = vadd.f32 %v1053, %v1573
        %v1575 = vpop.f32.mrb[0].mxu0
        %1576 = vmatprep.mubr.bf16.mxu0 0
        %1577 = vmatmul.mubr.bf16.gmra.mrb[0].mxu0 %v1493
        %v1578 = vpop.f32.mrb[0].mxu0
        %v1579 = vadd.f32 %v1053, %v1578
        %v1580 = vpop.f32.mrb[0].mxu0
        %v1581 = vpop.f32.mrb[0].mxu0
        %v1582 = vadd.f32 %v1053, %v1581
        %v1583 = vpop.f32.mrb[0].mxu0
        %1584 = vmatprep.mubr.bf16.mxu0 0
        %1585 = vmatmul.mubr.bf16.gmra.mrb[0].mxu0 %v1494
        %v1586 = vpop.f32.mrb[0].mxu0
        %v1587 = vadd.f32 %v1053, %v1586
        %v1588 = vpop.f32.mrb[0].mxu0
        %v1589 = vpop.f32.mrb[0].mxu0
        %v1590 = vadd.f32 %v1053, %v1589
        %v1591 = vpop.f32.mrb[0].mxu0
        %1592 = vmatprep.mubr.bf16.mxu0 0
        %1593 = vmatmul.mubr.bf16.gmra.mrb[0].mxu0 %v1495
        %v1594 = vpop.f32.mrb[0].mxu0
        %v1595 = vadd.f32 %v1053, %v1594
        %v1596 = vpop.f32.mrb[0].mxu0
        %v1597 = vpop.f32.mrb[0].mxu0
        %v1598 = vadd.f32 %v1053, %v1597
        %v1599 = vpop.f32.mrb[0].mxu0
        %1600 = vdwg.mxu0
        %v1601 = vmax.f32 %v1539, 0.0
        %v1602 = vmax.f32 %v1542, 0.0
        %v1603 = vmax.f32 %v1547, 0.0
        %v1604 = vmax.f32 %v1550, 0.0
        %v1605 = vmax.f32 %v1555, 0.0
        %v1606 = vmax.f32 %v1558, 0.0
        %v1607 = vmax.f32 %v1563, 0.0
        %v1608 = vmax.f32 %v1566, 0.0
        %v1609 = vmax.f32 %v1571, 0.0
        %v1610 = vmax.f32 %v1574, 0.0
        %v1611 = vmax.f32 %v1579, 0.0
        %v1612 = vmax.f32 %v1582, 0.0
        %v1613 = vmax.f32 %v1587, 0.0
        %v1614 = vmax.f32 %v1590, 0.0
        %v1615 = vmax.f32 %v1595, 0.0
        %v1616 = vmax.f32 %v1598, 0.0
        %v1617 = vpack.c.bf16 %v1602, %v1601
        %v1618 = vpack.c.bf16 %v1604, %v1603
        %v1619 = vpack.c.bf16 %v1606, %v1605
        %v1620 = vpack.c.bf16 %v1608, %v1607
        %v1621 = vpack.c.bf16 %v1610, %v1609
        %v1622 = vpack.c.bf16 %v1612, %v1611
        %v1623 = vpack.c.bf16 %v1614, %v1613
        %v1624 = vpack.c.bf16 %v1616, %v1615
        %1625 = vst [vmem:[#allocation2 + $0x80] sm:$0xff] %v1617
        %1626 = vst [vmem:[#allocation2 + $0x88] sm:$0xff] %v1618
        %1627 = vst [vmem:[#allocation2 + $0x90] sm:$0xff] %v1619
        %1628 = vst [vmem:[#allocation2 + $0x98] sm:$0xff] %v1620
        %1629 = vst [vmem:[#allocation2 + $0xa0] sm:$0xff] %v1621
        %1630 = vst [vmem:[#allocation2 + $0xa8] sm:$0xff] %v1622
        %1631 = vst [vmem:[#allocation2 + $0xb0] sm:$0xff] %v1623
        %1632 = vst [vmem:[#allocation2 + $0xb8] sm:$0xff] %v1624
        %v1633 = vpack.c.bf16 %v967, %v964
        %v1634 = vpack.c.bf16 %v975, %v972
        %v1635 = vpack.c.bf16 %v983, %v980
        %v1636 = vpack.c.bf16 %v991, %v988
        %v1637 = vpack.c.bf16 %v999, %v996
        %v1638 = vpack.c.bf16 %v1007, %v1004
        %v1639 = vpack.c.bf16 %v1015, %v1012
        %v1640 = vpack.c.bf16 %v1023, %v1020
        %v1641 = vld [vmem:[%s284 + $0xc0] sm:$0xf]
        %v1642 = vld [vmem:[%s284 + $0xc4] sm:$0xf]
        %v1643 = vld [vmem:[%s284 + $0xc8] sm:$0xf]
        %v1644 = vld [vmem:[%s284 + $0xcc] sm:$0xf]
        %v1645 = vld [vmem:[%s284 + $0xd0] sm:$0xf]
        %v1646 = vld [vmem:[%s284 + $0xd4] sm:$0xf]
        %v1647 = vld [vmem:[%s284 + $0xd8] sm:$0xf]
        %v1648 = vld [vmem:[%s284 + $0xdc] sm:$0xf]
        %v1649 = vld [vmem:[%s284 + $0xe0] sm:$0xf]
        %v1650 = vld [vmem:[%s284 + $0xe4] sm:$0xf]
        %v1651 = vld [vmem:[%s284 + $0xe8] sm:$0xf]
        %v1652 = vld [vmem:[%s284 + $0xec] sm:$0xf]
        %v1653 = vld [vmem:[%s284 + $0xf0] sm:$0xf]
        %v1654 = vld [vmem:[%s284 + $0xf4] sm:$0xf]
        %v1655 = vld [vmem:[%s284 + $0xf8] sm:$0xf]
        %v1656 = vld [vmem:[%s284 + $0xfc] sm:$0xf]
        %v1673 = vunpack.c.l.b16 %v1641
        %v1674 = vunpack.c.l.b16 %v1642
        %v1675 = vunpack.c.l.b16 %v1643
        %v1676 = vunpack.c.l.b16 %v1644
        %v1677 = vunpack.c.l.b16 %v1645
        %v1678 = vunpack.c.l.b16 %v1646
        %v1679 = vunpack.c.l.b16 %v1647
        %v1680 = vunpack.c.l.b16 %v1648
        %v1681 = vunpack.c.l.b16 %v1649
        %v1682 = vunpack.c.l.b16 %v1650
        %v1683 = vunpack.c.l.b16 %v1651
        %v1684 = vunpack.c.l.b16 %v1652
        %v1685 = vunpack.c.l.b16 %v1653
        %v1686 = vunpack.c.l.b16 %v1654
        %v1687 = vunpack.c.l.b16 %v1655
        %v1688 = vunpack.c.l.b16 %v1656
        %v1689 = vpack.c.b16 %v1674, %v1673
        %v1690 = vpack.c.b16 %v1676, %v1675
        %v1691 = vpack.c.b16 %v1678, %v1677
        %v1692 = vpack.c.b16 %v1680, %v1679
        %v1693 = vpack.c.b16 %v1682, %v1681
        %v1694 = vpack.c.b16 %v1684, %v1683
        %v1695 = vpack.c.b16 %v1686, %v1685
        %v1696 = vpack.c.b16 %v1688, %v1687
        %1705 = vmatprep.subr.bf16.mxu0 0
        %1706 = vmatpush1.bf16.msra.mxu0 %v1633
        %1707 = vmatprep.subr.bf16.mxu0 0
        %1708 = vmatpush1.bf16.msra.mxu0 %v1634
        %1709 = vmatprep.subr.bf16.mxu0 0
        %1710 = vmatpush1.bf16.msra.mxu0 %v1635
        %1711 = vmatprep.subr.bf16.mxu0 0
        %1712 = vmatpush1.bf16.msra.mxu0 %v1636
        %1713 = vmatprep.subr.bf16.mxu0 0
        %1714 = vmatpush1.bf16.msra.mxu0 %v1637
        %1715 = vmatprep.subr.bf16.mxu0 0
        %1716 = vmatpush1.bf16.msra.mxu0 %v1638
        %1717 = vmatprep.subr.bf16.mxu0 0
        %1718 = vmatpush1.bf16.msra.mxu0 %v1639
        %1719 = vmatprep.subr.bf16.mxu0 0
        %1720 = vmatpush1.bf16.msra.mxu0 %v1640
        %1721 = vmatprep.subr.bf16.mxu0 0
        %1722 = vmatpush1.bf16.msra.mxu0 0
        %1723 = vmatprep.subr.bf16.mxu0 0
        %1724 = vmatpush1.bf16.msra.mxu0 0
        %1725 = vmatprep.subr.bf16.mxu0 0
        %1726 = vmatpush1.bf16.msra.mxu0 0
        %1727 = vmatprep.subr.bf16.mxu0 0
        %1728 = vmatpush1.bf16.msra.mxu0 0
        %1729 = vmatprep.subr.bf16.mxu0 0
        %1730 = vmatpush1.bf16.msra.mxu0 0
        %1731 = vmatprep.subr.bf16.mxu0 0
        %1732 = vmatpush1.bf16.msra.mxu0 0
        %1733 = vmatprep.subr.bf16.mxu0 0
        %1734 = vmatpush1.bf16.msra.mxu0 0
        %1735 = vmatprep.subr.bf16.mxu0 0
        %1736 = vmatpush1.bf16.msra.mxu0 0
        %1737 = vmatprep.mubr.bf16.mxu0 0
        %1738 = vmatmul.mubr.bf16.gmra.mrb[0].mxu0 %v1689
        %v1739 = vpop.f32.mrb[0].mxu0
        %v1740 = vadd.f32 %v1053, %v1739
        %v1741 = vpop.f32.mrb[0].mxu0
        %v1742 = vpop.f32.mrb[0].mxu0
        %v1743 = vadd.f32 %v1053, %v1742
        %v1744 = vpop.f32.mrb[0].mxu0
        %1745 = vmatprep.mubr.bf16.mxu0 0
        %1746 = vmatmul.mubr.bf16.gmra.mrb[0].mxu0 %v1690
        %v1747 = vpop.f32.mrb[0].mxu0
        %v1748 = vadd.f32 %v1053, %v1747
        %v1749 = vpop.f32.mrb[0].mxu0
        %v1750 = vpop.f32.mrb[0].mxu0
        %v1751 = vadd.f32 %v1053, %v1750
        %v1752 = vpop.f32.mrb[0].mxu0
        %1753 = vmatprep.mubr.bf16.mxu0 0
        %1754 = vmatmul.mubr.bf16.gmra.mrb[0].mxu0 %v1691
        %v1755 = vpop.f32.mrb[0].mxu0
        %v1756 = vadd.f32 %v1053, %v1755
        %v1757 = vpop.f32.mrb[0].mxu0
        %v1758 = vpop.f32.mrb[0].mxu0
        %v1759 = vadd.f32 %v1053, %v1758
        %v1760 = vpop.f32.mrb[0].mxu0
        %1761 = vmatprep.mubr.bf16.mxu0 0
        %1762 = vmatmul.mubr.bf16.gmra.mrb[0].mxu0 %v1692
        %v1763 = vpop.f32.mrb[0].mxu0
        %v1764 = vadd.f32 %v1053, %v1763
        %v1765 = vpop.f32.mrb[0].mxu0
        %v1766 = vpop.f32.mrb[0].mxu0
        %v1767 = vadd.f32 %v1053, %v1766
        %v1768 = vpop.f32.mrb[0].mxu0
        %1769 = vmatprep.mubr.bf16.mxu0 0
        %1770 = vmatmul.mubr.bf16.gmra.mrb[0].mxu0 %v1693
        %v1771 = vpop.f32.mrb[0].mxu0
        %v1772 = vadd.f32 %v1053, %v1771
        %v1773 = vpop.f32.mrb[0].mxu0
        %v1774 = vpop.f32.mrb[0].mxu0
        %v1775 = vadd.f32 %v1053, %v1774
        %v1776 = vpop.f32.mrb[0].mxu0
        %1777 = vmatprep.mubr.bf16.mxu0 0
        %1778 = vmatmul.mubr.bf16.gmra.mrb[0].mxu0 %v1694
        %v1779 = vpop.f32.mrb[0].mxu0
        %v1780 = vadd.f32 %v1053, %v1779
        %v1781 = vpop.f32.mrb[0].mxu0
        %v1782 = vpop.f32.mrb[0].mxu0
        %v1783 = vadd.f32 %v1053, %v1782
        %v1784 = vpop.f32.mrb[0].mxu0
        %1785 = vmatprep.mubr.bf16.mxu0 0
        %1786 = vmatmul.mubr.bf16.gmra.mrb[0].mxu0 %v1695
        %v1787 = vpop.f32.mrb[0].mxu0
        %v1788 = vadd.f32 %v1053, %v1787
        %v1789 = vpop.f32.mrb[0].mxu0
        %v1790 = vpop.f32.mrb[0].mxu0
        %v1791 = vadd.f32 %v1053, %v1790
        %v1792 = vpop.f32.mrb[0].mxu0
        %1793 = vmatprep.mubr.bf16.mxu0 0
        %1794 = vmatmul.mubr.bf16.gmra.mrb[0].mxu0 %v1696
        %v1795 = vpop.f32.mrb[0].mxu0
        %v1796 = vadd.f32 %v1053, %v1795
        %v1797 = vpop.f32.mrb[0].mxu0
        %v1798 = vpop.f32.mrb[0].mxu0
        %v1799 = vadd.f32 %v1053, %v1798
        %v1800 = vpop.f32.mrb[0].mxu0
        %1801 = vdwg.mxu0
        %v1802 = vmax.f32 %v1740, 0.0
        %v1803 = vmax.f32 %v1743, 0.0
        %v1804 = vmax.f32 %v1748, 0.0
        %v1805 = vmax.f32 %v1751, 0.0
        %v1806 = vmax.f32 %v1756, 0.0
        %v1807 = vmax.f32 %v1759, 0.0
        %v1808 = vmax.f32 %v1764, 0.0
        %v1809 = vmax.f32 %v1767, 0.0
        %v1810 = vmax.f32 %v1772, 0.0
        %v1811 = vmax.f32 %v1775, 0.0
        %v1812 = vmax.f32 %v1780, 0.0
        %v1813 = vmax.f32 %v1783, 0.0
        %v1814 = vmax.f32 %v1788, 0.0
        %v1815 = vmax.f32 %v1791, 0.0
        %v1816 = vmax.f32 %v1796, 0.0
        %v1817 = vmax.f32 %v1799, 0.0
        %v1818 = vpack.c.bf16 %v1803, %v1802
        %v1819 = vpack.c.bf16 %v1805, %v1804
        %v1820 = vpack.c.bf16 %v1807, %v1806
        %v1821 = vpack.c.bf16 %v1809, %v1808
        %v1822 = vpack.c.bf16 %v1811, %v1810
        %v1823 = vpack.c.bf16 %v1813, %v1812
        %v1824 = vpack.c.bf16 %v1815, %v1814
        %v1825 = vpack.c.bf16 %v1817, %v1816
        %1826 = vst [vmem:[#allocation2 + $0xc0] sm:$0xff] %v1818
        %1827 = vst [vmem:[#allocation2 + $0xc8] sm:$0xff] %v1819
        %1828 = vst [vmem:[#allocation2 + $0xd0] sm:$0xff] %v1820
        %1829 = vst [vmem:[#allocation2 + $0xd8] sm:$0xff] %v1821
        %1830 = vst [vmem:[#allocation2 + $0xe0] sm:$0xff] %v1822
        %1831 = vst [vmem:[#allocation2 + $0xe8] sm:$0xff] %v1823
        %1832 = vst [vmem:[#allocation2 + $0xf0] sm:$0xff] %v1824
        %1833 = vst [vmem:[#allocation2 + $0xf8] sm:$0xff] %v1825
        %v1834 = vld [vmem:[#allocation10 + $0x40] sm:$0xf]
        %v1835 = vld [vmem:[#allocation10 + $0x44] sm:$0xf]
        %v1836 = vld [vmem:[#allocation10 + $0x48] sm:$0xf]
        %v1837 = vld [vmem:[#allocation10 + $0x4c] sm:$0xf]
        %v1838 = vld [vmem:[#allocation10 + $0x50] sm:$0xf]
        %v1839 = vld [vmem:[#allocation10 + $0x54] sm:$0xf]
        %v1840 = vld [vmem:[#allocation10 + $0x58] sm:$0xf]
        %v1841 = vld [vmem:[#allocation10 + $0x5c] sm:$0xf]
        %v1842 = vld [vmem:[#allocation10 + $0x60] sm:$0xf]
        %v1843 = vld [vmem:[#allocation10 + $0x64] sm:$0xf]
        %v1844 = vld [vmem:[#allocation10 + $0x68] sm:$0xf]
        %v1845 = vld [vmem:[#allocation10 + $0x6c] sm:$0xf]
        %v1846 = vld [vmem:[#allocation10 + $0x70] sm:$0xf]
        %v1847 = vld [vmem:[#allocation10 + $0x74] sm:$0xf]
        %v1848 = vld [vmem:[#allocation10 + $0x78] sm:$0xf]
        %v1849 = vld [vmem:[#allocation10 + $0x7c] sm:$0xf]
        %v1850 = vld [vmem:[#allocation12 + $0x1] sm:$0x1]
        %v1851 = vld [vmem:[#allocation2] sm:$0xff]
        %v1852 = vld [vmem:[#allocation2 + $0x8] sm:$0xff]
        %v1853 = vld [vmem:[#allocation2 + $0x10] sm:$0xff]
        %v1854 = vld [vmem:[#allocation2 + $0x18] sm:$0xff]
        %v1855 = vld [vmem:[#allocation2 + $0x20] sm:$0xff]
        %v1856 = vld [vmem:[#allocation2 + $0x28] sm:$0xff]
        %v1857 = vld [vmem:[#allocation2 + $0x30] sm:$0xff]
        %v1858 = vld [vmem:[#allocation2 + $0x38] sm:$0xff]
        %v1859 = vld [vmem:[#allocation2 + $0x40] sm:$0xff]
        %v1860 = vld [vmem:[#allocation2 + $0x48] sm:$0xff]
        %v1861 = vld [vmem:[#allocation2 + $0x50] sm:$0xff]
        %v1862 = vld [vmem:[#allocation2 + $0x58] sm:$0xff]
        %v1863 = vld [vmem:[#allocation2 + $0x60] sm:$0xff]
        %v1864 = vld [vmem:[#allocation2 + $0x68] sm:$0xff]
        %v1865 = vld [vmem:[#allocation2 + $0x70] sm:$0xff]
        %v1866 = vld [vmem:[#allocation2 + $0x78] sm:$0xff]
        %v1867 = vld [vmem:[#allocation2 + $0x80] sm:$0xff]
        %v1868 = vld [vmem:[#allocation2 + $0x88] sm:$0xff]
        %v1869 = vld [vmem:[#allocation2 + $0x90] sm:$0xff]
        %v1870 = vld [vmem:[#allocation2 + $0x98] sm:$0xff]
        %v1871 = vld [vmem:[#allocation2 + $0xa0] sm:$0xff]
        %v1872 = vld [vmem:[#allocation2 + $0xa8] sm:$0xff]
        %v1873 = vld [vmem:[#allocation2 + $0xb0] sm:$0xff]
        %v1874 = vld [vmem:[#allocation2 + $0xb8] sm:$0xff]
        %v1875 = vld [vmem:[#allocation2 + $0xc0] sm:$0xff]
        %v1876 = vld [vmem:[#allocation2 + $0xc8] sm:$0xff]
        %v1877 = vld [vmem:[#allocation2 + $0xd0] sm:$0xff]
        %v1878 = vld [vmem:[#allocation2 + $0xd8] sm:$0xff]
        %v1879 = vld [vmem:[#allocation2 + $0xe0] sm:$0xff]
        %v1880 = vld [vmem:[#allocation2 + $0xe8] sm:$0xff]
        %v1881 = vld [vmem:[#allocation2 + $0xf0] sm:$0xff]
        %v1882 = vld [vmem:[#allocation2 + $0xf8] sm:$0xff]
        %v1899 = vunpack.c.l.b16 %v1834
        %v1900 = vunpack.c.l.b16 %v1835
        %v1901 = vunpack.c.l.b16 %v1836
        %v1902 = vunpack.c.l.b16 %v1837
        %v1903 = vunpack.c.l.b16 %v1838
        %v1904 = vunpack.c.l.b16 %v1839
        %v1905 = vunpack.c.l.b16 %v1840
        %v1906 = vunpack.c.l.b16 %v1841
        %v1907 = vunpack.c.l.b16 %v1842
        %v1908 = vunpack.c.l.b16 %v1843
        %v1909 = vunpack.c.l.b16 %v1844
        %v1910 = vunpack.c.l.b16 %v1845
        %v1911 = vunpack.c.l.b16 %v1846
        %v1912 = vunpack.c.l.b16 %v1847
        %v1913 = vunpack.c.l.b16 %v1848
        %v1914 = vunpack.c.l.b16 %v1849
        %v1915 = vpack.c.b16 %v1900, %v1899
        %v1916 = vpack.c.b16 %v1902, %v1901
        %v1917 = vpack.c.b16 %v1904, %v1903
        %v1918 = vpack.c.b16 %v1906, %v1905
        %v1919 = vpack.c.b16 %v1908, %v1907
        %v1920 = vpack.c.b16 %v1910, %v1909
        %v1921 = vpack.c.b16 %v1912, %v1911
        %v1922 = vpack.c.b16 %v1914, %v1913
        %1931 = vmatprep.subr.bf16.mxu0 0
        %1932 = vmatpush1.bf16.msra.mxu0 %v1915
        %1933 = vmatprep.subr.bf16.mxu0 0
        %1934 = vmatpush1.bf16.msra.mxu0 %v1916
        %1935 = vmatprep.subr.bf16.mxu0 0
        %1936 = vmatpush1.bf16.msra.mxu0 %v1917
        %1937 = vmatprep.subr.bf16.mxu0 0
        %1938 = vmatpush1.bf16.msra.mxu0 %v1918
        %1939 = vmatprep.subr.bf16.mxu0 0
        %1940 = vmatpush1.bf16.msra.mxu0 %v1919
        %1941 = vmatprep.subr.bf16.mxu0 0
        %1942 = vmatpush1.bf16.msra.mxu0 %v1920
        %1943 = vmatprep.subr.bf16.mxu0 0
        %1944 = vmatpush1.bf16.msra.mxu0 %v1921
        %1945 = vmatprep.subr.bf16.mxu0 0
        %1946 = vmatpush1.bf16.msra.mxu0 %v1922
        %1947 = vmatprep.subr.bf16.mxu0 0
        %1948 = vmatpush1.bf16.msra.mxu0 0
        %1949 = vmatprep.subr.bf16.mxu0 0
        %1950 = vmatpush1.bf16.msra.mxu0 0
        %1951 = vmatprep.subr.bf16.mxu0 0
        %1952 = vmatpush1.bf16.msra.mxu0 0
        %1953 = vmatprep.subr.bf16.mxu0 0
        %1954 = vmatpush1.bf16.msra.mxu0 0
        %1955 = vmatprep.subr.bf16.mxu0 0
        %1956 = vmatpush1.bf16.msra.mxu0 0
        %1957 = vmatprep.subr.bf16.mxu0 0
        %1958 = vmatpush1.bf16.msra.mxu0 0
        %1959 = vmatprep.subr.bf16.mxu0 0
        %1960 = vmatpush1.bf16.msra.mxu0 0
        %1961 = vmatprep.subr.bf16.mxu0 0
        %1962 = vmatpush1.bf16.msra.mxu0 0
        %1963 = vmatprep.mubr.bf16.mxu0 0
        %1964 = vmatmul.mubr.bf16.gmra.mrb[0].mxu0 %v1851
        %v1965 = vpop.f32.mrb[0].mxu0
        %v1966 = vadd.f32 0.0, %v1965
        %v1967 = vpop.f32.mrb[0].mxu0
        %v1968 = vpop.f32.mrb[0].mxu0
        %v1969 = vadd.f32 0.0, %v1968
        %v1970 = vpop.f32.mrb[0].mxu0
        %1971 = vmatprep.mubr.bf16.mxu0 0
        %1972 = vmatmul.mubr.bf16.gmra.mrb[0].mxu0 %v1852
        %v1973 = vpop.f32.mrb[0].mxu0
        %v1974 = vadd.f32 0.0, %v1973
        %v1975 = vpop.f32.mrb[0].mxu0
        %v1976 = vpop.f32.mrb[0].mxu0
        %v1977 = vadd.f32 0.0, %v1976
        %v1978 = vpop.f32.mrb[0].mxu0
        %1979 = vmatprep.mubr.bf16.mxu0 0
        %1980 = vmatmul.mubr.bf16.gmra.mrb[0].mxu0 %v1853
        %v1981 = vpop.f32.mrb[0].mxu0
        %v1982 = vadd.f32 0.0, %v1981
        %v1983 = vpop.f32.mrb[0].mxu0
        %v1984 = vpop.f32.mrb[0].mxu0
        %v1985 = vadd.f32 0.0, %v1984
        %v1986 = vpop.f32.mrb[0].mxu0
        %1987 = vmatprep.mubr.bf16.mxu0 0
        %1988 = vmatmul.mubr.bf16.gmra.mrb[0].mxu0 %v1854
        %v1989 = vpop.f32.mrb[0].mxu0
        %v1990 = vadd.f32 0.0, %v1989
        %v1991 = vpop.f32.mrb[0].mxu0
        %v1992 = vpop.f32.mrb[0].mxu0
        %v1993 = vadd.f32 0.0, %v1992
        %v1994 = vpop.f32.mrb[0].mxu0
        %1995 = vmatprep.mubr.bf16.mxu0 0
        %1996 = vmatmul.mubr.bf16.gmra.mrb[0].mxu0 %v1855
        %v1997 = vpop.f32.mrb[0].mxu0
        %v1998 = vadd.f32 0.0, %v1997
        %v1999 = vpop.f32.mrb[0].mxu0
        %v2000 = vpop.f32.mrb[0].mxu0
        %v2001 = vadd.f32 0.0, %v2000
        %v2002 = vpop.f32.mrb[0].mxu0
        %2003 = vmatprep.mubr.bf16.mxu0 0
        %2004 = vmatmul.mubr.bf16.gmra.mrb[0].mxu0 %v1856
        %v2005 = vpop.f32.mrb[0].mxu0
        %v2006 = vadd.f32 0.0, %v2005
        %v2007 = vpop.f32.mrb[0].mxu0
        %v2008 = vpop.f32.mrb[0].mxu0
        %v2009 = vadd.f32 0.0, %v2008
        %v2010 = vpop.f32.mrb[0].mxu0
        %2011 = vmatprep.mubr.bf16.mxu0 0
        %2012 = vmatmul.mubr.bf16.gmra.mrb[0].mxu0 %v1857
        %v2013 = vpop.f32.mrb[0].mxu0
        %v2014 = vadd.f32 0.0, %v2013
        %v2015 = vpop.f32.mrb[0].mxu0
        %v2016 = vpop.f32.mrb[0].mxu0
        %v2017 = vadd.f32 0.0, %v2016
        %v2018 = vpop.f32.mrb[0].mxu0
        %2019 = vmatprep.mubr.bf16.mxu0 0
        %2020 = vmatmul.mubr.bf16.gmra.mrb[0].mxu0 %v1858
        %v2021 = vpop.f32.mrb[0].mxu0
        %v2022 = vadd.f32 0.0, %v2021
        %v2023 = vpop.f32.mrb[0].mxu0
        %v2024 = vpop.f32.mrb[0].mxu0
        %v2025 = vadd.f32 0.0, %v2024
        %v2026 = vpop.f32.mrb[0].mxu0
        %2027 = vmatprep.mubr.bf16.mxu0 0
        %2028 = vmatmul.mubr.bf16.gmra.mrb[0].mxu0 %v1859
        %v2029 = vpop.f32.mrb[0].mxu0
        %v2030 = vadd.f32 0.0, %v2029
        %v2031 = vpop.f32.mrb[0].mxu0
        %v2032 = vpop.f32.mrb[0].mxu0
        %v2033 = vadd.f32 0.0, %v2032
        %v2034 = vpop.f32.mrb[0].mxu0
        %2035 = vmatprep.mubr.bf16.mxu0 0
        %2036 = vmatmul.mubr.bf16.gmra.mrb[0].mxu0 %v1860
        %v2037 = vpop.f32.mrb[0].mxu0
        %v2038 = vadd.f32 0.0, %v2037
        %v2039 = vpop.f32.mrb[0].mxu0
        %v2040 = vpop.f32.mrb[0].mxu0
        %v2041 = vadd.f32 0.0, %v2040
        %v2042 = vpop.f32.mrb[0].mxu0
        %2043 = vmatprep.mubr.bf16.mxu0 0
        %2044 = vmatmul.mubr.bf16.gmra.mrb[0].mxu0 %v1861
        %v2045 = vpop.f32.mrb[0].mxu0
        %v2046 = vadd.f32 0.0, %v2045
        %v2047 = vpop.f32.mrb[0].mxu0
        %v2048 = vpop.f32.mrb[0].mxu0
        %v2049 = vadd.f32 0.0, %v2048
        %v2050 = vpop.f32.mrb[0].mxu0
        %2051 = vmatprep.mubr.bf16.mxu0 0
        %2052 = vmatmul.mubr.bf16.gmra.mrb[0].mxu0 %v1862
        %v2053 = vpop.f32.mrb[0].mxu0
        %v2054 = vadd.f32 0.0, %v2053
        %v2055 = vpop.f32.mrb[0].mxu0
        %v2056 = vpop.f32.mrb[0].mxu0
        %v2057 = vadd.f32 0.0, %v2056
        %v2058 = vpop.f32.mrb[0].mxu0
        %2059 = vmatprep.mubr.bf16.mxu0 0
        %2060 = vmatmul.mubr.bf16.gmra.mrb[0].mxu0 %v1863
        %v2061 = vpop.f32.mrb[0].mxu0
        %v2062 = vadd.f32 0.0, %v2061
        %v2063 = vpop.f32.mrb[0].mxu0
        %v2064 = vpop.f32.mrb[0].mxu0
        %v2065 = vadd.f32 0.0, %v2064
        %v2066 = vpop.f32.mrb[0].mxu0
        %2067 = vmatprep.mubr.bf16.mxu0 0
        %2068 = vmatmul.mubr.bf16.gmra.mrb[0].mxu0 %v1864
        %v2069 = vpop.f32.mrb[0].mxu0
        %v2070 = vadd.f32 0.0, %v2069
        %v2071 = vpop.f32.mrb[0].mxu0
        %v2072 = vpop.f32.mrb[0].mxu0
        %v2073 = vadd.f32 0.0, %v2072
        %v2074 = vpop.f32.mrb[0].mxu0
        %2075 = vmatprep.mubr.bf16.mxu0 0
        %2076 = vmatmul.mubr.bf16.gmra.mrb[0].mxu0 %v1865
        %v2077 = vpop.f32.mrb[0].mxu0
        %v2078 = vadd.f32 0.0, %v2077
        %v2079 = vpop.f32.mrb[0].mxu0
        %v2080 = vpop.f32.mrb[0].mxu0
        %v2081 = vadd.f32 0.0, %v2080
        %v2082 = vpop.f32.mrb[0].mxu0
        %2083 = vmatprep.mubr.bf16.mxu0 0
        %2084 = vmatmul.mubr.bf16.gmra.mrb[0].mxu0 %v1866
        %v2085 = vpop.f32.mrb[0].mxu0
        %v2086 = vadd.f32 0.0, %v2085
        %v2087 = vpop.f32.mrb[0].mxu0
        %v2088 = vpop.f32.mrb[0].mxu0
        %v2089 = vadd.f32 0.0, %v2088
        %v2090 = vpop.f32.mrb[0].mxu0
        %2091 = vmatprep.mubr.bf16.mxu0 0
        %2092 = vmatmul.mubr.bf16.gmra.mrb[0].mxu0 %v1867
        %v2093 = vpop.f32.mrb[0].mxu0
        %v2094 = vadd.f32 0.0, %v2093
        %v2095 = vpop.f32.mrb[0].mxu0
        %v2096 = vpop.f32.mrb[0].mxu0
        %v2097 = vadd.f32 0.0, %v2096
        %v2098 = vpop.f32.mrb[0].mxu0
        %2099 = vmatprep.mubr.bf16.mxu0 0
        %2100 = vmatmul.mubr.bf16.gmra.mrb[0].mxu0 %v1868
        %v2101 = vpop.f32.mrb[0].mxu0
        %v2102 = vadd.f32 0.0, %v2101
        %v2103 = vpop.f32.mrb[0].mxu0
        %v2104 = vpop.f32.mrb[0].mxu0
        %v2105 = vadd.f32 0.0, %v2104
        %v2106 = vpop.f32.mrb[0].mxu0
        %2107 = vmatprep.mubr.bf16.mxu0 0
        %2108 = vmatmul.mubr.bf16.gmra.mrb[0].mxu0 %v1869
        %v2109 = vpop.f32.mrb[0].mxu0
        %v2110 = vadd.f32 0.0, %v2109
        %v2111 = vpop.f32.mrb[0].mxu0
        %v2112 = vpop.f32.mrb[0].mxu0
        %v2113 = vadd.f32 0.0, %v2112
        %v2114 = vpop.f32.mrb[0].mxu0
        %2115 = vmatprep.mubr.bf16.mxu0 0
        %2116 = vmatmul.mubr.bf16.gmra.mrb[0].mxu0 %v1870
        %v2117 = vpop.f32.mrb[0].mxu0
        %v2118 = vadd.f32 0.0, %v2117
        %v2119 = vpop.f32.mrb[0].mxu0
        %v2120 = vpop.f32.mrb[0].mxu0
        %v2121 = vadd.f32 0.0, %v2120
        %v2122 = vpop.f32.mrb[0].mxu0
        %2123 = vmatprep.mubr.bf16.mxu0 0
        %2124 = vmatmul.mubr.bf16.gmra.mrb[0].mxu0 %v1871
        %v2125 = vpop.f32.mrb[0].mxu0
        %v2126 = vadd.f32 0.0, %v2125
        %v2127 = vpop.f32.mrb[0].mxu0
        %v2128 = vpop.f32.mrb[0].mxu0
        %v2129 = vadd.f32 0.0, %v2128
        %v2130 = vpop.f32.mrb[0].mxu0
        %2131 = vmatprep.mubr.bf16.mxu0 0
        %2132 = vmatmul.mubr.bf16.gmra.mrb[0].mxu0 %v1872
        %v2133 = vpop.f32.mrb[0].mxu0
        %v2134 = vadd.f32 0.0, %v2133
        %v2135 = vpop.f32.mrb[0].mxu0
        %v2136 = vpop.f32.mrb[0].mxu0
        %v2137 = vadd.f32 0.0, %v2136
        %v2138 = vpop.f32.mrb[0].mxu0
        %2139 = vmatprep.mubr.bf16.mxu0 0
        %2140 = vmatmul.mubr.bf16.gmra.mrb[0].mxu0 %v1873
        %v2141 = vpop.f32.mrb[0].mxu0
        %v2142 = vadd.f32 0.0, %v2141
        %v2143 = vpop.f32.mrb[0].mxu0
        %v2144 = vpop.f32.mrb[0].mxu0
        %v2145 = vadd.f32 0.0, %v2144
        %v2146 = vpop.f32.mrb[0].mxu0
        %2147 = vmatprep.mubr.bf16.mxu0 0
        %2148 = vmatmul.mubr.bf16.gmra.mrb[0].mxu0 %v1874
        %v2149 = vpop.f32.mrb[0].mxu0
        %v2150 = vadd.f32 0.0, %v2149
        %v2151 = vpop.f32.mrb[0].mxu0
        %v2152 = vpop.f32.mrb[0].mxu0
        %v2153 = vadd.f32 0.0, %v2152
        %v2154 = vpop.f32.mrb[0].mxu0
        %2155 = vmatprep.mubr.bf16.mxu0 0
        %2156 = vmatmul.mubr.bf16.gmra.mrb[0].mxu0 %v1875
        %v2157 = vpop.f32.mrb[0].mxu0
        %v2158 = vadd.f32 0.0, %v2157
        %v2159 = vpop.f32.mrb[0].mxu0
        %v2160 = vpop.f32.mrb[0].mxu0
        %v2161 = vadd.f32 0.0, %v2160
        %v2162 = vpop.f32.mrb[0].mxu0
        %2163 = vmatprep.mubr.bf16.mxu0 0
        %2164 = vmatmul.mubr.bf16.gmra.mrb[0].mxu0 %v1876
        %v2165 = vpop.f32.mrb[0].mxu0
        %v2166 = vadd.f32 0.0, %v2165
        %v2167 = vpop.f32.mrb[0].mxu0
        %v2168 = vpop.f32.mrb[0].mxu0
        %v2169 = vadd.f32 0.0, %v2168
        %v2170 = vpop.f32.mrb[0].mxu0
        %2171 = vmatprep.mubr.bf16.mxu0 0
        %2172 = vmatmul.mubr.bf16.gmra.mrb[0].mxu0 %v1877
        %v2173 = vpop.f32.mrb[0].mxu0
        %v2174 = vadd.f32 0.0, %v2173
        %v2175 = vpop.f32.mrb[0].mxu0
        %v2176 = vpop.f32.mrb[0].mxu0
        %v2177 = vadd.f32 0.0, %v2176
        %v2178 = vpop.f32.mrb[0].mxu0
        %2179 = vmatprep.mubr.bf16.mxu0 0
        %2180 = vmatmul.mubr.bf16.gmra.mrb[0].mxu0 %v1878
        %v2181 = vpop.f32.mrb[0].mxu0
        %v2182 = vadd.f32 0.0, %v2181
        %v2183 = vpop.f32.mrb[0].mxu0
        %v2184 = vpop.f32.mrb[0].mxu0
        %v2185 = vadd.f32 0.0, %v2184
        %v2186 = vpop.f32.mrb[0].mxu0
        %2187 = vmatprep.mubr.bf16.mxu0 0
        %2188 = vmatmul.mubr.bf16.gmra.mrb[0].mxu0 %v1879
        %v2189 = vpop.f32.mrb[0].mxu0
        %v2190 = vadd.f32 0.0, %v2189
        %v2191 = vpop.f32.mrb[0].mxu0
        %v2192 = vpop.f32.mrb[0].mxu0
        %v2193 = vadd.f32 0.0, %v2192
        %v2194 = vpop.f32.mrb[0].mxu0
        %2195 = vmatprep.mubr.bf16.mxu0 0
        %2196 = vmatmul.mubr.bf16.gmra.mrb[0].mxu0 %v1880
        %v2197 = vpop.f32.mrb[0].mxu0
        %v2198 = vadd.f32 0.0, %v2197
        %v2199 = vpop.f32.mrb[0].mxu0
        %v2200 = vpop.f32.mrb[0].mxu0
        %v2201 = vadd.f32 0.0, %v2200
        %v2202 = vpop.f32.mrb[0].mxu0
        %2203 = vmatprep.mubr.bf16.mxu0 0
        %2204 = vmatmul.mubr.bf16.gmra.mrb[0].mxu0 %v1881
        %v2205 = vpop.f32.mrb[0].mxu0
        %v2206 = vadd.f32 0.0, %v2205
        %v2207 = vpop.f32.mrb[0].mxu0
        %v2208 = vpop.f32.mrb[0].mxu0
        %v2209 = vadd.f32 0.0, %v2208
        %v2210 = vpop.f32.mrb[0].mxu0
        %2211 = vmatprep.mubr.bf16.mxu0 0
        %2212 = vmatmul.mubr.bf16.gmra.mrb[0].mxu0 %v1882
        %v2213 = vpop.f32.mrb[0].mxu0
        %v2214 = vadd.f32 0.0, %v2213
        %v2215 = vpop.f32.mrb[0].mxu0
        %v2216 = vpop.f32.mrb[0].mxu0
        %v2217 = vadd.f32 0.0, %v2216
        %v2218 = vpop.f32.mrb[0].mxu0
        %2219 = vdwg.mxu0
        %v2220 = vpack.c.bf16 %v1969, %v1966
        %v2221 = vpack.c.bf16 %v1977, %v1974
        %v2222 = vpack.c.bf16 %v1985, %v1982
        %v2223 = vpack.c.bf16 %v1993, %v1990
        %v2224 = vpack.c.bf16 %v2001, %v1998
        %v2225 = vpack.c.bf16 %v2009, %v2006
        %v2226 = vpack.c.bf16 %v2017, %v2014
        %v2227 = vpack.c.bf16 %v2025, %v2022
        %v2228 = vld [vmem:[%s284] sm:$0xf]
        %v2229 = vld [vmem:[%s284 + $0x4] sm:$0xf]
        %v2230 = vld [vmem:[%s284 + $0x8] sm:$0xf]
        %v2231 = vld [vmem:[%s284 + $0xc] sm:$0xf]
        %v2232 = vld [vmem:[%s284 + $0x10] sm:$0xf]
        %v2233 = vld [vmem:[%s284 + $0x14] sm:$0xf]
        %v2234 = vld [vmem:[%s284 + $0x18] sm:$0xf]
        %v2235 = vld [vmem:[%s284 + $0x1c] sm:$0xf]
        %v2236 = vld [vmem:[%s284 + $0x20] sm:$0xf]
        %v2237 = vld [vmem:[%s284 + $0x24] sm:$0xf]
        %v2238 = vld [vmem:[%s284 + $0x28] sm:$0xf]
        %v2239 = vld [vmem:[%s284 + $0x2c] sm:$0xf]
        %v2240 = vld [vmem:[%s284 + $0x30] sm:$0xf]
        %v2241 = vld [vmem:[%s284 + $0x34] sm:$0xf]
        %v2242 = vld [vmem:[%s284 + $0x38] sm:$0xf]
        %v2243 = vld [vmem:[%s284 + $0x3c] sm:$0xf]
        %v2244 = vlaneseq
        %v2245 = vshrl.u32 %v2244, 7
        %v2246 = vsub.s32 0, %v2245
        %v2247 = vrot.slane %v1850, %v2246
        %v2264 = vunpack.c.l.b16 %v2228
        %v2265 = vunpack.c.l.b16 %v2229
        %v2266 = vunpack.c.l.b16 %v2230
        %v2267 = vunpack.c.l.b16 %v2231
        %v2268 = vunpack.c.l.b16 %v2232
        %v2269 = vunpack.c.l.b16 %v2233
        %v2270 = vunpack.c.l.b16 %v2234
        %v2271 = vunpack.c.l.b16 %v2235
        %v2272 = vunpack.c.l.b16 %v2236
        %v2273 = vunpack.c.l.b16 %v2237
        %v2274 = vunpack.c.l.b16 %v2238
        %v2275 = vunpack.c.l.b16 %v2239
        %v2276 = vunpack.c.l.b16 %v2240
        %v2277 = vunpack.c.l.b16 %v2241
        %v2278 = vunpack.c.l.b16 %v2242
        %v2279 = vunpack.c.l.b16 %v2243
        %v2280 = vpack.c.b16 %v2265, %v2264
        %v2281 = vpack.c.b16 %v2267, %v2266
        %v2282 = vpack.c.b16 %v2269, %v2268
        %v2283 = vpack.c.b16 %v2271, %v2270
        %v2284 = vpack.c.b16 %v2273, %v2272
        %v2285 = vpack.c.b16 %v2275, %v2274
        %v2286 = vpack.c.b16 %v2277, %v2276
        %v2287 = vpack.c.b16 %v2279, %v2278
        %2296 = vmatprep.subr.bf16.mxu0 0
        %2297 = vmatpush1.bf16.msra.mxu0 %v2220
        %2298 = vmatprep.subr.bf16.mxu0 0
        %2299 = vmatpush1.bf16.msra.mxu0 %v2221
        %2300 = vmatprep.subr.bf16.mxu0 0
        %2301 = vmatpush1.bf16.msra.mxu0 %v2222
        %2302 = vmatprep.subr.bf16.mxu0 0
        %2303 = vmatpush1.bf16.msra.mxu0 %v2223
        %2304 = vmatprep.subr.bf16.mxu0 0
        %2305 = vmatpush1.bf16.msra.mxu0 %v2224
        %2306 = vmatprep.subr.bf16.mxu0 0
        %2307 = vmatpush1.bf16.msra.mxu0 %v2225
        %2308 = vmatprep.subr.bf16.mxu0 0
        %2309 = vmatpush1.bf16.msra.mxu0 %v2226
        %2310 = vmatprep.subr.bf16.mxu0 0
        %2311 = vmatpush1.bf16.msra.mxu0 %v2227
        %2312 = vmatprep.subr.bf16.mxu0 0
        %2313 = vmatpush1.bf16.msra.mxu0 0
        %2314 = vmatprep.subr.bf16.mxu0 0
        %2315 = vmatpush1.bf16.msra.mxu0 0
        %2316 = vmatprep.subr.bf16.mxu0 0
        %2317 = vmatpush1.bf16.msra.mxu0 0
        %2318 = vmatprep.subr.bf16.mxu0 0
        %2319 = vmatpush1.bf16.msra.mxu0 0
        %2320 = vmatprep.subr.bf16.mxu0 0
        %2321 = vmatpush1.bf16.msra.mxu0 0
        %2322 = vmatprep.subr.bf16.mxu0 0
        %2323 = vmatpush1.bf16.msra.mxu0 0
        %2324 = vmatprep.subr.bf16.mxu0 0
        %2325 = vmatpush1.bf16.msra.mxu0 0
        %2326 = vmatprep.subr.bf16.mxu0 0
        %2327 = vmatpush1.bf16.msra.mxu0 0
        %2328 = vmatprep.mubr.bf16.mxu0 0
        %2329 = vmatmul.mubr.bf16.gmra.mrb[0].mxu0 %v2280
        %v2330 = vpop.f32.mrb[0].mxu0
        %v2331 = vadd.f32 %v2247, %v2330
        %v2332 = vpop.f32.mrb[0].mxu0
        %v2333 = vpop.f32.mrb[0].mxu0
        %v2334 = vadd.f32 %v2247, %v2333
        %v2335 = vpop.f32.mrb[0].mxu0
        %2336 = vmatprep.mubr.bf16.mxu0 0
        %2337 = vmatmul.mubr.bf16.gmra.mrb[0].mxu0 %v2281
        %v2338 = vpop.f32.mrb[0].mxu0
        %v2339 = vadd.f32 %v2247, %v2338
        %v2340 = vpop.f32.mrb[0].mxu0
        %v2341 = vpop.f32.mrb[0].mxu0
        %v2342 = vadd.f32 %v2247, %v2341
        %v2343 = vpop.f32.mrb[0].mxu0
        %2344 = vmatprep.mubr.bf16.mxu0 0
        %2345 = vmatmul.mubr.bf16.gmra.mrb[0].mxu0 %v2282
        %v2346 = vpop.f32.mrb[0].mxu0
        %v2347 = vadd.f32 %v2247, %v2346
        %v2348 = vpop.f32.mrb[0].mxu0
        %v2349 = vpop.f32.mrb[0].mxu0
        %v2350 = vadd.f32 %v2247, %v2349
        %v2351 = vpop.f32.mrb[0].mxu0
        %2352 = vmatprep.mubr.bf16.mxu0 0
        %2353 = vmatmul.mubr.bf16.gmra.mrb[0].mxu0 %v2283
        %v2354 = vpop.f32.mrb[0].mxu0
        %v2355 = vadd.f32 %v2247, %v2354
        %v2356 = vpop.f32.mrb[0].mxu0
        %v2357 = vpop.f32.mrb[0].mxu0
        %v2358 = vadd.f32 %v2247, %v2357
        %v2359 = vpop.f32.mrb[0].mxu0
        %2360 = vmatprep.mubr.bf16.mxu0 0
        %2361 = vmatmul.mubr.bf16.gmra.mrb[0].mxu0 %v2284
        %v2362 = vpop.f32.mrb[0].mxu0
        %v2363 = vadd.f32 %v2247, %v2362
        %v2364 = vpop.f32.mrb[0].mxu0
        %v2365 = vpop.f32.mrb[0].mxu0
        %v2366 = vadd.f32 %v2247, %v2365
        %v2367 = vpop.f32.mrb[0].mxu0
        %2368 = vmatprep.mubr.bf16.mxu0 0
        %2369 = vmatmul.mubr.bf16.gmra.mrb[0].mxu0 %v2285
        %v2370 = vpop.f32.mrb[0].mxu0
        %v2371 = vadd.f32 %v2247, %v2370
        %v2372 = vpop.f32.mrb[0].mxu0
        %v2373 = vpop.f32.mrb[0].mxu0
        %v2374 = vadd.f32 %v2247, %v2373
        %v2375 = vpop.f32.mrb[0].mxu0
        %2376 = vmatprep.mubr.bf16.mxu0 0
        %2377 = vmatmul.mubr.bf16.gmra.mrb[0].mxu0 %v2286
        %v2378 = vpop.f32.mrb[0].mxu0
        %v2379 = vadd.f32 %v2247, %v2378
        %v2380 = vpop.f32.mrb[0].mxu0
        %v2381 = vpop.f32.mrb[0].mxu0
        %v2382 = vadd.f32 %v2247, %v2381
        %v2383 = vpop.f32.mrb[0].mxu0
        %2384 = vmatprep.mubr.bf16.mxu0 0
        %2385 = vmatmul.mubr.bf16.gmra.mrb[0].mxu0 %v2287
        %v2386 = vpop.f32.mrb[0].mxu0
        %v2387 = vadd.f32 %v2247, %v2386
        %v2388 = vpop.f32.mrb[0].mxu0
        %v2389 = vpop.f32.mrb[0].mxu0
        %v2390 = vadd.f32 %v2247, %v2389
        %v2391 = vpop.f32.mrb[0].mxu0
        %2392 = vdwg.mxu0
        %v2393 = vmax.f32 %v2331, 0.0
        %v2394 = vmax.f32 %v2334, 0.0
        %v2395 = vmax.f32 %v2339, 0.0
        %v2396 = vmax.f32 %v2342, 0.0
        %v2397 = vmax.f32 %v2347, 0.0
        %v2398 = vmax.f32 %v2350, 0.0
        %v2399 = vmax.f32 %v2355, 0.0
        %v2400 = vmax.f32 %v2358, 0.0
        %v2401 = vmax.f32 %v2363, 0.0
        %v2402 = vmax.f32 %v2366, 0.0
        %v2403 = vmax.f32 %v2371, 0.0
        %v2404 = vmax.f32 %v2374, 0.0
        %v2405 = vmax.f32 %v2379, 0.0
        %v2406 = vmax.f32 %v2382, 0.0
        %v2407 = vmax.f32 %v2387, 0.0
        %v2408 = vmax.f32 %v2390, 0.0
        %v2409 = vpack.c.bf16 %v2394, %v2393
        %v2410 = vpack.c.bf16 %v2396, %v2395
        %v2411 = vpack.c.bf16 %v2398, %v2397
        %v2412 = vpack.c.bf16 %v2400, %v2399
        %v2413 = vpack.c.bf16 %v2402, %v2401
        %v2414 = vpack.c.bf16 %v2404, %v2403
        %v2415 = vpack.c.bf16 %v2406, %v2405
        %v2416 = vpack.c.bf16 %v2408, %v2407
        %2417 = vst [vmem:[#allocation2] sm:$0xff] %v2409
        %2418 = vst [vmem:[#allocation2 + $0x8] sm:$0xff] %v2410
        %2419 = vst [vmem:[#allocation2 + $0x10] sm:$0xff] %v2411
        %2420 = vst [vmem:[#allocation2 + $0x18] sm:$0xff] %v2412
        %2421 = vst [vmem:[#allocation2 + $0x20] sm:$0xff] %v2413
        %2422 = vst [vmem:[#allocation2 + $0x28] sm:$0xff] %v2414
        %2423 = vst [vmem:[#allocation2 + $0x30] sm:$0xff] %v2415
        %2424 = vst [vmem:[#allocation2 + $0x38] sm:$0xff] %v2416
        %v2425 = vpack.c.bf16 %v2033, %v2030
        %v2426 = vpack.c.bf16 %v2041, %v2038
        %v2427 = vpack.c.bf16 %v2049, %v2046
        %v2428 = vpack.c.bf16 %v2057, %v2054
        %v2429 = vpack.c.bf16 %v2065, %v2062
        %v2430 = vpack.c.bf16 %v2073, %v2070
        %v2431 = vpack.c.bf16 %v2081, %v2078
        %v2432 = vpack.c.bf16 %v2089, %v2086
        %v2433 = vld [vmem:[%s284 + $0x40] sm:$0xf]
        %v2434 = vld [vmem:[%s284 + $0x44] sm:$0xf]
        %v2435 = vld [vmem:[%s284 + $0x48] sm:$0xf]
        %v2436 = vld [vmem:[%s284 + $0x4c] sm:$0xf]
        %v2437 = vld [vmem:[%s284 + $0x50] sm:$0xf]
        %v2438 = vld [vmem:[%s284 + $0x54] sm:$0xf]
        %v2439 = vld [vmem:[%s284 + $0x58] sm:$0xf]
        %v2440 = vld [vmem:[%s284 + $0x5c] sm:$0xf]
        %v2441 = vld [vmem:[%s284 + $0x60] sm:$0xf]
        %v2442 = vld [vmem:[%s284 + $0x64] sm:$0xf]
        %v2443 = vld [vmem:[%s284 + $0x68] sm:$0xf]
        %v2444 = vld [vmem:[%s284 + $0x6c] sm:$0xf]
        %v2445 = vld [vmem:[%s284 + $0x70] sm:$0xf]
        %v2446 = vld [vmem:[%s284 + $0x74] sm:$0xf]
        %v2447 = vld [vmem:[%s284 + $0x78] sm:$0xf]
        %v2448 = vld [vmem:[%s284 + $0x7c] sm:$0xf]
        %v2465 = vunpack.c.l.b16 %v2433
        %v2466 = vunpack.c.l.b16 %v2434
        %v2467 = vunpack.c.l.b16 %v2435
        %v2468 = vunpack.c.l.b16 %v2436
        %v2469 = vunpack.c.l.b16 %v2437
        %v2470 = vunpack.c.l.b16 %v2438
        %v2471 = vunpack.c.l.b16 %v2439
        %v2472 = vunpack.c.l.b16 %v2440
        %v2473 = vunpack.c.l.b16 %v2441
        %v2474 = vunpack.c.l.b16 %v2442
        %v2475 = vunpack.c.l.b16 %v2443
        %v2476 = vunpack.c.l.b16 %v2444
        %v2477 = vunpack.c.l.b16 %v2445
        %v2478 = vunpack.c.l.b16 %v2446
        %v2479 = vunpack.c.l.b16 %v2447
        %v2480 = vunpack.c.l.b16 %v2448
        %v2481 = vpack.c.b16 %v2466, %v2465
        %v2482 = vpack.c.b16 %v2468, %v2467
        %v2483 = vpack.c.b16 %v2470, %v2469
        %v2484 = vpack.c.b16 %v2472, %v2471
        %v2485 = vpack.c.b16 %v2474, %v2473
        %v2486 = vpack.c.b16 %v2476, %v2475
        %v2487 = vpack.c.b16 %v2478, %v2477
        %v2488 = vpack.c.b16 %v2480, %v2479
        %2497 = vmatprep.subr.bf16.mxu0 0
        %2498 = vmatpush1.bf16.msra.mxu0 %v2425
        %2499 = vmatprep.subr.bf16.mxu0 0
        %2500 = vmatpush1.bf16.msra.mxu0 %v2426
        %2501 = vmatprep.subr.bf16.mxu0 0
        %2502 = vmatpush1.bf16.msra.mxu0 %v2427
        %2503 = vmatprep.subr.bf16.mxu0 0
        %2504 = vmatpush1.bf16.msra.mxu0 %v2428
        %2505 = vmatprep.subr.bf16.mxu0 0
        %2506 = vmatpush1.bf16.msra.mxu0 %v2429
        %2507 = vmatprep.subr.bf16.mxu0 0
        %2508 = vmatpush1.bf16.msra.mxu0 %v2430
        %2509 = vmatprep.subr.bf16.mxu0 0
        %2510 = vmatpush1.bf16.msra.mxu0 %v2431
        %2511 = vmatprep.subr.bf16.mxu0 0
        %2512 = vmatpush1.bf16.msra.mxu0 %v2432
        %2513 = vmatprep.subr.bf16.mxu0 0
        %2514 = vmatpush1.bf16.msra.mxu0 0
        %2515 = vmatprep.subr.bf16.mxu0 0
        %2516 = vmatpush1.bf16.msra.mxu0 0
        %2517 = vmatprep.subr.bf16.mxu0 0
        %2518 = vmatpush1.bf16.msra.mxu0 0
        %2519 = vmatprep.subr.bf16.mxu0 0
        %2520 = vmatpush1.bf16.msra.mxu0 0
        %2521 = vmatprep.subr.bf16.mxu0 0
        %2522 = vmatpush1.bf16.msra.mxu0 0
        %2523 = vmatprep.subr.bf16.mxu0 0
        %2524 = vmatpush1.bf16.msra.mxu0 0
        %2525 = vmatprep.subr.bf16.mxu0 0
        %2526 = vmatpush1.bf16.msra.mxu0 0
        %2527 = vmatprep.subr.bf16.mxu0 0
        %2528 = vmatpush1.bf16.msra.mxu0 0
        %2529 = vmatprep.mubr.bf16.mxu0 0
        %2530 = vmatmul.mubr.bf16.gmra.mrb[0].mxu0 %v2481
        %v2531 = vpop.f32.mrb[0].mxu0
        %v2532 = vadd.f32 %v2247, %v2531
        %v2533 = vpop.f32.mrb[0].mxu0
        %v2534 = vpop.f32.mrb[0].mxu0
        %v2535 = vadd.f32 %v2247, %v2534
        %v2536 = vpop.f32.mrb[0].mxu0
        %2537 = vmatprep.mubr.bf16.mxu0 0
        %2538 = vmatmul.mubr.bf16.gmra.mrb[0].mxu0 %v2482
        %v2539 = vpop.f32.mrb[0].mxu0
        %v2540 = vadd.f32 %v2247, %v2539
        %v2541 = vpop.f32.mrb[0].mxu0
        %v2542 = vpop.f32.mrb[0].mxu0
        %v2543 = vadd.f32 %v2247, %v2542
        %v2544 = vpop.f32.mrb[0].mxu0
        %2545 = vmatprep.mubr.bf16.mxu0 0
        %2546 = vmatmul.mubr.bf16.gmra.mrb[0].mxu0 %v2483
        %v2547 = vpop.f32.mrb[0].mxu0
        %v2548 = vadd.f32 %v2247, %v2547
        %v2549 = vpop.f32.mrb[0].mxu0
        %v2550 = vpop.f32.mrb[0].mxu0
        %v2551 = vadd.f32 %v2247, %v2550
        %v2552 = vpop.f32.mrb[0].mxu0
        %2553 = vmatprep.mubr.bf16.mxu0 0
        %2554 = vmatmul.mubr.bf16.gmra.mrb[0].mxu0 %v2484
        %v2555 = vpop.f32.mrb[0].mxu0
        %v2556 = vadd.f32 %v2247, %v2555
        %v2557 = vpop.f32.mrb[0].mxu0
        %v2558 = vpop.f32.mrb[0].mxu0
        %v2559 = vadd.f32 %v2247, %v2558
        %v2560 = vpop.f32.mrb[0].mxu0
        %2561 = vmatprep.mubr.bf16.mxu0 0
        %2562 = vmatmul.mubr.bf16.gmra.mrb[0].mxu0 %v2485
        %v2563 = vpop.f32.mrb[0].mxu0
        %v2564 = vadd.f32 %v2247, %v2563
        %v2565 = vpop.f32.mrb[0].mxu0
        %v2566 = vpop.f32.mrb[0].mxu0
        %v2567 = vadd.f32 %v2247, %v2566
        %v2568 = vpop.f32.mrb[0].mxu0
        %2569 = vmatprep.mubr.bf16.mxu0 0
        %2570 = vmatmul.mubr.bf16.gmra.mrb[0].mxu0 %v2486
        %v2571 = vpop.f32.mrb[0].mxu0
        %v2572 = vadd.f32 %v2247, %v2571
        %v2573 = vpop.f32.mrb[0].mxu0
        %v2574 = vpop.f32.mrb[0].mxu0
        %v2575 = vadd.f32 %v2247, %v2574
        %v2576 = vpop.f32.mrb[0].mxu0
        %2577 = vmatprep.mubr.bf16.mxu0 0
        %2578 = vmatmul.mubr.bf16.gmra.mrb[0].mxu0 %v2487
        %v2579 = vpop.f32.mrb[0].mxu0
        %v2580 = vadd.f32 %v2247, %v2579
        %v2581 = vpop.f32.mrb[0].mxu0
        %v2582 = vpop.f32.mrb[0].mxu0
        %v2583 = vadd.f32 %v2247, %v2582
        %v2584 = vpop.f32.mrb[0].mxu0
        %2585 = vmatprep.mubr.bf16.mxu0 0
        %2586 = vmatmul.mubr.bf16.gmra.mrb[0].mxu0 %v2488
        %v2587 = vpop.f32.mrb[0].mxu0
        %v2588 = vadd.f32 %v2247, %v2587
        %v2589 = vpop.f32.mrb[0].mxu0
        %v2590 = vpop.f32.mrb[0].mxu0
        %v2591 = vadd.f32 %v2247, %v2590
        %v2592 = vpop.f32.mrb[0].mxu0
        %2593 = vdwg.mxu0
        %v2594 = vmax.f32 %v2532, 0.0
        %v2595 = vmax.f32 %v2535, 0.0
        %v2596 = vmax.f32 %v2540, 0.0
        %v2597 = vmax.f32 %v2543, 0.0
        %v2598 = vmax.f32 %v2548, 0.0
        %v2599 = vmax.f32 %v2551, 0.0
        %v2600 = vmax.f32 %v2556, 0.0
        %v2601 = vmax.f32 %v2559, 0.0
        %v2602 = vmax.f32 %v2564, 0.0
        %v2603 = vmax.f32 %v2567, 0.0
        %v2604 = vmax.f32 %v2572, 0.0
        %v2605 = vmax.f32 %v2575, 0.0
        %v2606 = vmax.f32 %v2580, 0.0
        %v2607 = vmax.f32 %v2583, 0.0
        %v2608 = vmax.f32 %v2588, 0.0
        %v2609 = vmax.f32 %v2591, 0.0
        %v2610 = vpack.c.bf16 %v2595, %v2594
        %v2611 = vpack.c.bf16 %v2597, %v2596
        %v2612 = vpack.c.bf16 %v2599, %v2598
        %v2613 = vpack.c.bf16 %v2601, %v2600
        %v2614 = vpack.c.bf16 %v2603, %v2602
        %v2615 = vpack.c.bf16 %v2605, %v2604
        %v2616 = vpack.c.bf16 %v2607, %v2606
        %v2617 = vpack.c.bf16 %v2609, %v2608
        %2618 = vst [vmem:[#allocation2 + $0x40] sm:$0xff] %v2610
        %2619 = vst [vmem:[#allocation2 + $0x48] sm:$0xff] %v2611
        %2620 = vst [vmem:[#allocation2 + $0x50] sm:$0xff] %v2612
        %2621 = vst [vmem:[#allocation2 + $0x58] sm:$0xff] %v2613
        %2622 = vst [vmem:[#allocation2 + $0x60] sm:$0xff] %v2614
        %2623 = vst [vmem:[#allocation2 + $0x68] sm:$0xff] %v2615
        %2624 = vst [vmem:[#allocation2 + $0x70] sm:$0xff] %v2616
        %2625 = vst [vmem:[#allocation2 + $0x78] sm:$0xff] %v2617
        %v2626 = vpack.c.bf16 %v2097, %v2094
        %v2627 = vpack.c.bf16 %v2105, %v2102
        %v2628 = vpack.c.bf16 %v2113, %v2110
        %v2629 = vpack.c.bf16 %v2121, %v2118
        %v2630 = vpack.c.bf16 %v2129, %v2126
        %v2631 = vpack.c.bf16 %v2137, %v2134
        %v2632 = vpack.c.bf16 %v2145, %v2142
        %v2633 = vpack.c.bf16 %v2153, %v2150
        %v2634 = vld [vmem:[%s284 + $0x80] sm:$0xf]
        %v2635 = vld [vmem:[%s284 + $0x84] sm:$0xf]
        %v2636 = vld [vmem:[%s284 + $0x88] sm:$0xf]
        %v2637 = vld [vmem:[%s284 + $0x8c] sm:$0xf]
        %v2638 = vld [vmem:[%s284 + $0x90] sm:$0xf]
        %v2639 = vld [vmem:[%s284 + $0x94] sm:$0xf]
        %v2640 = vld [vmem:[%s284 + $0x98] sm:$0xf]
        %v2641 = vld [vmem:[%s284 + $0x9c] sm:$0xf]
        %v2642 = vld [vmem:[%s284 + $0xa0] sm:$0xf]
        %v2643 = vld [vmem:[%s284 + $0xa4] sm:$0xf]
        %v2644 = vld [vmem:[%s284 + $0xa8] sm:$0xf]
        %v2645 = vld [vmem:[%s284 + $0xac] sm:$0xf]
        %v2646 = vld [vmem:[%s284 + $0xb0] sm:$0xf]
        %v2647 = vld [vmem:[%s284 + $0xb4] sm:$0xf]
        %v2648 = vld [vmem:[%s284 + $0xb8] sm:$0xf]
        %v2649 = vld [vmem:[%s284 + $0xbc] sm:$0xf]
        %v2666 = vunpack.c.l.b16 %v2634
        %v2667 = vunpack.c.l.b16 %v2635
        %v2668 = vunpack.c.l.b16 %v2636
        %v2669 = vunpack.c.l.b16 %v2637
        %v2670 = vunpack.c.l.b16 %v2638
        %v2671 = vunpack.c.l.b16 %v2639
        %v2672 = vunpack.c.l.b16 %v2640
        %v2673 = vunpack.c.l.b16 %v2641
        %v2674 = vunpack.c.l.b16 %v2642
        %v2675 = vunpack.c.l.b16 %v2643
        %v2676 = vunpack.c.l.b16 %v2644
        %v2677 = vunpack.c.l.b16 %v2645
        %v2678 = vunpack.c.l.b16 %v2646
        %v2679 = vunpack.c.l.b16 %v2647
        %v2680 = vunpack.c.l.b16 %v2648
        %v2681 = vunpack.c.l.b16 %v2649
        %v2682 = vpack.c.b16 %v2667, %v2666
        %v2683 = vpack.c.b16 %v2669, %v2668
        %v2684 = vpack.c.b16 %v2671, %v2670
        %v2685 = vpack.c.b16 %v2673, %v2672
        %v2686 = vpack.c.b16 %v2675, %v2674
        %v2687 = vpack.c.b16 %v2677, %v2676
        %v2688 = vpack.c.b16 %v2679, %v2678
        %v2689 = vpack.c.b16 %v2681, %v2680
        %2698 = vmatprep.subr.bf16.mxu0 0
        %2699 = vmatpush1.bf16.msra.mxu0 %v2626
        %2700 = vmatprep.subr.bf16.mxu0 0
        %2701 = vmatpush1.bf16.msra.mxu0 %v2627
        %2702 = vmatprep.subr.bf16.mxu0 0
        %2703 = vmatpush1.bf16.msra.mxu0 %v2628
        %2704 = vmatprep.subr.bf16.mxu0 0
        %2705 = vmatpush1.bf16.msra.mxu0 %v2629
        %2706 = vmatprep.subr.bf16.mxu0 0
        %2707 = vmatpush1.bf16.msra.mxu0 %v2630
        %2708 = vmatprep.subr.bf16.mxu0 0
        %2709 = vmatpush1.bf16.msra.mxu0 %v2631
        %2710 = vmatprep.subr.bf16.mxu0 0
        %2711 = vmatpush1.bf16.msra.mxu0 %v2632
        %2712 = vmatprep.subr.bf16.mxu0 0
        %2713 = vmatpush1.bf16.msra.mxu0 %v2633
        %2714 = vmatprep.subr.bf16.mxu0 0
        %2715 = vmatpush1.bf16.msra.mxu0 0
        %2716 = vmatprep.subr.bf16.mxu0 0
        %2717 = vmatpush1.bf16.msra.mxu0 0
        %2718 = vmatprep.subr.bf16.mxu0 0
        %2719 = vmatpush1.bf16.msra.mxu0 0
        %2720 = vmatprep.subr.bf16.mxu0 0
        %2721 = vmatpush1.bf16.msra.mxu0 0
        %2722 = vmatprep.subr.bf16.mxu0 0
        %2723 = vmatpush1.bf16.msra.mxu0 0
        %2724 = vmatprep.subr.bf16.mxu0 0
        %2725 = vmatpush1.bf16.msra.mxu0 0
        %2726 = vmatprep.subr.bf16.mxu0 0
        %2727 = vmatpush1.bf16.msra.mxu0 0
        %2728 = vmatprep.subr.bf16.mxu0 0
        %2729 = vmatpush1.bf16.msra.mxu0 0
        %2730 = vmatprep.mubr.bf16.mxu0 0
        %2731 = vmatmul.mubr.bf16.gmra.mrb[0].mxu0 %v2682
        %v2732 = vpop.f32.mrb[0].mxu0
        %v2733 = vadd.f32 %v2247, %v2732
        %v2734 = vpop.f32.mrb[0].mxu0
        %v2735 = vpop.f32.mrb[0].mxu0
        %v2736 = vadd.f32 %v2247, %v2735
        %v2737 = vpop.f32.mrb[0].mxu0
        %2738 = vmatprep.mubr.bf16.mxu0 0
        %2739 = vmatmul.mubr.bf16.gmra.mrb[0].mxu0 %v2683
        %v2740 = vpop.f32.mrb[0].mxu0
        %v2741 = vadd.f32 %v2247, %v2740
        %v2742 = vpop.f32.mrb[0].mxu0
        %v2743 = vpop.f32.mrb[0].mxu0
        %v2744 = vadd.f32 %v2247, %v2743
        %v2745 = vpop.f32.mrb[0].mxu0
        %2746 = vmatprep.mubr.bf16.mxu0 0
        %2747 = vmatmul.mubr.bf16.gmra.mrb[0].mxu0 %v2684
        %v2748 = vpop.f32.mrb[0].mxu0
        %v2749 = vadd.f32 %v2247, %v2748
        %v2750 = vpop.f32.mrb[0].mxu0
        %v2751 = vpop.f32.mrb[0].mxu0
        %v2752 = vadd.f32 %v2247, %v2751
        %v2753 = vpop.f32.mrb[0].mxu0
        %2754 = vmatprep.mubr.bf16.mxu0 0
        %2755 = vmatmul.mubr.bf16.gmra.mrb[0].mxu0 %v2685
        %v2756 = vpop.f32.mrb[0].mxu0
        %v2757 = vadd.f32 %v2247, %v2756
        %v2758 = vpop.f32.mrb[0].mxu0
        %v2759 = vpop.f32.mrb[0].mxu0
        %v2760 = vadd.f32 %v2247, %v2759
        %v2761 = vpop.f32.mrb[0].mxu0
        %2762 = vmatprep.mubr.bf16.mxu0 0
        %2763 = vmatmul.mubr.bf16.gmra.mrb[0].mxu0 %v2686
        %v2764 = vpop.f32.mrb[0].mxu0
        %v2765 = vadd.f32 %v2247, %v2764
        %v2766 = vpop.f32.mrb[0].mxu0
        %v2767 = vpop.f32.mrb[0].mxu0
        %v2768 = vadd.f32 %v2247, %v2767
        %v2769 = vpop.f32.mrb[0].mxu0
        %2770 = vmatprep.mubr.bf16.mxu0 0
        %2771 = vmatmul.mubr.bf16.gmra.mrb[0].mxu0 %v2687
        %v2772 = vpop.f32.mrb[0].mxu0
        %v2773 = vadd.f32 %v2247, %v2772
        %v2774 = vpop.f32.mrb[0].mxu0
        %v2775 = vpop.f32.mrb[0].mxu0
        %v2776 = vadd.f32 %v2247, %v2775
        %v2777 = vpop.f32.mrb[0].mxu0
        %2778 = vmatprep.mubr.bf16.mxu0 0
        %2779 = vmatmul.mubr.bf16.gmra.mrb[0].mxu0 %v2688
        %v2780 = vpop.f32.mrb[0].mxu0
        %v2781 = vadd.f32 %v2247, %v2780
        %v2782 = vpop.f32.mrb[0].mxu0
        %v2783 = vpop.f32.mrb[0].mxu0
        %v2784 = vadd.f32 %v2247, %v2783
        %v2785 = vpop.f32.mrb[0].mxu0
        %2786 = vmatprep.mubr.bf16.mxu0 0
        %2787 = vmatmul.mubr.bf16.gmra.mrb[0].mxu0 %v2689
        %v2788 = vpop.f32.mrb[0].mxu0
        %v2789 = vadd.f32 %v2247, %v2788
        %v2790 = vpop.f32.mrb[0].mxu0
        %v2791 = vpop.f32.mrb[0].mxu0
        %v2792 = vadd.f32 %v2247, %v2791
        %v2793 = vpop.f32.mrb[0].mxu0
        %2794 = vdwg.mxu0
        %v2795 = vmax.f32 %v2733, 0.0
        %v2796 = vmax.f32 %v2736, 0.0
        %v2797 = vmax.f32 %v2741, 0.0
        %v2798 = vmax.f32 %v2744, 0.0
        %v2799 = vmax.f32 %v2749, 0.0
        %v2800 = vmax.f32 %v2752, 0.0
        %v2801 = vmax.f32 %v2757, 0.0
        %v2802 = vmax.f32 %v2760, 0.0
        %v2803 = vmax.f32 %v2765, 0.0
        %v2804 = vmax.f32 %v2768, 0.0
        %v2805 = vmax.f32 %v2773, 0.0
        %v2806 = vmax.f32 %v2776, 0.0
        %v2807 = vmax.f32 %v2781, 0.0
        %v2808 = vmax.f32 %v2784, 0.0
        %v2809 = vmax.f32 %v2789, 0.0
        %v2810 = vmax.f32 %v2792, 0.0
        %v2811 = vpack.c.bf16 %v2796, %v2795
        %v2812 = vpack.c.bf16 %v2798, %v2797
        %v2813 = vpack.c.bf16 %v2800, %v2799
        %v2814 = vpack.c.bf16 %v2802, %v2801
        %v2815 = vpack.c.bf16 %v2804, %v2803
        %v2816 = vpack.c.bf16 %v2806, %v2805
        %v2817 = vpack.c.bf16 %v2808, %v2807
        %v2818 = vpack.c.bf16 %v2810, %v2809
        %2819 = vst [vmem:[#allocation2 + $0x80] sm:$0xff] %v2811
        %2820 = vst [vmem:[#allocation2 + $0x88] sm:$0xff] %v2812
        %2821 = vst [vmem:[#allocation2 + $0x90] sm:$0xff] %v2813
        %2822 = vst [vmem:[#allocation2 + $0x98] sm:$0xff] %v2814
        %2823 = vst [vmem:[#allocation2 + $0xa0] sm:$0xff] %v2815
        %2824 = vst [vmem:[#allocation2 + $0xa8] sm:$0xff] %v2816
        %2825 = vst [vmem:[#allocation2 + $0xb0] sm:$0xff] %v2817
        %2826 = vst [vmem:[#allocation2 + $0xb8] sm:$0xff] %v2818
        %v2827 = vpack.c.bf16 %v2161, %v2158
        %v2828 = vpack.c.bf16 %v2169, %v2166
        %v2829 = vpack.c.bf16 %v2177, %v2174
        %v2830 = vpack.c.bf16 %v2185, %v2182
        %v2831 = vpack.c.bf16 %v2193, %v2190
        %v2832 = vpack.c.bf16 %v2201, %v2198
        %v2833 = vpack.c.bf16 %v2209, %v2206
        %v2834 = vpack.c.bf16 %v2217, %v2214
        %v2835 = vld [vmem:[%s284 + $0xc0] sm:$0xf]
        %v2836 = vld [vmem:[%s284 + $0xc4] sm:$0xf]
        %v2837 = vld [vmem:[%s284 + $0xc8] sm:$0xf]
        %v2838 = vld [vmem:[%s284 + $0xcc] sm:$0xf]
        %v2839 = vld [vmem:[%s284 + $0xd0] sm:$0xf]
        %v2840 = vld [vmem:[%s284 + $0xd4] sm:$0xf]
        %v2841 = vld [vmem:[%s284 + $0xd8] sm:$0xf]
        %v2842 = vld [vmem:[%s284 + $0xdc] sm:$0xf]
        %v2843 = vld [vmem:[%s284 + $0xe0] sm:$0xf]
        %v2844 = vld [vmem:[%s284 + $0xe4] sm:$0xf]
        %v2845 = vld [vmem:[%s284 + $0xe8] sm:$0xf]
        %v2846 = vld [vmem:[%s284 + $0xec] sm:$0xf]
        %v2847 = vld [vmem:[%s284 + $0xf0] sm:$0xf]
        %v2848 = vld [vmem:[%s284 + $0xf4] sm:$0xf]
        %v2849 = vld [vmem:[%s284 + $0xf8] sm:$0xf]
        %v2850 = vld [vmem:[%s284 + $0xfc] sm:$0xf]
        %v2867 = vunpack.c.l.b16 %v2835
        %v2868 = vunpack.c.l.b16 %v2836
        %v2869 = vunpack.c.l.b16 %v2837
        %v2870 = vunpack.c.l.b16 %v2838
        %v2871 = vunpack.c.l.b16 %v2839
        %v2872 = vunpack.c.l.b16 %v2840
        %v2873 = vunpack.c.l.b16 %v2841
        %v2874 = vunpack.c.l.b16 %v2842
        %v2875 = vunpack.c.l.b16 %v2843
        %v2876 = vunpack.c.l.b16 %v2844
        %v2877 = vunpack.c.l.b16 %v2845
        %v2878 = vunpack.c.l.b16 %v2846
        %v2879 = vunpack.c.l.b16 %v2847
        %v2880 = vunpack.c.l.b16 %v2848
        %v2881 = vunpack.c.l.b16 %v2849
        %v2882 = vunpack.c.l.b16 %v2850
        %v2883 = vpack.c.b16 %v2868, %v2867
        %v2884 = vpack.c.b16 %v2870, %v2869
        %v2885 = vpack.c.b16 %v2872, %v2871
        %v2886 = vpack.c.b16 %v2874, %v2873
        %v2887 = vpack.c.b16 %v2876, %v2875
        %v2888 = vpack.c.b16 %v2878, %v2877
        %v2889 = vpack.c.b16 %v2880, %v2879
        %v2890 = vpack.c.b16 %v2882, %v2881
        %2899 = vmatprep.subr.bf16.mxu0 0
        %2900 = vmatpush1.bf16.msra.mxu0 %v2827
        %2901 = vmatprep.subr.bf16.mxu0 0
        %2902 = vmatpush1.bf16.msra.mxu0 %v2828
        %2903 = vmatprep.subr.bf16.mxu0 0
        %2904 = vmatpush1.bf16.msra.mxu0 %v2829
        %2905 = vmatprep.subr.bf16.mxu0 0
        %2906 = vmatpush1.bf16.msra.mxu0 %v2830
        %2907 = vmatprep.subr.bf16.mxu0 0
        %2908 = vmatpush1.bf16.msra.mxu0 %v2831
        %2909 = vmatprep.subr.bf16.mxu0 0
        %2910 = vmatpush1.bf16.msra.mxu0 %v2832
        %2911 = vmatprep.subr.bf16.mxu0 0
        %2912 = vmatpush1.bf16.msra.mxu0 %v2833
        %2913 = vmatprep.subr.bf16.mxu0 0
        %2914 = vmatpush1.bf16.msra.mxu0 %v2834
        %2915 = vmatprep.subr.bf16.mxu0 0
        %2916 = vmatpush1.bf16.msra.mxu0 0
        %2917 = vmatprep.subr.bf16.mxu0 0
        %2918 = vmatpush1.bf16.msra.mxu0 0
        %2919 = vmatprep.subr.bf16.mxu0 0
        %2920 = vmatpush1.bf16.msra.mxu0 0
        %2921 = vmatprep.subr.bf16.mxu0 0
        %2922 = vmatpush1.bf16.msra.mxu0 0
        %2923 = vmatprep.subr.bf16.mxu0 0
        %2924 = vmatpush1.bf16.msra.mxu0 0
        %2925 = vmatprep.subr.bf16.mxu0 0
        %2926 = vmatpush1.bf16.msra.mxu0 0
        %2927 = vmatprep.subr.bf16.mxu0 0
        %2928 = vmatpush1.bf16.msra.mxu0 0
        %2929 = vmatprep.subr.bf16.mxu0 0
        %2930 = vmatpush1.bf16.msra.mxu0 0
        %2931 = vmatprep.mubr.bf16.mxu0 0
        %2932 = vmatmul.mubr.bf16.gmra.mrb[0].mxu0 %v2883
        %v2933 = vpop.f32.mrb[0].mxu0
        %v2934 = vadd.f32 %v2247, %v2933
        %v2935 = vpop.f32.mrb[0].mxu0
        %v2936 = vpop.f32.mrb[0].mxu0
        %v2937 = vadd.f32 %v2247, %v2936
        %v2938 = vpop.f32.mrb[0].mxu0
        %2939 = vmatprep.mubr.bf16.mxu0 0
        %2940 = vmatmul.mubr.bf16.gmra.mrb[0].mxu0 %v2884
        %v2941 = vpop.f32.mrb[0].mxu0
        %v2942 = vadd.f32 %v2247, %v2941
        %v2943 = vpop.f32.mrb[0].mxu0
        %v2944 = vpop.f32.mrb[0].mxu0
        %v2945 = vadd.f32 %v2247, %v2944
        %v2946 = vpop.f32.mrb[0].mxu0
        %2947 = vmatprep.mubr.bf16.mxu0 0
        %2948 = vmatmul.mubr.bf16.gmra.mrb[0].mxu0 %v2885
        %v2949 = vpop.f32.mrb[0].mxu0
        %v2950 = vadd.f32 %v2247, %v2949
        %v2951 = vpop.f32.mrb[0].mxu0
        %v2952 = vpop.f32.mrb[0].mxu0
        %v2953 = vadd.f32 %v2247, %v2952
        %v2954 = vpop.f32.mrb[0].mxu0
        %2955 = vmatprep.mubr.bf16.mxu0 0
        %2956 = vmatmul.mubr.bf16.gmra.mrb[0].mxu0 %v2886
        %v2957 = vpop.f32.mrb[0].mxu0
        %v2958 = vadd.f32 %v2247, %v2957
        %v2959 = vpop.f32.mrb[0].mxu0
        %v2960 = vpop.f32.mrb[0].mxu0
        %v2961 = vadd.f32 %v2247, %v2960
        %v2962 = vpop.f32.mrb[0].mxu0
        %2963 = vmatprep.mubr.bf16.mxu0 0
        %2964 = vmatmul.mubr.bf16.gmra.mrb[0].mxu0 %v2887
        %v2965 = vpop.f32.mrb[0].mxu0
        %v2966 = vadd.f32 %v2247, %v2965
        %v2967 = vpop.f32.mrb[0].mxu0
        %v2968 = vpop.f32.mrb[0].mxu0
        %v2969 = vadd.f32 %v2247, %v2968
        %v2970 = vpop.f32.mrb[0].mxu0
        %2971 = vmatprep.mubr.bf16.mxu0 0
        %2972 = vmatmul.mubr.bf16.gmra.mrb[0].mxu0 %v2888
        %v2973 = vpop.f32.mrb[0].mxu0
        %v2974 = vadd.f32 %v2247, %v2973
        %v2975 = vpop.f32.mrb[0].mxu0
        %v2976 = vpop.f32.mrb[0].mxu0
        %v2977 = vadd.f32 %v2247, %v2976
        %v2978 = vpop.f32.mrb[0].mxu0
        %2979 = vmatprep.mubr.bf16.mxu0 0
        %2980 = vmatmul.mubr.bf16.gmra.mrb[0].mxu0 %v2889
        %v2981 = vpop.f32.mrb[0].mxu0
        %v2982 = vadd.f32 %v2247, %v2981
        %v2983 = vpop.f32.mrb[0].mxu0
        %v2984 = vpop.f32.mrb[0].mxu0
        %v2985 = vadd.f32 %v2247, %v2984
        %v2986 = vpop.f32.mrb[0].mxu0
        %2987 = vmatprep.mubr.bf16.mxu0 0
        %2988 = vmatmul.mubr.bf16.gmra.mrb[0].mxu0 %v2890
        %v2989 = vpop.f32.mrb[0].mxu0
        %v2990 = vadd.f32 %v2247, %v2989
        %v2991 = vpop.f32.mrb[0].mxu0
        %v2992 = vpop.f32.mrb[0].mxu0
        %v2993 = vadd.f32 %v2247, %v2992
        %v2994 = vpop.f32.mrb[0].mxu0
        %2995 = vdwg.mxu0
        %v2996 = vmax.f32 %v2934, 0.0
        %v2997 = vmax.f32 %v2937, 0.0
        %v2998 = vmax.f32 %v2942, 0.0
        %v2999 = vmax.f32 %v2945, 0.0
        %v3000 = vmax.f32 %v2950, 0.0
        %v3001 = vmax.f32 %v2953, 0.0
        %v3002 = vmax.f32 %v2958, 0.0
        %v3003 = vmax.f32 %v2961, 0.0
        %v3004 = vmax.f32 %v2966, 0.0
        %v3005 = vmax.f32 %v2969, 0.0
        %v3006 = vmax.f32 %v2974, 0.0
        %v3007 = vmax.f32 %v2977, 0.0
        %v3008 = vmax.f32 %v2982, 0.0
        %v3009 = vmax.f32 %v2985, 0.0
        %v3010 = vmax.f32 %v2990, 0.0
        %v3011 = vmax.f32 %v2993, 0.0
        %v3012 = vpack.c.bf16 %v2997, %v2996
        %v3013 = vpack.c.bf16 %v2999, %v2998
        %v3014 = vpack.c.bf16 %v3001, %v3000
        %v3015 = vpack.c.bf16 %v3003, %v3002
        %v3016 = vpack.c.bf16 %v3005, %v3004
        %v3017 = vpack.c.bf16 %v3007, %v3006
        %v3018 = vpack.c.bf16 %v3009, %v3008
        %v3019 = vpack.c.bf16 %v3011, %v3010
        %3020 = vst [vmem:[#allocation2 + $0xc0] sm:$0xff] %v3012
        %3021 = vst [vmem:[#allocation2 + $0xc8] sm:$0xff] %v3013
        %3022 = vst [vmem:[#allocation2 + $0xd0] sm:$0xff] %v3014
        %3023 = vst [vmem:[#allocation2 + $0xd8] sm:$0xff] %v3015
        %3024 = vst [vmem:[#allocation2 + $0xe0] sm:$0xff] %v3016
        %3025 = vst [vmem:[#allocation2 + $0xe8] sm:$0xff] %v3017
        %3026 = vst [vmem:[#allocation2 + $0xf0] sm:$0xff] %v3018
        %3027 = vst [vmem:[#allocation2 + $0xf8] sm:$0xff] %v3019
        %v3028 = vld [vmem:[#allocation10 + $0x80] sm:$0xf]
        %v3029 = vld [vmem:[#allocation10 + $0x84] sm:$0xf]
        %v3030 = vld [vmem:[#allocation10 + $0x88] sm:$0xf]
        %v3031 = vld [vmem:[#allocation10 + $0x8c] sm:$0xf]
        %v3032 = vld [vmem:[#allocation10 + $0x90] sm:$0xf]
        %v3033 = vld [vmem:[#allocation10 + $0x94] sm:$0xf]
        %v3034 = vld [vmem:[#allocation10 + $0x98] sm:$0xf]
        %v3035 = vld [vmem:[#allocation10 + $0x9c] sm:$0xf]
        %v3036 = vld [vmem:[#allocation10 + $0xa0] sm:$0xf]
        %v3037 = vld [vmem:[#allocation10 + $0xa4] sm:$0xf]
        %v3038 = vld [vmem:[#allocation10 + $0xa8] sm:$0xf]
        %v3039 = vld [vmem:[#allocation10 + $0xac] sm:$0xf]
        %v3040 = vld [vmem:[#allocation10 + $0xb0] sm:$0xf]
        %v3041 = vld [vmem:[#allocation10 + $0xb4] sm:$0xf]
        %v3042 = vld [vmem:[#allocation10 + $0xb8] sm:$0xf]
        %v3043 = vld [vmem:[#allocation10 + $0xbc] sm:$0xf]
        %v3044 = vld [vmem:[#allocation12 + $0x2] sm:$0x1]
        %v3045 = vld [vmem:[#allocation2] sm:$0xff]
        %v3046 = vld [vmem:[#allocation2 + $0x8] sm:$0xff]
        %v3047 = vld [vmem:[#allocation2 + $0x10] sm:$0xff]
        %v3048 = vld [vmem:[#allocation2 + $0x18] sm:$0xff]
        %v3049 = vld [vmem:[#allocation2 + $0x20] sm:$0xff]
        %v3050 = vld [vmem:[#allocation2 + $0x28] sm:$0xff]
        %v3051 = vld [vmem:[#allocation2 + $0x30] sm:$0xff]
        %v3052 = vld [vmem:[#allocation2 + $0x38] sm:$0xff]
        %v3053 = vld [vmem:[#allocation2 + $0x40] sm:$0xff]
        %v3054 = vld [vmem:[#allocation2 + $0x48] sm:$0xff]
        %v3055 = vld [vmem:[#allocation2 + $0x50] sm:$0xff]
        %v3056 = vld [vmem:[#allocation2 + $0x58] sm:$0xff]
        %v3057 = vld [vmem:[#allocation2 + $0x60] sm:$0xff]
        %v3058 = vld [vmem:[#allocation2 + $0x68] sm:$0xff]
        %v3059 = vld [vmem:[#allocation2 + $0x70] sm:$0xff]
        %v3060 = vld [vmem:[#allocation2 + $0x78] sm:$0xff]
        %v3061 = vld [vmem:[#allocation2 + $0x80] sm:$0xff]
        %v3062 = vld [vmem:[#allocation2 + $0x88] sm:$0xff]
        %v3063 = vld [vmem:[#allocation2 + $0x90] sm:$0xff]
        %v3064 = vld [vmem:[#allocation2 + $0x98] sm:$0xff]
        %v3065 = vld [vmem:[#allocation2 + $0xa0] sm:$0xff]
        %v3066 = vld [vmem:[#allocation2 + $0xa8] sm:$0xff]
        %v3067 = vld [vmem:[#allocation2 + $0xb0] sm:$0xff]
        %v3068 = vld [vmem:[#allocation2 + $0xb8] sm:$0xff]
        %v3069 = vld [vmem:[#allocation2 + $0xc0] sm:$0xff]
        %v3070 = vld [vmem:[#allocation2 + $0xc8] sm:$0xff]
        %v3071 = vld [vmem:[#allocation2 + $0xd0] sm:$0xff]
        %v3072 = vld [vmem:[#allocation2 + $0xd8] sm:$0xff]
        %v3073 = vld [vmem:[#allocation2 + $0xe0] sm:$0xff]
        %v3074 = vld [vmem:[#allocation2 + $0xe8] sm:$0xff]
        %v3075 = vld [vmem:[#allocation2 + $0xf0] sm:$0xff]
        %v3076 = vld [vmem:[#allocation2 + $0xf8] sm:$0xff]
        %v3093 = vunpack.c.l.b16 %v3028
        %v3094 = vunpack.c.l.b16 %v3029
        %v3095 = vunpack.c.l.b16 %v3030
        %v3096 = vunpack.c.l.b16 %v3031
        %v3097 = vunpack.c.l.b16 %v3032
        %v3098 = vunpack.c.l.b16 %v3033
        %v3099 = vunpack.c.l.b16 %v3034
        %v3100 = vunpack.c.l.b16 %v3035
        %v3101 = vunpack.c.l.b16 %v3036
        %v3102 = vunpack.c.l.b16 %v3037
        %v3103 = vunpack.c.l.b16 %v3038
        %v3104 = vunpack.c.l.b16 %v3039
        %v3105 = vunpack.c.l.b16 %v3040
        %v3106 = vunpack.c.l.b16 %v3041
        %v3107 = vunpack.c.l.b16 %v3042
        %v3108 = vunpack.c.l.b16 %v3043
        %v3109 = vpack.c.b16 %v3094, %v3093
        %v3110 = vpack.c.b16 %v3096, %v3095
        %v3111 = vpack.c.b16 %v3098, %v3097
        %v3112 = vpack.c.b16 %v3100, %v3099
        %v3113 = vpack.c.b16 %v3102, %v3101
        %v3114 = vpack.c.b16 %v3104, %v3103
        %v3115 = vpack.c.b16 %v3106, %v3105
        %v3116 = vpack.c.b16 %v3108, %v3107
        %3125 = vmatprep.subr.bf16.mxu0 0
        %3126 = vmatpush1.bf16.msra.mxu0 %v3109
        %3127 = vmatprep.subr.bf16.mxu0 0
        %3128 = vmatpush1.bf16.msra.mxu0 %v3110
        %3129 = vmatprep.subr.bf16.mxu0 0
        %3130 = vmatpush1.bf16.msra.mxu0 %v3111
        %3131 = vmatprep.subr.bf16.mxu0 0
        %3132 = vmatpush1.bf16.msra.mxu0 %v3112
        %3133 = vmatprep.subr.bf16.mxu0 0
        %3134 = vmatpush1.bf16.msra.mxu0 %v3113
        %3135 = vmatprep.subr.bf16.mxu0 0
        %3136 = vmatpush1.bf16.msra.mxu0 %v3114
        %3137 = vmatprep.subr.bf16.mxu0 0
        %3138 = vmatpush1.bf16.msra.mxu0 %v3115
        %3139 = vmatprep.subr.bf16.mxu0 0
        %3140 = vmatpush1.bf16.msra.mxu0 %v3116
        %3141 = vmatprep.subr.bf16.mxu0 0
        %3142 = vmatpush1.bf16.msra.mxu0 0
        %3143 = vmatprep.subr.bf16.mxu0 0
        %3144 = vmatpush1.bf16.msra.mxu0 0
        %3145 = vmatprep.subr.bf16.mxu0 0
        %3146 = vmatpush1.bf16.msra.mxu0 0
        %3147 = vmatprep.subr.bf16.mxu0 0
        %3148 = vmatpush1.bf16.msra.mxu0 0
        %3149 = vmatprep.subr.bf16.mxu0 0
        %3150 = vmatpush1.bf16.msra.mxu0 0
        %3151 = vmatprep.subr.bf16.mxu0 0
        %3152 = vmatpush1.bf16.msra.mxu0 0
        %3153 = vmatprep.subr.bf16.mxu0 0
        %3154 = vmatpush1.bf16.msra.mxu0 0
        %3155 = vmatprep.subr.bf16.mxu0 0
        %3156 = vmatpush1.bf16.msra.mxu0 0
        %3157 = vmatprep.mubr.bf16.mxu0 0
        %3158 = vmatmul.mubr.bf16.gmra.mrb[0].mxu0 %v3045
        %v3159 = vpop.f32.mrb[0].mxu0
        %v3160 = vadd.f32 0.0, %v3159
        %v3161 = vpop.f32.mrb[0].mxu0
        %v3162 = vpop.f32.mrb[0].mxu0
        %v3163 = vadd.f32 0.0, %v3162
        %v3164 = vpop.f32.mrb[0].mxu0
        %3165 = vmatprep.mubr.bf16.mxu0 0
        %3166 = vmatmul.mubr.bf16.gmra.mrb[0].mxu0 %v3046
        %v3167 = vpop.f32.mrb[0].mxu0
        %v3168 = vadd.f32 0.0, %v3167
        %v3169 = vpop.f32.mrb[0].mxu0
        %v3170 = vpop.f32.mrb[0].mxu0
        %v3171 = vadd.f32 0.0, %v3170
        %v3172 = vpop.f32.mrb[0].mxu0
        %3173 = vmatprep.mubr.bf16.mxu0 0
        %3174 = vmatmul.mubr.bf16.gmra.mrb[0].mxu0 %v3047
        %v3175 = vpop.f32.mrb[0].mxu0
        %v3176 = vadd.f32 0.0, %v3175
        %v3177 = vpop.f32.mrb[0].mxu0
        %v3178 = vpop.f32.mrb[0].mxu0
        %v3179 = vadd.f32 0.0, %v3178
        %v3180 = vpop.f32.mrb[0].mxu0
        %3181 = vmatprep.mubr.bf16.mxu0 0
        %3182 = vmatmul.mubr.bf16.gmra.mrb[0].mxu0 %v3048
        %v3183 = vpop.f32.mrb[0].mxu0
        %v3184 = vadd.f32 0.0, %v3183
        %v3185 = vpop.f32.mrb[0].mxu0
        %v3186 = vpop.f32.mrb[0].mxu0
        %v3187 = vadd.f32 0.0, %v3186
        %v3188 = vpop.f32.mrb[0].mxu0
        %3189 = vmatprep.mubr.bf16.mxu0 0
        %3190 = vmatmul.mubr.bf16.gmra.mrb[0].mxu0 %v3049
        %v3191 = vpop.f32.mrb[0].mxu0
        %v3192 = vadd.f32 0.0, %v3191
        %v3193 = vpop.f32.mrb[0].mxu0
        %v3194 = vpop.f32.mrb[0].mxu0
        %v3195 = vadd.f32 0.0, %v3194
        %v3196 = vpop.f32.mrb[0].mxu0
        %3197 = vmatprep.mubr.bf16.mxu0 0
        %3198 = vmatmul.mubr.bf16.gmra.mrb[0].mxu0 %v3050
        %v3199 = vpop.f32.mrb[0].mxu0
        %v3200 = vadd.f32 0.0, %v3199
        %v3201 = vpop.f32.mrb[0].mxu0
        %v3202 = vpop.f32.mrb[0].mxu0
        %v3203 = vadd.f32 0.0, %v3202
        %v3204 = vpop.f32.mrb[0].mxu0
        %3205 = vmatprep.mubr.bf16.mxu0 0
        %3206 = vmatmul.mubr.bf16.gmra.mrb[0].mxu0 %v3051
        %v3207 = vpop.f32.mrb[0].mxu0
        %v3208 = vadd.f32 0.0, %v3207
        %v3209 = vpop.f32.mrb[0].mxu0
        %v3210 = vpop.f32.mrb[0].mxu0
        %v3211 = vadd.f32 0.0, %v3210
        %v3212 = vpop.f32.mrb[0].mxu0
        %3213 = vmatprep.mubr.bf16.mxu0 0
        %3214 = vmatmul.mubr.bf16.gmra.mrb[0].mxu0 %v3052
        %v3215 = vpop.f32.mrb[0].mxu0
        %v3216 = vadd.f32 0.0, %v3215
        %v3217 = vpop.f32.mrb[0].mxu0
        %v3218 = vpop.f32.mrb[0].mxu0
        %v3219 = vadd.f32 0.0, %v3218
        %v3220 = vpop.f32.mrb[0].mxu0
        %3221 = vmatprep.mubr.bf16.mxu0 0
        %3222 = vmatmul.mubr.bf16.gmra.mrb[0].mxu0 %v3053
        %v3223 = vpop.f32.mrb[0].mxu0
        %v3224 = vadd.f32 0.0, %v3223
        %v3225 = vpop.f32.mrb[0].mxu0
        %v3226 = vpop.f32.mrb[0].mxu0
        %v3227 = vadd.f32 0.0, %v3226
        %v3228 = vpop.f32.mrb[0].mxu0
        %3229 = vmatprep.mubr.bf16.mxu0 0
        %3230 = vmatmul.mubr.bf16.gmra.mrb[0].mxu0 %v3054
        %v3231 = vpop.f32.mrb[0].mxu0
        %v3232 = vadd.f32 0.0, %v3231
        %v3233 = vpop.f32.mrb[0].mxu0
        %v3234 = vpop.f32.mrb[0].mxu0
        %v3235 = vadd.f32 0.0, %v3234
        %v3236 = vpop.f32.mrb[0].mxu0
        %3237 = vmatprep.mubr.bf16.mxu0 0
        %3238 = vmatmul.mubr.bf16.gmra.mrb[0].mxu0 %v3055
        %v3239 = vpop.f32.mrb[0].mxu0
        %v3240 = vadd.f32 0.0, %v3239
        %v3241 = vpop.f32.mrb[0].mxu0
        %v3242 = vpop.f32.mrb[0].mxu0
        %v3243 = vadd.f32 0.0, %v3242
        %v3244 = vpop.f32.mrb[0].mxu0
        %3245 = vmatprep.mubr.bf16.mxu0 0
        %3246 = vmatmul.mubr.bf16.gmra.mrb[0].mxu0 %v3056
        %v3247 = vpop.f32.mrb[0].mxu0
        %v3248 = vadd.f32 0.0, %v3247
        %v3249 = vpop.f32.mrb[0].mxu0
        %v3250 = vpop.f32.mrb[0].mxu0
        %v3251 = vadd.f32 0.0, %v3250
        %v3252 = vpop.f32.mrb[0].mxu0
        %3253 = vmatprep.mubr.bf16.mxu0 0
        %3254 = vmatmul.mubr.bf16.gmra.mrb[0].mxu0 %v3057
        %v3255 = vpop.f32.mrb[0].mxu0
        %v3256 = vadd.f32 0.0, %v3255
        %v3257 = vpop.f32.mrb[0].mxu0
        %v3258 = vpop.f32.mrb[0].mxu0
        %v3259 = vadd.f32 0.0, %v3258
        %v3260 = vpop.f32.mrb[0].mxu0
        %3261 = vmatprep.mubr.bf16.mxu0 0
        %3262 = vmatmul.mubr.bf16.gmra.mrb[0].mxu0 %v3058
        %v3263 = vpop.f32.mrb[0].mxu0
        %v3264 = vadd.f32 0.0, %v3263
        %v3265 = vpop.f32.mrb[0].mxu0
        %v3266 = vpop.f32.mrb[0].mxu0
        %v3267 = vadd.f32 0.0, %v3266
        %v3268 = vpop.f32.mrb[0].mxu0
        %3269 = vmatprep.mubr.bf16.mxu0 0
        %3270 = vmatmul.mubr.bf16.gmra.mrb[0].mxu0 %v3059
        %v3271 = vpop.f32.mrb[0].mxu0
        %v3272 = vadd.f32 0.0, %v3271
        %v3273 = vpop.f32.mrb[0].mxu0
        %v3274 = vpop.f32.mrb[0].mxu0
        %v3275 = vadd.f32 0.0, %v3274
        %v3276 = vpop.f32.mrb[0].mxu0
        %3277 = vmatprep.mubr.bf16.mxu0 0
        %3278 = vmatmul.mubr.bf16.gmra.mrb[0].mxu0 %v3060
        %v3279 = vpop.f32.mrb[0].mxu0
        %v3280 = vadd.f32 0.0, %v3279
        %v3281 = vpop.f32.mrb[0].mxu0
        %v3282 = vpop.f32.mrb[0].mxu0
        %v3283 = vadd.f32 0.0, %v3282
        %v3284 = vpop.f32.mrb[0].mxu0
        %3285 = vmatprep.mubr.bf16.mxu0 0
        %3286 = vmatmul.mubr.bf16.gmra.mrb[0].mxu0 %v3061
        %v3287 = vpop.f32.mrb[0].mxu0
        %v3288 = vadd.f32 0.0, %v3287
        %v3289 = vpop.f32.mrb[0].mxu0
        %v3290 = vpop.f32.mrb[0].mxu0
        %v3291 = vadd.f32 0.0, %v3290
        %v3292 = vpop.f32.mrb[0].mxu0
        %3293 = vmatprep.mubr.bf16.mxu0 0
        %3294 = vmatmul.mubr.bf16.gmra.mrb[0].mxu0 %v3062
        %v3295 = vpop.f32.mrb[0].mxu0
        %v3296 = vadd.f32 0.0, %v3295
        %v3297 = vpop.f32.mrb[0].mxu0
        %v3298 = vpop.f32.mrb[0].mxu0
        %v3299 = vadd.f32 0.0, %v3298
        %v3300 = vpop.f32.mrb[0].mxu0
        %3301 = vmatprep.mubr.bf16.mxu0 0
        %3302 = vmatmul.mubr.bf16.gmra.mrb[0].mxu0 %v3063
        %v3303 = vpop.f32.mrb[0].mxu0
        %v3304 = vadd.f32 0.0, %v3303
        %v3305 = vpop.f32.mrb[0].mxu0
        %v3306 = vpop.f32.mrb[0].mxu0
        %v3307 = vadd.f32 0.0, %v3306
        %v3308 = vpop.f32.mrb[0].mxu0
        %3309 = vmatprep.mubr.bf16.mxu0 0
        %3310 = vmatmul.mubr.bf16.gmra.mrb[0].mxu0 %v3064
        %v3311 = vpop.f32.mrb[0].mxu0
        %v3312 = vadd.f32 0.0, %v3311
        %v3313 = vpop.f32.mrb[0].mxu0
        %v3314 = vpop.f32.mrb[0].mxu0
        %v3315 = vadd.f32 0.0, %v3314
        %v3316 = vpop.f32.mrb[0].mxu0
        %3317 = vmatprep.mubr.bf16.mxu0 0
        %3318 = vmatmul.mubr.bf16.gmra.mrb[0].mxu0 %v3065
        %v3319 = vpop.f32.mrb[0].mxu0
        %v3320 = vadd.f32 0.0, %v3319
        %v3321 = vpop.f32.mrb[0].mxu0
        %v3322 = vpop.f32.mrb[0].mxu0
        %v3323 = vadd.f32 0.0, %v3322
        %v3324 = vpop.f32.mrb[0].mxu0
        %3325 = vmatprep.mubr.bf16.mxu0 0
        %3326 = vmatmul.mubr.bf16.gmra.mrb[0].mxu0 %v3066
        %v3327 = vpop.f32.mrb[0].mxu0
        %v3328 = vadd.f32 0.0, %v3327
        %v3329 = vpop.f32.mrb[0].mxu0
        %v3330 = vpop.f32.mrb[0].mxu0
        %v3331 = vadd.f32 0.0, %v3330
        %v3332 = vpop.f32.mrb[0].mxu0
        %3333 = vmatprep.mubr.bf16.mxu0 0
        %3334 = vmatmul.mubr.bf16.gmra.mrb[0].mxu0 %v3067
        %v3335 = vpop.f32.mrb[0].mxu0
        %v3336 = vadd.f32 0.0, %v3335
        %v3337 = vpop.f32.mrb[0].mxu0
        %v3338 = vpop.f32.mrb[0].mxu0
        %v3339 = vadd.f32 0.0, %v3338
        %v3340 = vpop.f32.mrb[0].mxu0
        %3341 = vmatprep.mubr.bf16.mxu0 0
        %3342 = vmatmul.mubr.bf16.gmra.mrb[0].mxu0 %v3068
        %v3343 = vpop.f32.mrb[0].mxu0
        %v3344 = vadd.f32 0.0, %v3343
        %v3345 = vpop.f32.mrb[0].mxu0
        %v3346 = vpop.f32.mrb[0].mxu0
        %v3347 = vadd.f32 0.0, %v3346
        %v3348 = vpop.f32.mrb[0].mxu0
        %3349 = vmatprep.mubr.bf16.mxu0 0
        %3350 = vmatmul.mubr.bf16.gmra.mrb[0].mxu0 %v3069
        %v3351 = vpop.f32.mrb[0].mxu0
        %v3352 = vadd.f32 0.0, %v3351
        %v3353 = vpop.f32.mrb[0].mxu0
        %v3354 = vpop.f32.mrb[0].mxu0
        %v3355 = vadd.f32 0.0, %v3354
        %v3356 = vpop.f32.mrb[0].mxu0
        %3357 = vmatprep.mubr.bf16.mxu0 0
        %3358 = vmatmul.mubr.bf16.gmra.mrb[0].mxu0 %v3070
        %v3359 = vpop.f32.mrb[0].mxu0
        %v3360 = vadd.f32 0.0, %v3359
        %v3361 = vpop.f32.mrb[0].mxu0
        %v3362 = vpop.f32.mrb[0].mxu0
        %v3363 = vadd.f32 0.0, %v3362
        %v3364 = vpop.f32.mrb[0].mxu0
        %3365 = vmatprep.mubr.bf16.mxu0 0
        %3366 = vmatmul.mubr.bf16.gmra.mrb[0].mxu0 %v3071
        %v3367 = vpop.f32.mrb[0].mxu0
        %v3368 = vadd.f32 0.0, %v3367
        %v3369 = vpop.f32.mrb[0].mxu0
        %v3370 = vpop.f32.mrb[0].mxu0
        %v3371 = vadd.f32 0.0, %v3370
        %v3372 = vpop.f32.mrb[0].mxu0
        %3373 = vmatprep.mubr.bf16.mxu0 0
        %3374 = vmatmul.mubr.bf16.gmra.mrb[0].mxu0 %v3072
        %v3375 = vpop.f32.mrb[0].mxu0
        %v3376 = vadd.f32 0.0, %v3375
        %v3377 = vpop.f32.mrb[0].mxu0
        %v3378 = vpop.f32.mrb[0].mxu0
        %v3379 = vadd.f32 0.0, %v3378
        %v3380 = vpop.f32.mrb[0].mxu0
        %3381 = vmatprep.mubr.bf16.mxu0 0
        %3382 = vmatmul.mubr.bf16.gmra.mrb[0].mxu0 %v3073
        %v3383 = vpop.f32.mrb[0].mxu0
        %v3384 = vadd.f32 0.0, %v3383
        %v3385 = vpop.f32.mrb[0].mxu0
        %v3386 = vpop.f32.mrb[0].mxu0
        %v3387 = vadd.f32 0.0, %v3386
        %v3388 = vpop.f32.mrb[0].mxu0
        %3389 = vmatprep.mubr.bf16.mxu0 0
        %3390 = vmatmul.mubr.bf16.gmra.mrb[0].mxu0 %v3074
        %v3391 = vpop.f32.mrb[0].mxu0
        %v3392 = vadd.f32 0.0, %v3391
        %v3393 = vpop.f32.mrb[0].mxu0
        %v3394 = vpop.f32.mrb[0].mxu0
        %v3395 = vadd.f32 0.0, %v3394
        %v3396 = vpop.f32.mrb[0].mxu0
        %3397 = vmatprep.mubr.bf16.mxu0 0
        %3398 = vmatmul.mubr.bf16.gmra.mrb[0].mxu0 %v3075
        %v3399 = vpop.f32.mrb[0].mxu0
        %v3400 = vadd.f32 0.0, %v3399
        %v3401 = vpop.f32.mrb[0].mxu0
        %v3402 = vpop.f32.mrb[0].mxu0
        %v3403 = vadd.f32 0.0, %v3402
        %v3404 = vpop.f32.mrb[0].mxu0
        %3405 = vmatprep.mubr.bf16.mxu0 0
        %3406 = vmatmul.mubr.bf16.gmra.mrb[0].mxu0 %v3076
        %v3407 = vpop.f32.mrb[0].mxu0
        %v3408 = vadd.f32 0.0, %v3407
        %v3409 = vpop.f32.mrb[0].mxu0
        %v3410 = vpop.f32.mrb[0].mxu0
        %v3411 = vadd.f32 0.0, %v3410
        %v3412 = vpop.f32.mrb[0].mxu0
        %3413 = vdwg.mxu0
        %v3414 = vpack.c.bf16 %v3163, %v3160
        %v3415 = vpack.c.bf16 %v3171, %v3168
        %v3416 = vpack.c.bf16 %v3179, %v3176
        %v3417 = vpack.c.bf16 %v3187, %v3184
        %v3418 = vpack.c.bf16 %v3195, %v3192
        %v3419 = vpack.c.bf16 %v3203, %v3200
        %v3420 = vpack.c.bf16 %v3211, %v3208
        %v3421 = vpack.c.bf16 %v3219, %v3216
        %v3422 = vld [vmem:[%s284] sm:$0xf]
        %v3423 = vld [vmem:[%s284 + $0x4] sm:$0xf]
        %v3424 = vld [vmem:[%s284 + $0x8] sm:$0xf]
        %v3425 = vld [vmem:[%s284 + $0xc] sm:$0xf]
        %v3426 = vld [vmem:[%s284 + $0x10] sm:$0xf]
        %v3427 = vld [vmem:[%s284 + $0x14] sm:$0xf]
        %v3428 = vld [vmem:[%s284 + $0x18] sm:$0xf]
        %v3429 = vld [vmem:[%s284 + $0x1c] sm:$0xf]
        %v3430 = vld [vmem:[%s284 + $0x20] sm:$0xf]
        %v3431 = vld [vmem:[%s284 + $0x24] sm:$0xf]
        %v3432 = vld [vmem:[%s284 + $0x28] sm:$0xf]
        %v3433 = vld [vmem:[%s284 + $0x2c] sm:$0xf]
        %v3434 = vld [vmem:[%s284 + $0x30] sm:$0xf]
        %v3435 = vld [vmem:[%s284 + $0x34] sm:$0xf]
        %v3436 = vld [vmem:[%s284 + $0x38] sm:$0xf]
        %v3437 = vld [vmem:[%s284 + $0x3c] sm:$0xf]
        %v3438 = vlaneseq
        %v3439 = vshrl.u32 %v3438, 7
        %v3440 = vsub.s32 0, %v3439
        %v3441 = vrot.slane %v3044, %v3440
        %v3458 = vunpack.c.l.b16 %v3422
        %v3459 = vunpack.c.l.b16 %v3423
        %v3460 = vunpack.c.l.b16 %v3424
        %v3461 = vunpack.c.l.b16 %v3425
        %v3462 = vunpack.c.l.b16 %v3426
        %v3463 = vunpack.c.l.b16 %v3427
        %v3464 = vunpack.c.l.b16 %v3428
        %v3465 = vunpack.c.l.b16 %v3429
        %v3466 = vunpack.c.l.b16 %v3430
        %v3467 = vunpack.c.l.b16 %v3431
        %v3468 = vunpack.c.l.b16 %v3432
        %v3469 = vunpack.c.l.b16 %v3433
        %v3470 = vunpack.c.l.b16 %v3434
        %v3471 = vunpack.c.l.b16 %v3435
        %v3472 = vunpack.c.l.b16 %v3436
        %v3473 = vunpack.c.l.b16 %v3437
        %v3474 = vpack.c.b16 %v3459, %v3458
        %v3475 = vpack.c.b16 %v3461, %v3460
        %v3476 = vpack.c.b16 %v3463, %v3462
        %v3477 = vpack.c.b16 %v3465, %v3464
        %v3478 = vpack.c.b16 %v3467, %v3466
        %v3479 = vpack.c.b16 %v3469, %v3468
        %v3480 = vpack.c.b16 %v3471, %v3470
        %v3481 = vpack.c.b16 %v3473, %v3472
        %3490 = vmatprep.subr.bf16.mxu0 0
        %3491 = vmatpush1.bf16.msra.mxu0 %v3414
        %3492 = vmatprep.subr.bf16.mxu0 0
        %3493 = vmatpush1.bf16.msra.mxu0 %v3415
        %3494 = vmatprep.subr.bf16.mxu0 0
        %3495 = vmatpush1.bf16.msra.mxu0 %v3416
        %3496 = vmatprep.subr.bf16.mxu0 0
        %3497 = vmatpush1.bf16.msra.mxu0 %v3417
        %3498 = vmatprep.subr.bf16.mxu0 0
        %3499 = vmatpush1.bf16.msra.mxu0 %v3418
        %3500 = vmatprep.subr.bf16.mxu0 0
        %3501 = vmatpush1.bf16.msra.mxu0 %v3419
        %3502 = vmatprep.subr.bf16.mxu0 0
        %3503 = vmatpush1.bf16.msra.mxu0 %v3420
        %3504 = vmatprep.subr.bf16.mxu0 0
        %3505 = vmatpush1.bf16.msra.mxu0 %v3421
        %3506 = vmatprep.subr.bf16.mxu0 0
        %3507 = vmatpush1.bf16.msra.mxu0 0
        %3508 = vmatprep.subr.bf16.mxu0 0
        %3509 = vmatpush1.bf16.msra.mxu0 0
        %3510 = vmatprep.subr.bf16.mxu0 0
        %3511 = vmatpush1.bf16.msra.mxu0 0
        %3512 = vmatprep.subr.bf16.mxu0 0
        %3513 = vmatpush1.bf16.msra.mxu0 0
        %3514 = vmatprep.subr.bf16.mxu0 0
        %3515 = vmatpush1.bf16.msra.mxu0 0
        %3516 = vmatprep.subr.bf16.mxu0 0
        %3517 = vmatpush1.bf16.msra.mxu0 0
        %3518 = vmatprep.subr.bf16.mxu0 0
        %3519 = vmatpush1.bf16.msra.mxu0 0
        %3520 = vmatprep.subr.bf16.mxu0 0
        %3521 = vmatpush1.bf16.msra.mxu0 0
        %3522 = vmatprep.mubr.bf16.mxu0 0
        %3523 = vmatmul.mubr.bf16.gmra.mrb[0].mxu0 %v3474
        %v3524 = vpop.f32.mrb[0].mxu0
        %v3525 = vadd.f32 %v3441, %v3524
        %v3526 = vpop.f32.mrb[0].mxu0
        %v3527 = vpop.f32.mrb[0].mxu0
        %v3528 = vadd.f32 %v3441, %v3527
        %v3529 = vpop.f32.mrb[0].mxu0
        %3530 = vmatprep.mubr.bf16.mxu0 0
        %3531 = vmatmul.mubr.bf16.gmra.mrb[0].mxu0 %v3475
        %v3532 = vpop.f32.mrb[0].mxu0
        %v3533 = vadd.f32 %v3441, %v3532
        %v3534 = vpop.f32.mrb[0].mxu0
        %v3535 = vpop.f32.mrb[0].mxu0
        %v3536 = vadd.f32 %v3441, %v3535
        %v3537 = vpop.f32.mrb[0].mxu0
        %3538 = vmatprep.mubr.bf16.mxu0 0
        %3539 = vmatmul.mubr.bf16.gmra.mrb[0].mxu0 %v3476
        %v3540 = vpop.f32.mrb[0].mxu0
        %v3541 = vadd.f32 %v3441, %v3540
        %v3542 = vpop.f32.mrb[0].mxu0
        %v3543 = vpop.f32.mrb[0].mxu0
        %v3544 = vadd.f32 %v3441, %v3543
        %v3545 = vpop.f32.mrb[0].mxu0
        %3546 = vmatprep.mubr.bf16.mxu0 0
        %3547 = vmatmul.mubr.bf16.gmra.mrb[0].mxu0 %v3477
        %v3548 = vpop.f32.mrb[0].mxu0
        %v3549 = vadd.f32 %v3441, %v3548
        %v3550 = vpop.f32.mrb[0].mxu0
        %v3551 = vpop.f32.mrb[0].mxu0
        %v3552 = vadd.f32 %v3441, %v3551
        %v3553 = vpop.f32.mrb[0].mxu0
        %3554 = vmatprep.mubr.bf16.mxu0 0
        %3555 = vmatmul.mubr.bf16.gmra.mrb[0].mxu0 %v3478
        %v3556 = vpop.f32.mrb[0].mxu0
        %v3557 = vadd.f32 %v3441, %v3556
        %v3558 = vpop.f32.mrb[0].mxu0
        %v3559 = vpop.f32.mrb[0].mxu0
        %v3560 = vadd.f32 %v3441, %v3559
        %v3561 = vpop.f32.mrb[0].mxu0
        %3562 = vmatprep.mubr.bf16.mxu0 0
        %3563 = vmatmul.mubr.bf16.gmra.mrb[0].mxu0 %v3479
        %v3564 = vpop.f32.mrb[0].mxu0
        %v3565 = vadd.f32 %v3441, %v3564
        %v3566 = vpop.f32.mrb[0].mxu0
        %v3567 = vpop.f32.mrb[0].mxu0
        %v3568 = vadd.f32 %v3441, %v3567
        %v3569 = vpop.f32.mrb[0].mxu0
        %3570 = vmatprep.mubr.bf16.mxu0 0
        %3571 = vmatmul.mubr.bf16.gmra.mrb[0].mxu0 %v3480
        %v3572 = vpop.f32.mrb[0].mxu0
        %v3573 = vadd.f32 %v3441, %v3572
        %v3574 = vpop.f32.mrb[0].mxu0
        %v3575 = vpop.f32.mrb[0].mxu0
        %v3576 = vadd.f32 %v3441, %v3575
        %v3577 = vpop.f32.mrb[0].mxu0
        %3578 = vmatprep.mubr.bf16.mxu0 0
        %3579 = vmatmul.mubr.bf16.gmra.mrb[0].mxu0 %v3481
        %v3580 = vpop.f32.mrb[0].mxu0
        %v3581 = vadd.f32 %v3441, %v3580
        %v3582 = vpop.f32.mrb[0].mxu0
        %v3583 = vpop.f32.mrb[0].mxu0
        %v3584 = vadd.f32 %v3441, %v3583
        %v3585 = vpop.f32.mrb[0].mxu0
        %3586 = vdwg.mxu0
        %v3587 = vmax.f32 %v3525, 0.0
        %v3588 = vmax.f32 %v3528, 0.0
        %v3589 = vmax.f32 %v3533, 0.0
        %v3590 = vmax.f32 %v3536, 0.0
        %v3591 = vmax.f32 %v3541, 0.0
        %v3592 = vmax.f32 %v3544, 0.0
        %v3593 = vmax.f32 %v3549, 0.0
        %v3594 = vmax.f32 %v3552, 0.0
        %v3595 = vmax.f32 %v3557, 0.0
        %v3596 = vmax.f32 %v3560, 0.0
        %v3597 = vmax.f32 %v3565, 0.0
        %v3598 = vmax.f32 %v3568, 0.0
        %v3599 = vmax.f32 %v3573, 0.0
        %v3600 = vmax.f32 %v3576, 0.0
        %v3601 = vmax.f32 %v3581, 0.0
        %v3602 = vmax.f32 %v3584, 0.0
        %v3603 = vpack.c.bf16 %v3588, %v3587
        %v3604 = vpack.c.bf16 %v3590, %v3589
        %v3605 = vpack.c.bf16 %v3592, %v3591
        %v3606 = vpack.c.bf16 %v3594, %v3593
        %v3607 = vpack.c.bf16 %v3596, %v3595
        %v3608 = vpack.c.bf16 %v3598, %v3597
        %v3609 = vpack.c.bf16 %v3600, %v3599
        %v3610 = vpack.c.bf16 %v3602, %v3601
        %3611 = vst [vmem:[#allocation2] sm:$0xff] %v3603
        %3612 = vst [vmem:[#allocation2 + $0x8] sm:$0xff] %v3604
        %3613 = vst [vmem:[#allocation2 + $0x10] sm:$0xff] %v3605
        %3614 = vst [vmem:[#allocation2 + $0x18] sm:$0xff] %v3606
        %3615 = vst [vmem:[#allocation2 + $0x20] sm:$0xff] %v3607
        %3616 = vst [vmem:[#allocation2 + $0x28] sm:$0xff] %v3608
        %3617 = vst [vmem:[#allocation2 + $0x30] sm:$0xff] %v3609
        %3618 = vst [vmem:[#allocation2 + $0x38] sm:$0xff] %v3610
        %v3619 = vpack.c.bf16 %v3227, %v3224
        %v3620 = vpack.c.bf16 %v3235, %v3232
        %v3621 = vpack.c.bf16 %v3243, %v3240
        %v3622 = vpack.c.bf16 %v3251, %v3248
        %v3623 = vpack.c.bf16 %v3259, %v3256
        %v3624 = vpack.c.bf16 %v3267, %v3264
        %v3625 = vpack.c.bf16 %v3275, %v3272
        %v3626 = vpack.c.bf16 %v3283, %v3280
        %v3627 = vld [vmem:[%s284 + $0x40] sm:$0xf]
        %v3628 = vld [vmem:[%s284 + $0x44] sm:$0xf]
        %v3629 = vld [vmem:[%s284 + $0x48] sm:$0xf]
        %v3630 = vld [vmem:[%s284 + $0x4c] sm:$0xf]
        %v3631 = vld [vmem:[%s284 + $0x50] sm:$0xf]
        %v3632 = vld [vmem:[%s284 + $0x54] sm:$0xf]
        %v3633 = vld [vmem:[%s284 + $0x58] sm:$0xf]
        %v3634 = vld [vmem:[%s284 + $0x5c] sm:$0xf]
        %v3635 = vld [vmem:[%s284 + $0x60] sm:$0xf]
        %v3636 = vld [vmem:[%s284 + $0x64] sm:$0xf]
        %v3637 = vld [vmem:[%s284 + $0x68] sm:$0xf]
        %v3638 = vld [vmem:[%s284 + $0x6c] sm:$0xf]
        %v3639 = vld [vmem:[%s284 + $0x70] sm:$0xf]
        %v3640 = vld [vmem:[%s284 + $0x74] sm:$0xf]
        %v3641 = vld [vmem:[%s284 + $0x78] sm:$0xf]
        %v3642 = vld [vmem:[%s284 + $0x7c] sm:$0xf]
        %v3659 = vunpack.c.l.b16 %v3627
        %v3660 = vunpack.c.l.b16 %v3628
        %v3661 = vunpack.c.l.b16 %v3629
        %v3662 = vunpack.c.l.b16 %v3630
        %v3663 = vunpack.c.l.b16 %v3631
        %v3664 = vunpack.c.l.b16 %v3632
        %v3665 = vunpack.c.l.b16 %v3633
        %v3666 = vunpack.c.l.b16 %v3634
        %v3667 = vunpack.c.l.b16 %v3635
        %v3668 = vunpack.c.l.b16 %v3636
        %v3669 = vunpack.c.l.b16 %v3637
        %v3670 = vunpack.c.l.b16 %v3638
        %v3671 = vunpack.c.l.b16 %v3639
        %v3672 = vunpack.c.l.b16 %v3640
        %v3673 = vunpack.c.l.b16 %v3641
        %v3674 = vunpack.c.l.b16 %v3642
        %v3675 = vpack.c.b16 %v3660, %v3659
        %v3676 = vpack.c.b16 %v3662, %v3661
        %v3677 = vpack.c.b16 %v3664, %v3663
        %v3678 = vpack.c.b16 %v3666, %v3665
        %v3679 = vpack.c.b16 %v3668, %v3667
        %v3680 = vpack.c.b16 %v3670, %v3669
        %v3681 = vpack.c.b16 %v3672, %v3671
        %v3682 = vpack.c.b16 %v3674, %v3673
        %3691 = vmatprep.subr.bf16.mxu0 0
        %3692 = vmatpush1.bf16.msra.mxu0 %v3619
        %3693 = vmatprep.subr.bf16.mxu0 0
        %3694 = vmatpush1.bf16.msra.mxu0 %v3620
        %3695 = vmatprep.subr.bf16.mxu0 0
        %3696 = vmatpush1.bf16.msra.mxu0 %v3621
        %3697 = vmatprep.subr.bf16.mxu0 0
        %3698 = vmatpush1.bf16.msra.mxu0 %v3622
        %3699 = vmatprep.subr.bf16.mxu0 0
        %3700 = vmatpush1.bf16.msra.mxu0 %v3623
        %3701 = vmatprep.subr.bf16.mxu0 0
        %3702 = vmatpush1.bf16.msra.mxu0 %v3624
        %3703 = vmatprep.subr.bf16.mxu0 0
        %3704 = vmatpush1.bf16.msra.mxu0 %v3625
        %3705 = vmatprep.subr.bf16.mxu0 0
        %3706 = vmatpush1.bf16.msra.mxu0 %v3626
        %3707 = vmatprep.subr.bf16.mxu0 0
        %3708 = vmatpush1.bf16.msra.mxu0 0
        %3709 = vmatprep.subr.bf16.mxu0 0
        %3710 = vmatpush1.bf16.msra.mxu0 0
        %3711 = vmatprep.subr.bf16.mxu0 0
        %3712 = vmatpush1.bf16.msra.mxu0 0
        %3713 = vmatprep.subr.bf16.mxu0 0
        %3714 = vmatpush1.bf16.msra.mxu0 0
        %3715 = vmatprep.subr.bf16.mxu0 0
        %3716 = vmatpush1.bf16.msra.mxu0 0
        %3717 = vmatprep.subr.bf16.mxu0 0
        %3718 = vmatpush1.bf16.msra.mxu0 0
        %3719 = vmatprep.subr.bf16.mxu0 0
        %3720 = vmatpush1.bf16.msra.mxu0 0
        %3721 = vmatprep.subr.bf16.mxu0 0
        %3722 = vmatpush1.bf16.msra.mxu0 0
        %3723 = vmatprep.mubr.bf16.mxu0 0
        %3724 = vmatmul.mubr.bf16.gmra.mrb[0].mxu0 %v3675
        %v3725 = vpop.f32.mrb[0].mxu0
        %v3726 = vadd.f32 %v3441, %v3725
        %v3727 = vpop.f32.mrb[0].mxu0
        %v3728 = vpop.f32.mrb[0].mxu0
        %v3729 = vadd.f32 %v3441, %v3728
        %v3730 = vpop.f32.mrb[0].mxu0
        %3731 = vmatprep.mubr.bf16.mxu0 0
        %3732 = vmatmul.mubr.bf16.gmra.mrb[0].mxu0 %v3676
        %v3733 = vpop.f32.mrb[0].mxu0
        %v3734 = vadd.f32 %v3441, %v3733
        %v3735 = vpop.f32.mrb[0].mxu0
        %v3736 = vpop.f32.mrb[0].mxu0
        %v3737 = vadd.f32 %v3441, %v3736
        %v3738 = vpop.f32.mrb[0].mxu0
        %3739 = vmatprep.mubr.bf16.mxu0 0
        %3740 = vmatmul.mubr.bf16.gmra.mrb[0].mxu0 %v3677
        %v3741 = vpop.f32.mrb[0].mxu0
        %v3742 = vadd.f32 %v3441, %v3741
        %v3743 = vpop.f32.mrb[0].mxu0
        %v3744 = vpop.f32.mrb[0].mxu0
        %v3745 = vadd.f32 %v3441, %v3744
        %v3746 = vpop.f32.mrb[0].mxu0
        %3747 = vmatprep.mubr.bf16.mxu0 0
        %3748 = vmatmul.mubr.bf16.gmra.mrb[0].mxu0 %v3678
        %v3749 = vpop.f32.mrb[0].mxu0
        %v3750 = vadd.f32 %v3441, %v3749
        %v3751 = vpop.f32.mrb[0].mxu0
        %v3752 = vpop.f32.mrb[0].mxu0
        %v3753 = vadd.f32 %v3441, %v3752
        %v3754 = vpop.f32.mrb[0].mxu0
        %3755 = vmatprep.mubr.bf16.mxu0 0
        %3756 = vmatmul.mubr.bf16.gmra.mrb[0].mxu0 %v3679
        %v3757 = vpop.f32.mrb[0].mxu0
        %v3758 = vadd.f32 %v3441, %v3757
        %v3759 = vpop.f32.mrb[0].mxu0
        %v3760 = vpop.f32.mrb[0].mxu0
        %v3761 = vadd.f32 %v3441, %v3760
        %v3762 = vpop.f32.mrb[0].mxu0
        %3763 = vmatprep.mubr.bf16.mxu0 0
        %3764 = vmatmul.mubr.bf16.gmra.mrb[0].mxu0 %v3680
        %v3765 = vpop.f32.mrb[0].mxu0
        %v3766 = vadd.f32 %v3441, %v3765
        %v3767 = vpop.f32.mrb[0].mxu0
        %v3768 = vpop.f32.mrb[0].mxu0
        %v3769 = vadd.f32 %v3441, %v3768
        %v3770 = vpop.f32.mrb[0].mxu0
        %3771 = vmatprep.mubr.bf16.mxu0 0
        %3772 = vmatmul.mubr.bf16.gmra.mrb[0].mxu0 %v3681
        %v3773 = vpop.f32.mrb[0].mxu0
        %v3774 = vadd.f32 %v3441, %v3773
        %v3775 = vpop.f32.mrb[0].mxu0
        %v3776 = vpop.f32.mrb[0].mxu0
        %v3777 = vadd.f32 %v3441, %v3776
        %v3778 = vpop.f32.mrb[0].mxu0
        %3779 = vmatprep.mubr.bf16.mxu0 0
        %3780 = vmatmul.mubr.bf16.gmra.mrb[0].mxu0 %v3682
        %v3781 = vpop.f32.mrb[0].mxu0
        %v3782 = vadd.f32 %v3441, %v3781
        %v3783 = vpop.f32.mrb[0].mxu0
        %v3784 = vpop.f32.mrb[0].mxu0
        %v3785 = vadd.f32 %v3441, %v3784
        %v3786 = vpop.f32.mrb[0].mxu0
        %3787 = vdwg.mxu0
        %v3788 = vmax.f32 %v3726, 0.0
        %v3789 = vmax.f32 %v3729, 0.0
        %v3790 = vmax.f32 %v3734, 0.0
        %v3791 = vmax.f32 %v3737, 0.0
        %v3792 = vmax.f32 %v3742, 0.0
        %v3793 = vmax.f32 %v3745, 0.0
        %v3794 = vmax.f32 %v3750, 0.0
        %v3795 = vmax.f32 %v3753, 0.0
        %v3796 = vmax.f32 %v3758, 0.0
        %v3797 = vmax.f32 %v3761, 0.0
        %v3798 = vmax.f32 %v3766, 0.0
        %v3799 = vmax.f32 %v3769, 0.0
        %v3800 = vmax.f32 %v3774, 0.0
        %v3801 = vmax.f32 %v3777, 0.0
        %v3802 = vmax.f32 %v3782, 0.0
        %v3803 = vmax.f32 %v3785, 0.0
        %v3804 = vpack.c.bf16 %v3789, %v3788
        %v3805 = vpack.c.bf16 %v3791, %v3790
        %v3806 = vpack.c.bf16 %v3793, %v3792
        %v3807 = vpack.c.bf16 %v3795, %v3794
        %v3808 = vpack.c.bf16 %v3797, %v3796
        %v3809 = vpack.c.bf16 %v3799, %v3798
        %v3810 = vpack.c.bf16 %v3801, %v3800
        %v3811 = vpack.c.bf16 %v3803, %v3802
        %3812 = vst [vmem:[#allocation2 + $0x40] sm:$0xff] %v3804
        %3813 = vst [vmem:[#allocation2 + $0x48] sm:$0xff] %v3805
        %3814 = vst [vmem:[#allocation2 + $0x50] sm:$0xff] %v3806
        %3815 = vst [vmem:[#allocation2 + $0x58] sm:$0xff] %v3807
        %3816 = vst [vmem:[#allocation2 + $0x60] sm:$0xff] %v3808
        %3817 = vst [vmem:[#allocation2 + $0x68] sm:$0xff] %v3809
        %3818 = vst [vmem:[#allocation2 + $0x70] sm:$0xff] %v3810
        %3819 = vst [vmem:[#allocation2 + $0x78] sm:$0xff] %v3811
        %v3820 = vpack.c.bf16 %v3291, %v3288
        %v3821 = vpack.c.bf16 %v3299, %v3296
        %v3822 = vpack.c.bf16 %v3307, %v3304
        %v3823 = vpack.c.bf16 %v3315, %v3312
        %v3824 = vpack.c.bf16 %v3323, %v3320
        %v3825 = vpack.c.bf16 %v3331, %v3328
        %v3826 = vpack.c.bf16 %v3339, %v3336
        %v3827 = vpack.c.bf16 %v3347, %v3344
        %v3828 = vld [vmem:[%s284 + $0x80] sm:$0xf]
        %v3829 = vld [vmem:[%s284 + $0x84] sm:$0xf]
        %v3830 = vld [vmem:[%s284 + $0x88] sm:$0xf]
        %v3831 = vld [vmem:[%s284 + $0x8c] sm:$0xf]
        %v3832 = vld [vmem:[%s284 + $0x90] sm:$0xf]
        %v3833 = vld [vmem:[%s284 + $0x94] sm:$0xf]
        %v3834 = vld [vmem:[%s284 + $0x98] sm:$0xf]
        %v3835 = vld [vmem:[%s284 + $0x9c] sm:$0xf]
        %v3836 = vld [vmem:[%s284 + $0xa0] sm:$0xf]
        %v3837 = vld [vmem:[%s284 + $0xa4] sm:$0xf]
        %v3838 = vld [vmem:[%s284 + $0xa8] sm:$0xf]
        %v3839 = vld [vmem:[%s284 + $0xac] sm:$0xf]
        %v3840 = vld [vmem:[%s284 + $0xb0] sm:$0xf]
        %v3841 = vld [vmem:[%s284 + $0xb4] sm:$0xf]
        %v3842 = vld [vmem:[%s284 + $0xb8] sm:$0xf]
        %v3843 = vld [vmem:[%s284 + $0xbc] sm:$0xf]
        %v3860 = vunpack.c.l.b16 %v3828
        %v3861 = vunpack.c.l.b16 %v3829
        %v3862 = vunpack.c.l.b16 %v3830
        %v3863 = vunpack.c.l.b16 %v3831
        %v3864 = vunpack.c.l.b16 %v3832
        %v3865 = vunpack.c.l.b16 %v3833
        %v3866 = vunpack.c.l.b16 %v3834
        %v3867 = vunpack.c.l.b16 %v3835
        %v3868 = vunpack.c.l.b16 %v3836
        %v3869 = vunpack.c.l.b16 %v3837
        %v3870 = vunpack.c.l.b16 %v3838
        %v3871 = vunpack.c.l.b16 %v3839
        %v3872 = vunpack.c.l.b16 %v3840
        %v3873 = vunpack.c.l.b16 %v3841
        %v3874 = vunpack.c.l.b16 %v3842
        %v3875 = vunpack.c.l.b16 %v3843
        %v3876 = vpack.c.b16 %v3861, %v3860
        %v3877 = vpack.c.b16 %v3863, %v3862
        %v3878 = vpack.c.b16 %v3865, %v3864
        %v3879 = vpack.c.b16 %v3867, %v3866
        %v3880 = vpack.c.b16 %v3869, %v3868
        %v3881 = vpack.c.b16 %v3871, %v3870
        %v3882 = vpack.c.b16 %v3873, %v3872
        %v3883 = vpack.c.b16 %v3875, %v3874
        %3892 = vmatprep.subr.bf16.mxu0 0
        %3893 = vmatpush1.bf16.msra.mxu0 %v3820
        %3894 = vmatprep.subr.bf16.mxu0 0
        %3895 = vmatpush1.bf16.msra.mxu0 %v3821
        %3896 = vmatprep.subr.bf16.mxu0 0
        %3897 = vmatpush1.bf16.msra.mxu0 %v3822
        %3898 = vmatprep.subr.bf16.mxu0 0
        %3899 = vmatpush1.bf16.msra.mxu0 %v3823
        %3900 = vmatprep.subr.bf16.mxu0 0
        %3901 = vmatpush1.bf16.msra.mxu0 %v3824
        %3902 = vmatprep.subr.bf16.mxu0 0
        %3903 = vmatpush1.bf16.msra.mxu0 %v3825
        %3904 = vmatprep.subr.bf16.mxu0 0
        %3905 = vmatpush1.bf16.msra.mxu0 %v3826
        %3906 = vmatprep.subr.bf16.mxu0 0
        %3907 = vmatpush1.bf16.msra.mxu0 %v3827
        %3908 = vmatprep.subr.bf16.mxu0 0
        %3909 = vmatpush1.bf16.msra.mxu0 0
        %3910 = vmatprep.subr.bf16.mxu0 0
        %3911 = vmatpush1.bf16.msra.mxu0 0
        %3912 = vmatprep.subr.bf16.mxu0 0
        %3913 = vmatpush1.bf16.msra.mxu0 0
        %3914 = vmatprep.subr.bf16.mxu0 0
        %3915 = vmatpush1.bf16.msra.mxu0 0
        %3916 = vmatprep.subr.bf16.mxu0 0
        %3917 = vmatpush1.bf16.msra.mxu0 0
        %3918 = vmatprep.subr.bf16.mxu0 0
        %3919 = vmatpush1.bf16.msra.mxu0 0
        %3920 = vmatprep.subr.bf16.mxu0 0
        %3921 = vmatpush1.bf16.msra.mxu0 0
        %3922 = vmatprep.subr.bf16.mxu0 0
        %3923 = vmatpush1.bf16.msra.mxu0 0
        %3924 = vmatprep.mubr.bf16.mxu0 0
        %3925 = vmatmul.mubr.bf16.gmra.mrb[0].mxu0 %v3876
        %v3926 = vpop.f32.mrb[0].mxu0
        %v3927 = vadd.f32 %v3441, %v3926
        %v3928 = vpop.f32.mrb[0].mxu0
        %v3929 = vpop.f32.mrb[0].mxu0
        %v3930 = vadd.f32 %v3441, %v3929
        %v3931 = vpop.f32.mrb[0].mxu0
        %3932 = vmatprep.mubr.bf16.mxu0 0
        %3933 = vmatmul.mubr.bf16.gmra.mrb[0].mxu0 %v3877
        %v3934 = vpop.f32.mrb[0].mxu0
        %v3935 = vadd.f32 %v3441, %v3934
        %v3936 = vpop.f32.mrb[0].mxu0
        %v3937 = vpop.f32.mrb[0].mxu0
        %v3938 = vadd.f32 %v3441, %v3937
        %v3939 = vpop.f32.mrb[0].mxu0
        %3940 = vmatprep.mubr.bf16.mxu0 0
        %3941 = vmatmul.mubr.bf16.gmra.mrb[0].mxu0 %v3878
        %v3942 = vpop.f32.mrb[0].mxu0
        %v3943 = vadd.f32 %v3441, %v3942
        %v3944 = vpop.f32.mrb[0].mxu0
        %v3945 = vpop.f32.mrb[0].mxu0
        %v3946 = vadd.f32 %v3441, %v3945
        %v3947 = vpop.f32.mrb[0].mxu0
        %3948 = vmatprep.mubr.bf16.mxu0 0
        %3949 = vmatmul.mubr.bf16.gmra.mrb[0].mxu0 %v3879
        %v3950 = vpop.f32.mrb[0].mxu0
        %v3951 = vadd.f32 %v3441, %v3950
        %v3952 = vpop.f32.mrb[0].mxu0
        %v3953 = vpop.f32.mrb[0].mxu0
        %v3954 = vadd.f32 %v3441, %v3953
        %v3955 = vpop.f32.mrb[0].mxu0
        %3956 = vmatprep.mubr.bf16.mxu0 0
        %3957 = vmatmul.mubr.bf16.gmra.mrb[0].mxu0 %v3880
        %v3958 = vpop.f32.mrb[0].mxu0
        %v3959 = vadd.f32 %v3441, %v3958
        %v3960 = vpop.f32.mrb[0].mxu0
        %v3961 = vpop.f32.mrb[0].mxu0
        %v3962 = vadd.f32 %v3441, %v3961
        %v3963 = vpop.f32.mrb[0].mxu0
        %3964 = vmatprep.mubr.bf16.mxu0 0
        %3965 = vmatmul.mubr.bf16.gmra.mrb[0].mxu0 %v3881
        %v3966 = vpop.f32.mrb[0].mxu0
        %v3967 = vadd.f32 %v3441, %v3966
        %v3968 = vpop.f32.mrb[0].mxu0
        %v3969 = vpop.f32.mrb[0].mxu0
        %v3970 = vadd.f32 %v3441, %v3969
        %v3971 = vpop.f32.mrb[0].mxu0
        %3972 = vmatprep.mubr.bf16.mxu0 0
        %3973 = vmatmul.mubr.bf16.gmra.mrb[0].mxu0 %v3882
        %v3974 = vpop.f32.mrb[0].mxu0
        %v3975 = vadd.f32 %v3441, %v3974
        %v3976 = vpop.f32.mrb[0].mxu0
        %v3977 = vpop.f32.mrb[0].mxu0
        %v3978 = vadd.f32 %v3441, %v3977
        %v3979 = vpop.f32.mrb[0].mxu0
        %3980 = vmatprep.mubr.bf16.mxu0 0
        %3981 = vmatmul.mubr.bf16.gmra.mrb[0].mxu0 %v3883
        %v3982 = vpop.f32.mrb[0].mxu0
        %v3983 = vadd.f32 %v3441, %v3982
        %v3984 = vpop.f32.mrb[0].mxu0
        %v3985 = vpop.f32.mrb[0].mxu0
        %v3986 = vadd.f32 %v3441, %v3985
        %v3987 = vpop.f32.mrb[0].mxu0
        %3988 = vdwg.mxu0
        %v3989 = vmax.f32 %v3927, 0.0
        %v3990 = vmax.f32 %v3930, 0.0
        %v3991 = vmax.f32 %v3935, 0.0
        %v3992 = vmax.f32 %v3938, 0.0
        %v3993 = vmax.f32 %v3943, 0.0
        %v3994 = vmax.f32 %v3946, 0.0
        %v3995 = vmax.f32 %v3951, 0.0
        %v3996 = vmax.f32 %v3954, 0.0
        %v3997 = vmax.f32 %v3959, 0.0
        %v3998 = vmax.f32 %v3962, 0.0
        %v3999 = vmax.f32 %v3967, 0.0
        %v4000 = vmax.f32 %v3970, 0.0
        %v4001 = vmax.f32 %v3975, 0.0
        %v4002 = vmax.f32 %v3978, 0.0
        %v4003 = vmax.f32 %v3983, 0.0
        %v4004 = vmax.f32 %v3986, 0.0
        %v4005 = vpack.c.bf16 %v3990, %v3989
        %v4006 = vpack.c.bf16 %v3992, %v3991
        %v4007 = vpack.c.bf16 %v3994, %v3993
        %v4008 = vpack.c.bf16 %v3996, %v3995
        %v4009 = vpack.c.bf16 %v3998, %v3997
        %v4010 = vpack.c.bf16 %v4000, %v3999
        %v4011 = vpack.c.bf16 %v4002, %v4001
        %v4012 = vpack.c.bf16 %v4004, %v4003
        %4013 = vst [vmem:[#allocation2 + $0x80] sm:$0xff] %v4005
        %4014 = vst [vmem:[#allocation2 + $0x88] sm:$0xff] %v4006
        %4015 = vst [vmem:[#allocation2 + $0x90] sm:$0xff] %v4007
        %4016 = vst [vmem:[#allocation2 + $0x98] sm:$0xff] %v4008
        %4017 = vst [vmem:[#allocation2 + $0xa0] sm:$0xff] %v4009
        %4018 = vst [vmem:[#allocation2 + $0xa8] sm:$0xff] %v4010
        %4019 = vst [vmem:[#allocation2 + $0xb0] sm:$0xff] %v4011
        %4020 = vst [vmem:[#allocation2 + $0xb8] sm:$0xff] %v4012
        %v4021 = vpack.c.bf16 %v3355, %v3352
        %v4022 = vpack.c.bf16 %v3363, %v3360
        %v4023 = vpack.c.bf16 %v3371, %v3368
        %v4024 = vpack.c.bf16 %v3379, %v3376
        %v4025 = vpack.c.bf16 %v3387, %v3384
        %v4026 = vpack.c.bf16 %v3395, %v3392
        %v4027 = vpack.c.bf16 %v3403, %v3400
        %v4028 = vpack.c.bf16 %v3411, %v3408
        %v4029 = vld [vmem:[%s284 + $0xc0] sm:$0xf]
        %v4030 = vld [vmem:[%s284 + $0xc4] sm:$0xf]
        %v4031 = vld [vmem:[%s284 + $0xc8] sm:$0xf]
        %v4032 = vld [vmem:[%s284 + $0xcc] sm:$0xf]
        %v4033 = vld [vmem:[%s284 + $0xd0] sm:$0xf]
        %v4034 = vld [vmem:[%s284 + $0xd4] sm:$0xf]
        %v4035 = vld [vmem:[%s284 + $0xd8] sm:$0xf]
        %v4036 = vld [vmem:[%s284 + $0xdc] sm:$0xf]
        %v4037 = vld [vmem:[%s284 + $0xe0] sm:$0xf]
        %v4038 = vld [vmem:[%s284 + $0xe4] sm:$0xf]
        %v4039 = vld [vmem:[%s284 + $0xe8] sm:$0xf]
        %v4040 = vld [vmem:[%s284 + $0xec] sm:$0xf]
        %v4041 = vld [vmem:[%s284 + $0xf0] sm:$0xf]
        %v4042 = vld [vmem:[%s284 + $0xf4] sm:$0xf]
        %v4043 = vld [vmem:[%s284 + $0xf8] sm:$0xf]
        %v4044 = vld [vmem:[%s284 + $0xfc] sm:$0xf]
        %v4061 = vunpack.c.l.b16 %v4029
        %v4062 = vunpack.c.l.b16 %v4030
        %v4063 = vunpack.c.l.b16 %v4031
        %v4064 = vunpack.c.l.b16 %v4032
        %v4065 = vunpack.c.l.b16 %v4033
        %v4066 = vunpack.c.l.b16 %v4034
        %v4067 = vunpack.c.l.b16 %v4035
        %v4068 = vunpack.c.l.b16 %v4036
        %v4069 = vunpack.c.l.b16 %v4037
        %v4070 = vunpack.c.l.b16 %v4038
        %v4071 = vunpack.c.l.b16 %v4039
        %v4072 = vunpack.c.l.b16 %v4040
        %v4073 = vunpack.c.l.b16 %v4041
        %v4074 = vunpack.c.l.b16 %v4042
        %v4075 = vunpack.c.l.b16 %v4043
        %v4076 = vunpack.c.l.b16 %v4044
        %v4077 = vpack.c.b16 %v4062, %v4061
        %v4078 = vpack.c.b16 %v4064, %v4063
        %v4079 = vpack.c.b16 %v4066, %v4065
        %v4080 = vpack.c.b16 %v4068, %v4067
        %v4081 = vpack.c.b16 %v4070, %v4069
        %v4082 = vpack.c.b16 %v4072, %v4071
        %v4083 = vpack.c.b16 %v4074, %v4073
        %v4084 = vpack.c.b16 %v4076, %v4075
        %4093 = vmatprep.subr.bf16.mxu0 0
        %4094 = vmatpush1.bf16.msra.mxu0 %v4021
        %4095 = vmatprep.subr.bf16.mxu0 0
        %4096 = vmatpush1.bf16.msra.mxu0 %v4022
        %4097 = vmatprep.subr.bf16.mxu0 0
        %4098 = vmatpush1.bf16.msra.mxu0 %v4023
        %4099 = vmatprep.subr.bf16.mxu0 0
        %4100 = vmatpush1.bf16.msra.mxu0 %v4024
        %4101 = vmatprep.subr.bf16.mxu0 0
        %4102 = vmatpush1.bf16.msra.mxu0 %v4025
        %4103 = vmatprep.subr.bf16.mxu0 0
        %4104 = vmatpush1.bf16.msra.mxu0 %v4026
        %4105 = vmatprep.subr.bf16.mxu0 0
        %4106 = vmatpush1.bf16.msra.mxu0 %v4027
        %4107 = vmatprep.subr.bf16.mxu0 0
        %4108 = vmatpush1.bf16.msra.mxu0 %v4028
        %4109 = vmatprep.subr.bf16.mxu0 0
        %4110 = vmatpush1.bf16.msra.mxu0 0
        %4111 = vmatprep.subr.bf16.mxu0 0
        %4112 = vmatpush1.bf16.msra.mxu0 0
        %4113 = vmatprep.subr.bf16.mxu0 0
        %4114 = vmatpush1.bf16.msra.mxu0 0
        %4115 = vmatprep.subr.bf16.mxu0 0
        %4116 = vmatpush1.bf16.msra.mxu0 0
        %4117 = vmatprep.subr.bf16.mxu0 0
        %4118 = vmatpush1.bf16.msra.mxu0 0
        %4119 = vmatprep.subr.bf16.mxu0 0
        %4120 = vmatpush1.bf16.msra.mxu0 0
        %4121 = vmatprep.subr.bf16.mxu0 0
        %4122 = vmatpush1.bf16.msra.mxu0 0
        %4123 = vmatprep.subr.bf16.mxu0 0
        %4124 = vmatpush1.bf16.msra.mxu0 0
        %4125 = vmatprep.mubr.bf16.mxu0 0
        %4126 = vmatmul.mubr.bf16.gmra.mrb[0].mxu0 %v4077
        %v4127 = vpop.f32.mrb[0].mxu0
        %v4128 = vadd.f32 %v3441, %v4127
        %v4129 = vpop.f32.mrb[0].mxu0
        %v4130 = vpop.f32.mrb[0].mxu0
        %v4131 = vadd.f32 %v3441, %v4130
        %v4132 = vpop.f32.mrb[0].mxu0
        %4133 = vmatprep.mubr.bf16.mxu0 0
        %4134 = vmatmul.mubr.bf16.gmra.mrb[0].mxu0 %v4078
        %v4135 = vpop.f32.mrb[0].mxu0
        %v4136 = vadd.f32 %v3441, %v4135
        %v4137 = vpop.f32.mrb[0].mxu0
        %v4138 = vpop.f32.mrb[0].mxu0
        %v4139 = vadd.f32 %v3441, %v4138
        %v4140 = vpop.f32.mrb[0].mxu0
        %4141 = vmatprep.mubr.bf16.mxu0 0
        %4142 = vmatmul.mubr.bf16.gmra.mrb[0].mxu0 %v4079
        %v4143 = vpop.f32.mrb[0].mxu0
        %v4144 = vadd.f32 %v3441, %v4143
        %v4145 = vpop.f32.mrb[0].mxu0
        %v4146 = vpop.f32.mrb[0].mxu0
        %v4147 = vadd.f32 %v3441, %v4146
        %v4148 = vpop.f32.mrb[0].mxu0
        %4149 = vmatprep.mubr.bf16.mxu0 0
        %4150 = vmatmul.mubr.bf16.gmra.mrb[0].mxu0 %v4080
        %v4151 = vpop.f32.mrb[0].mxu0
        %v4152 = vadd.f32 %v3441, %v4151
        %v4153 = vpop.f32.mrb[0].mxu0
        %v4154 = vpop.f32.mrb[0].mxu0
        %v4155 = vadd.f32 %v3441, %v4154
        %v4156 = vpop.f32.mrb[0].mxu0
        %4157 = vmatprep.mubr.bf16.mxu0 0
        %4158 = vmatmul.mubr.bf16.gmra.mrb[0].mxu0 %v4081
        %v4159 = vpop.f32.mrb[0].mxu0
        %v4160 = vadd.f32 %v3441, %v4159
        %v4161 = vpop.f32.mrb[0].mxu0
        %v4162 = vpop.f32.mrb[0].mxu0
        %v4163 = vadd.f32 %v3441, %v4162
        %v4164 = vpop.f32.mrb[0].mxu0
        %4165 = vmatprep.mubr.bf16.mxu0 0
        %4166 = vmatmul.mubr.bf16.gmra.mrb[0].mxu0 %v4082
        %v4167 = vpop.f32.mrb[0].mxu0
        %v4168 = vadd.f32 %v3441, %v4167
        %v4169 = vpop.f32.mrb[0].mxu0
        %v4170 = vpop.f32.mrb[0].mxu0
        %v4171 = vadd.f32 %v3441, %v4170
        %v4172 = vpop.f32.mrb[0].mxu0
        %4173 = vmatprep.mubr.bf16.mxu0 0
        %4174 = vmatmul.mubr.bf16.gmra.mrb[0].mxu0 %v4083
        %v4175 = vpop.f32.mrb[0].mxu0
        %v4176 = vadd.f32 %v3441, %v4175
        %v4177 = vpop.f32.mrb[0].mxu0
        %v4178 = vpop.f32.mrb[0].mxu0
        %v4179 = vadd.f32 %v3441, %v4178
        %v4180 = vpop.f32.mrb[0].mxu0
        %4181 = vmatprep.mubr.bf16.mxu0 0
        %4182 = vmatmul.mubr.bf16.gmra.mrb[0].mxu0 %v4084
        %v4183 = vpop.f32.mrb[0].mxu0
        %v4184 = vadd.f32 %v3441, %v4183
        %v4185 = vpop.f32.mrb[0].mxu0
        %v4186 = vpop.f32.mrb[0].mxu0
        %v4187 = vadd.f32 %v3441, %v4186
        %v4188 = vpop.f32.mrb[0].mxu0
        %4189 = vdwg.mxu0
        %v4190 = vmax.f32 %v4128, 0.0
        %v4191 = vmax.f32 %v4131, 0.0
        %v4192 = vmax.f32 %v4136, 0.0
        %v4193 = vmax.f32 %v4139, 0.0
        %v4194 = vmax.f32 %v4144, 0.0
        %v4195 = vmax.f32 %v4147, 0.0
        %v4196 = vmax.f32 %v4152, 0.0
        %v4197 = vmax.f32 %v4155, 0.0
        %v4198 = vmax.f32 %v4160, 0.0
        %v4199 = vmax.f32 %v4163, 0.0
        %v4200 = vmax.f32 %v4168, 0.0
        %v4201 = vmax.f32 %v4171, 0.0
        %v4202 = vmax.f32 %v4176, 0.0
        %v4203 = vmax.f32 %v4179, 0.0
        %v4204 = vmax.f32 %v4184, 0.0
        %v4205 = vmax.f32 %v4187, 0.0
        %v4206 = vpack.c.bf16 %v4191, %v4190
        %v4207 = vpack.c.bf16 %v4193, %v4192
        %v4208 = vpack.c.bf16 %v4195, %v4194
        %v4209 = vpack.c.bf16 %v4197, %v4196
        %v4210 = vpack.c.bf16 %v4199, %v4198
        %v4211 = vpack.c.bf16 %v4201, %v4200
        %v4212 = vpack.c.bf16 %v4203, %v4202
        %v4213 = vpack.c.bf16 %v4205, %v4204
        %4214 = vst [vmem:[#allocation2 + $0xc0] sm:$0xff] %v4206
        %4215 = vst [vmem:[#allocation2 + $0xc8] sm:$0xff] %v4207
        %4216 = vst [vmem:[#allocation2 + $0xd0] sm:$0xff] %v4208
        %4217 = vst [vmem:[#allocation2 + $0xd8] sm:$0xff] %v4209
        %4218 = vst [vmem:[#allocation2 + $0xe0] sm:$0xff] %v4210
        %4219 = vst [vmem:[#allocation2 + $0xe8] sm:$0xff] %v4211
        %4220 = vst [vmem:[#allocation2 + $0xf0] sm:$0xff] %v4212
        %4221 = vst [vmem:[#allocation2 + $0xf8] sm:$0xff] %v4213
        %v4222 = vld [vmem:[%s302] sm:$0xf]
        %v4223 = vld [vmem:[%s302 + $0x4] sm:$0xf]
        %v4224 = vld [vmem:[#allocation2] sm:$0xff]
        %v4225 = vld [vmem:[#allocation2 + $0x8] sm:$0xff]
        %v4226 = vld [vmem:[#allocation2 + $0x10] sm:$0xff]
        %v4227 = vld [vmem:[#allocation2 + $0x18] sm:$0xff]
        %v4228 = vld [vmem:[#allocation2 + $0x20] sm:$0xff]
        %v4229 = vld [vmem:[#allocation2 + $0x28] sm:$0xff]
        %v4230 = vld [vmem:[#allocation2 + $0x30] sm:$0xff]
        %v4231 = vld [vmem:[#allocation2 + $0x38] sm:$0xff]
        %v4234 = vunpack.c.l.b16 %v4222
        %v4235 = vunpack.c.l.b16 %v4223
        %v4236 = vpack.c.b16 %v4235, %v4234
        %4238 = vmatprep.subr.bf16.mxu0 0
        %4239 = vmatpush1.bf16.msra.mxu0 %v4224
        %4240 = vmatprep.subr.bf16.mxu0 0
        %4241 = vmatpush1.bf16.msra.mxu0 %v4225
        %4242 = vmatprep.subr.bf16.mxu0 0
        %4243 = vmatpush1.bf16.msra.mxu0 %v4226
        %4244 = vmatprep.subr.bf16.mxu0 0
        %4245 = vmatpush1.bf16.msra.mxu0 %v4227
        %4246 = vmatprep.subr.bf16.mxu0 0
        %4247 = vmatpush1.bf16.msra.mxu0 %v4228
        %4248 = vmatprep.subr.bf16.mxu0 0
        %4249 = vmatpush1.bf16.msra.mxu0 %v4229
        %4250 = vmatprep.subr.bf16.mxu0 0
        %4251 = vmatpush1.bf16.msra.mxu0 %v4230
        %4252 = vmatprep.subr.bf16.mxu0 0
        %4253 = vmatpush1.bf16.msra.mxu0 %v4231
        %4254 = vmatprep.subr.bf16.mxu0 0
        %4255 = vmatpush1.bf16.msra.mxu0 0
        %4256 = vmatprep.subr.bf16.mxu0 0
        %4257 = vmatpush1.bf16.msra.mxu0 0
        %4258 = vmatprep.subr.bf16.mxu0 0
        %4259 = vmatpush1.bf16.msra.mxu0 0
        %4260 = vmatprep.subr.bf16.mxu0 0
        %4261 = vmatpush1.bf16.msra.mxu0 0
        %4262 = vmatprep.subr.bf16.mxu0 0
        %4263 = vmatpush1.bf16.msra.mxu0 0
        %4264 = vmatprep.subr.bf16.mxu0 0
        %4265 = vmatpush1.bf16.msra.mxu0 0
        %4266 = vmatprep.subr.bf16.mxu0 0
        %4267 = vmatpush1.bf16.msra.mxu0 0
        %4268 = vmatprep.subr.bf16.mxu0 0
        %4269 = vmatpush1.bf16.msra.mxu0 0
        %4270 = vmatprep.mubr.bf16.mxu0 0
        %4271 = vmatmul.mubr.bf16.gmra.mrb[0].mxu0 %v4236
        %v4272 = vpop.f32.mrb[0].mxu0
        %v4273 = vadd.f32 0.0, %v4272
        %v4274 = vpop.f32.mrb[0].mxu0
        %v4275 = vpop.f32.mrb[0].mxu0
        %v4276 = vadd.f32 0.0, %v4275
        %v4277 = vpop.f32.mrb[0].mxu0
        %4278 = vdwg.mxu0
        %4279 = vst [vmem:[#allocation3] sm:$0xff] %v4273
        %4280 = vst [vmem:[#allocation3 + $0x8] sm:$0xff] %v4276
        %v4281 = vld [vmem:[%s302 + $0x8] sm:$0xf]
        %v4282 = vld [vmem:[%s302 + $0xc] sm:$0xf]
        %v4283 = vld [vmem:[#allocation2 + $0x40] sm:$0xff]
        %v4284 = vld [vmem:[#allocation2 + $0x48] sm:$0xff]
        %v4285 = vld [vmem:[#allocation2 + $0x50] sm:$0xff]
        %v4286 = vld [vmem:[#allocation2 + $0x58] sm:$0xff]
        %v4287 = vld [vmem:[#allocation2 + $0x60] sm:$0xff]
        %v4288 = vld [vmem:[#allocation2 + $0x68] sm:$0xff]
        %v4289 = vld [vmem:[#allocation2 + $0x70] sm:$0xff]
        %v4290 = vld [vmem:[#allocation2 + $0x78] sm:$0xff]
        %v4293 = vunpack.c.l.b16 %v4281
        %v4294 = vunpack.c.l.b16 %v4282
        %v4295 = vpack.c.b16 %v4294, %v4293
        %4297 = vmatprep.subr.bf16.mxu0 0
        %4298 = vmatpush1.bf16.msra.mxu0 %v4283
        %4299 = vmatprep.subr.bf16.mxu0 0
        %4300 = vmatpush1.bf16.msra.mxu0 %v4284
        %4301 = vmatprep.subr.bf16.mxu0 0
        %4302 = vmatpush1.bf16.msra.mxu0 %v4285
        %4303 = vmatprep.subr.bf16.mxu0 0
        %4304 = vmatpush1.bf16.msra.mxu0 %v4286
        %4305 = vmatprep.subr.bf16.mxu0 0
        %4306 = vmatpush1.bf16.msra.mxu0 %v4287
        %4307 = vmatprep.subr.bf16.mxu0 0
        %4308 = vmatpush1.bf16.msra.mxu0 %v4288
        %4309 = vmatprep.subr.bf16.mxu0 0
        %4310 = vmatpush1.bf16.msra.mxu0 %v4289
        %4311 = vmatprep.subr.bf16.mxu0 0
        %4312 = vmatpush1.bf16.msra.mxu0 %v4290
        %4313 = vmatprep.subr.bf16.mxu0 0
        %4314 = vmatpush1.bf16.msra.mxu0 0
        %4315 = vmatprep.subr.bf16.mxu0 0
        %4316 = vmatpush1.bf16.msra.mxu0 0
        %4317 = vmatprep.subr.bf16.mxu0 0
        %4318 = vmatpush1.bf16.msra.mxu0 0
        %4319 = vmatprep.subr.bf16.mxu0 0
        %4320 = vmatpush1.bf16.msra.mxu0 0
        %4321 = vmatprep.subr.bf16.mxu0 0
        %4322 = vmatpush1.bf16.msra.mxu0 0
        %4323 = vmatprep.subr.bf16.mxu0 0
        %4324 = vmatpush1.bf16.msra.mxu0 0
        %4325 = vmatprep.subr.bf16.mxu0 0
        %4326 = vmatpush1.bf16.msra.mxu0 0
        %4327 = vmatprep.subr.bf16.mxu0 0
        %4328 = vmatpush1.bf16.msra.mxu0 0
        %4329 = vmatprep.mubr.bf16.mxu0 0
        %4330 = vmatmul.mubr.bf16.gmra.mrb[0].mxu0 %v4295
        %v4331 = vpop.f32.mrb[0].mxu0
        %v4332 = vadd.f32 0.0, %v4331
        %v4333 = vpop.f32.mrb[0].mxu0
        %v4334 = vpop.f32.mrb[0].mxu0
        %v4335 = vadd.f32 0.0, %v4334
        %v4336 = vpop.f32.mrb[0].mxu0
        %4337 = vdwg.mxu0
        %4338 = vst [vmem:[#allocation3 + $0x10] sm:$0xff] %v4332
        %4339 = vst [vmem:[#allocation3 + $0x18] sm:$0xff] %v4335
        %v4340 = vld [vmem:[%s302 + $0x10] sm:$0xf]
        %v4341 = vld [vmem:[%s302 + $0x14] sm:$0xf]
        %v4342 = vld [vmem:[#allocation2 + $0x80] sm:$0xff]
        %v4343 = vld [vmem:[#allocation2 + $0x88] sm:$0xff]
        %v4344 = vld [vmem:[#allocation2 + $0x90] sm:$0xff]
        %v4345 = vld [vmem:[#allocation2 + $0x98] sm:$0xff]
        %v4346 = vld [vmem:[#allocation2 + $0xa0] sm:$0xff]
        %v4347 = vld [vmem:[#allocation2 + $0xa8] sm:$0xff]
        %v4348 = vld [vmem:[#allocation2 + $0xb0] sm:$0xff]
        %v4349 = vld [vmem:[#allocation2 + $0xb8] sm:$0xff]
        %v4352 = vunpack.c.l.b16 %v4340
        %v4353 = vunpack.c.l.b16 %v4341
        %v4354 = vpack.c.b16 %v4353, %v4352
        %4356 = vmatprep.subr.bf16.mxu0 0
        %4357 = vmatpush1.bf16.msra.mxu0 %v4342
        %4358 = vmatprep.subr.bf16.mxu0 0
        %4359 = vmatpush1.bf16.msra.mxu0 %v4343
        %4360 = vmatprep.subr.bf16.mxu0 0
        %4361 = vmatpush1.bf16.msra.mxu0 %v4344
        %4362 = vmatprep.subr.bf16.mxu0 0
        %4363 = vmatpush1.bf16.msra.mxu0 %v4345
        %4364 = vmatprep.subr.bf16.mxu0 0
        %4365 = vmatpush1.bf16.msra.mxu0 %v4346
        %4366 = vmatprep.subr.bf16.mxu0 0
        %4367 = vmatpush1.bf16.msra.mxu0 %v4347
        %4368 = vmatprep.subr.bf16.mxu0 0
        %4369 = vmatpush1.bf16.msra.mxu0 %v4348
        %4370 = vmatprep.subr.bf16.mxu0 0
        %4371 = vmatpush1.bf16.msra.mxu0 %v4349
        %4372 = vmatprep.subr.bf16.mxu0 0
        %4373 = vmatpush1.bf16.msra.mxu0 0
        %4374 = vmatprep.subr.bf16.mxu0 0
        %4375 = vmatpush1.bf16.msra.mxu0 0
        %4376 = vmatprep.subr.bf16.mxu0 0
        %4377 = vmatpush1.bf16.msra.mxu0 0
        %4378 = vmatprep.subr.bf16.mxu0 0
        %4379 = vmatpush1.bf16.msra.mxu0 0
        %4380 = vmatprep.subr.bf16.mxu0 0
        %4381 = vmatpush1.bf16.msra.mxu0 0
        %4382 = vmatprep.subr.bf16.mxu0 0
        %4383 = vmatpush1.bf16.msra.mxu0 0
        %4384 = vmatprep.subr.bf16.mxu0 0
        %4385 = vmatpush1.bf16.msra.mxu0 0
        %4386 = vmatprep.subr.bf16.mxu0 0
        %4387 = vmatpush1.bf16.msra.mxu0 0
        %4388 = vmatprep.mubr.bf16.mxu0 0
        %4389 = vmatmul.mubr.bf16.gmra.mrb[0].mxu0 %v4354
        %v4390 = vpop.f32.mrb[0].mxu0
        %v4391 = vadd.f32 0.0, %v4390
        %v4392 = vpop.f32.mrb[0].mxu0
        %v4393 = vpop.f32.mrb[0].mxu0
        %v4394 = vadd.f32 0.0, %v4393
        %v4395 = vpop.f32.mrb[0].mxu0
        %4396 = vdwg.mxu0
        %4397 = vst [vmem:[#allocation3 + $0x20] sm:$0xff] %v4391
        %4398 = vst [vmem:[#allocation3 + $0x28] sm:$0xff] %v4394
        %v4399 = vld [vmem:[%s302 + $0x18] sm:$0xf]
        %v4400 = vld [vmem:[%s302 + $0x1c] sm:$0xf]
        %v4401 = vld [vmem:[#allocation2 + $0xc0] sm:$0xff]
        %v4402 = vld [vmem:[#allocation2 + $0xc8] sm:$0xff]
        %v4403 = vld [vmem:[#allocation2 + $0xd0] sm:$0xff]
        %v4404 = vld [vmem:[#allocation2 + $0xd8] sm:$0xff]
        %v4405 = vld [vmem:[#allocation2 + $0xe0] sm:$0xff]
        %v4406 = vld [vmem:[#allocation2 + $0xe8] sm:$0xff]
        %v4407 = vld [vmem:[#allocation2 + $0xf0] sm:$0xff]
        %v4408 = vld [vmem:[#allocation2 + $0xf8] sm:$0xff]
        %v4411 = vunpack.c.l.b16 %v4399
        %v4412 = vunpack.c.l.b16 %v4400
        %v4413 = vpack.c.b16 %v4412, %v4411
        %4415 = vmatprep.subr.bf16.mxu0 0
        %4416 = vmatpush1.bf16.msra.mxu0 %v4401
        %4417 = vmatprep.subr.bf16.mxu0 0
        %4418 = vmatpush1.bf16.msra.mxu0 %v4402
        %4419 = vmatprep.subr.bf16.mxu0 0
        %4420 = vmatpush1.bf16.msra.mxu0 %v4403
        %4421 = vmatprep.subr.bf16.mxu0 0
        %4422 = vmatpush1.bf16.msra.mxu0 %v4404
        %4423 = vmatprep.subr.bf16.mxu0 0
        %4424 = vmatpush1.bf16.msra.mxu0 %v4405
        %4425 = vmatprep.subr.bf16.mxu0 0
        %4426 = vmatpush1.bf16.msra.mxu0 %v4406
        %4427 = vmatprep.subr.bf16.mxu0 0
        %4428 = vmatpush1.bf16.msra.mxu0 %v4407
        %4429 = vmatprep.subr.bf16.mxu0 0
        %4430 = vmatpush1.bf16.msra.mxu0 %v4408
        %4431 = vmatprep.subr.bf16.mxu0 0
        %4432 = vmatpush1.bf16.msra.mxu0 0
        %4433 = vmatprep.subr.bf16.mxu0 0
        %4434 = vmatpush1.bf16.msra.mxu0 0
        %4435 = vmatprep.subr.bf16.mxu0 0
        %4436 = vmatpush1.bf16.msra.mxu0 0
        %4437 = vmatprep.subr.bf16.mxu0 0
        %4438 = vmatpush1.bf16.msra.mxu0 0
        %4439 = vmatprep.subr.bf16.mxu0 0
        %4440 = vmatpush1.bf16.msra.mxu0 0
        %4441 = vmatprep.subr.bf16.mxu0 0
        %4442 = vmatpush1.bf16.msra.mxu0 0
        %4443 = vmatprep.subr.bf16.mxu0 0
        %4444 = vmatpush1.bf16.msra.mxu0 0
        %4445 = vmatprep.subr.bf16.mxu0 0
        %4446 = vmatpush1.bf16.msra.mxu0 0
        %4447 = vmatprep.mubr.bf16.mxu0 0
        %4448 = vmatmul.mubr.bf16.gmra.mrb[0].mxu0 %v4413
        %v4449 = vpop.f32.mrb[0].mxu0
        %v4450 = vadd.f32 0.0, %v4449
        %v4451 = vpop.f32.mrb[0].mxu0
        %v4452 = vpop.f32.mrb[0].mxu0
        %v4453 = vadd.f32 0.0, %v4452
        %v4454 = vpop.f32.mrb[0].mxu0
        %4455 = vdwg.mxu0
        %4456 = vst [vmem:[#allocation3 + $0x30] sm:$0xff] %v4450
        %4457 = vst [vmem:[#allocation3 + $0x38] sm:$0xff] %v4453
        %v4458 = vld [vmem:[#allocation3] sm:$0xff]
        %v4459 = vld [vmem:[#allocation3 + $0x8] sm:$0xff]
        %v4460 = vld [vmem:[#allocation3 + $0x10] sm:$0xff]
        %v4461 = vld [vmem:[#allocation3 + $0x18] sm:$0xff]
        %v4462 = vld [vmem:[#allocation3 + $0x20] sm:$0xff]
        %v4463 = vld [vmem:[#allocation3 + $0x28] sm:$0xff]
        %v4464 = vld [vmem:[#allocation3 + $0x30] sm:$0xff]
        %v4465 = vld [vmem:[#allocation3 + $0x38] sm:$0xff]
        %v4466 = vld [vmem:[#allocation10 + $0xc0] sm:$0xf]
        %v4467 = vld [vmem:[#allocation10 + $0xc4] sm:$0xf]
        %v4468 = vld [vmem:[#allocation10 + $0xc8] sm:$0xf]
        %v4469 = vld [vmem:[#allocation10 + $0xcc] sm:$0xf]
        %v4470 = vld [vmem:[#allocation10 + $0xd0] sm:$0xf]
        %v4471 = vld [vmem:[#allocation10 + $0xd4] sm:$0xf]
        %v4472 = vld [vmem:[#allocation10 + $0xd8] sm:$0xf]
        %v4473 = vld [vmem:[#allocation10 + $0xdc] sm:$0xf]
        %v4474 = vld [vmem:[#allocation10 + $0xe0] sm:$0xf]
        %v4475 = vld [vmem:[#allocation10 + $0xe4] sm:$0xf]
        %v4476 = vld [vmem:[#allocation10 + $0xe8] sm:$0xf]
        %v4477 = vld [vmem:[#allocation10 + $0xec] sm:$0xf]
        %v4478 = vld [vmem:[#allocation10 + $0xf0] sm:$0xf]
        %v4479 = vld [vmem:[#allocation10 + $0xf4] sm:$0xf]
        %v4480 = vld [vmem:[#allocation10 + $0xf8] sm:$0xf]
        %v4481 = vld [vmem:[#allocation10 + $0xfc] sm:$0xf]
        %v4482 = vld [vmem:[#allocation12 + $0x3] sm:$0x1]
        %v4483 = vpack.c.bf16 %v4459, %v4458
        %v4484 = vpack.c.bf16 %v4461, %v4460
        %v4485 = vpack.c.bf16 %v4463, %v4462
        %v4486 = vpack.c.bf16 %v4465, %v4464
        %v4487 = vlaneseq
        %v4488 = vshrl.u32 %v4487, 7
        %v4489 = vsub.s32 0, %v4488
        %v4490 = vrot.slane %v4482, %v4489
        %v4507 = vunpack.c.l.b16 %v4466
        %v4508 = vunpack.c.l.b16 %v4467
        %v4509 = vunpack.c.l.b16 %v4468
        %v4510 = vunpack.c.l.b16 %v4469
        %v4511 = vunpack.c.l.b16 %v4470
        %v4512 = vunpack.c.l.b16 %v4471
        %v4513 = vunpack.c.l.b16 %v4472
        %v4514 = vunpack.c.l.b16 %v4473
        %v4515 = vunpack.c.l.b16 %v4474
        %v4516 = vunpack.c.l.b16 %v4475
        %v4517 = vunpack.c.l.b16 %v4476
        %v4518 = vunpack.c.l.b16 %v4477
        %v4519 = vunpack.c.l.b16 %v4478
        %v4520 = vunpack.c.l.b16 %v4479
        %v4521 = vunpack.c.l.b16 %v4480
        %v4522 = vunpack.c.l.b16 %v4481
        %v4523 = vpack.c.b16 %v4508, %v4507
        %v4524 = vpack.c.b16 %v4510, %v4509
        %v4525 = vpack.c.b16 %v4512, %v4511
        %v4526 = vpack.c.b16 %v4514, %v4513
        %v4527 = vpack.c.b16 %v4516, %v4515
        %v4528 = vpack.c.b16 %v4518, %v4517
        %v4529 = vpack.c.b16 %v4520, %v4519
        %v4530 = vpack.c.b16 %v4522, %v4521
        %4539 = vmatprep.subr.bf16.mxu0 0
        %4540 = vmatpush1.bf16.msra.mxu0 %v4523
        %4541 = vmatprep.subr.bf16.mxu0 0
        %4542 = vmatpush1.bf16.msra.mxu0 %v4524
        %4543 = vmatprep.subr.bf16.mxu0 0
        %4544 = vmatpush1.bf16.msra.mxu0 %v4525
        %4545 = vmatprep.subr.bf16.mxu0 0
        %4546 = vmatpush1.bf16.msra.mxu0 %v4526
        %4547 = vmatprep.subr.bf16.mxu0 0
        %4548 = vmatpush1.bf16.msra.mxu0 %v4527
        %4549 = vmatprep.subr.bf16.mxu0 0
        %4550 = vmatpush1.bf16.msra.mxu0 %v4528
        %4551 = vmatprep.subr.bf16.mxu0 0
        %4552 = vmatpush1.bf16.msra.mxu0 %v4529
        %4553 = vmatprep.subr.bf16.mxu0 0
        %4554 = vmatpush1.bf16.msra.mxu0 %v4530
        %4555 = vmatprep.subr.bf16.mxu0 0
        %4556 = vmatpush1.bf16.msra.mxu0 0
        %4557 = vmatprep.subr.bf16.mxu0 0
        %4558 = vmatpush1.bf16.msra.mxu0 0
        %4559 = vmatprep.subr.bf16.mxu0 0
        %4560 = vmatpush1.bf16.msra.mxu0 0
        %4561 = vmatprep.subr.bf16.mxu0 0
        %4562 = vmatpush1.bf16.msra.mxu0 0
        %4563 = vmatprep.subr.bf16.mxu0 0
        %4564 = vmatpush1.bf16.msra.mxu0 0
        %4565 = vmatprep.subr.bf16.mxu0 0
        %4566 = vmatpush1.bf16.msra.mxu0 0
        %4567 = vmatprep.subr.bf16.mxu0 0
        %4568 = vmatpush1.bf16.msra.mxu0 0
        %4569 = vmatprep.subr.bf16.mxu0 0
        %4570 = vmatpush1.bf16.msra.mxu0 0
        %4571 = vmatprep.mubr.bf16.mxu0 0
        %4572 = vmatmul.mubr.bf16.gmra.mrb[0].mxu0 %v4483
        %v4573 = vpop.f32.mrb[0].mxu0
        %v4574 = vadd.f32 %v4490, %v4573
        %v4575 = vpop.f32.mrb[0].mxu0
        %v4576 = vpop.f32.mrb[0].mxu0
        %v4577 = vadd.f32 %v4490, %v4576
        %v4578 = vpop.f32.mrb[0].mxu0
        %4579 = vmatprep.mubr.bf16.mxu0 0
        %4580 = vmatmul.mubr.bf16.gmra.mrb[0].mxu0 %v4484
        %v4581 = vpop.f32.mrb[0].mxu0
        %v4582 = vadd.f32 %v4490, %v4581
        %v4583 = vpop.f32.mrb[0].mxu0
        %v4584 = vpop.f32.mrb[0].mxu0
        %v4585 = vadd.f32 %v4490, %v4584
        %v4586 = vpop.f32.mrb[0].mxu0
        %4587 = vmatprep.mubr.bf16.mxu0 0
        %4588 = vmatmul.mubr.bf16.gmra.mrb[0].mxu0 %v4485
        %v4589 = vpop.f32.mrb[0].mxu0
        %v4590 = vadd.f32 %v4490, %v4589
        %v4591 = vpop.f32.mrb[0].mxu0
        %v4592 = vpop.f32.mrb[0].mxu0
        %v4593 = vadd.f32 %v4490, %v4592
        %v4594 = vpop.f32.mrb[0].mxu0
        %4595 = vmatprep.mubr.bf16.mxu0 0
        %4596 = vmatmul.mubr.bf16.gmra.mrb[0].mxu0 %v4486
        %v4597 = vpop.f32.mrb[0].mxu0
        %v4598 = vadd.f32 %v4490, %v4597
        %v4599 = vpop.f32.mrb[0].mxu0
        %v4600 = vpop.f32.mrb[0].mxu0
        %v4601 = vadd.f32 %v4490, %v4600
        %v4602 = vpop.f32.mrb[0].mxu0
        %4603 = vdwg.mxu0
        %v4604 = vmax.f32 %v4574, 0.0
        %v4605 = vmax.f32 %v4577, 0.0
        %v4606 = vmax.f32 %v4582, 0.0
        %v4607 = vmax.f32 %v4585, 0.0
        %v4608 = vmax.f32 %v4590, 0.0
        %v4609 = vmax.f32 %v4593, 0.0
        %v4610 = vmax.f32 %v4598, 0.0
        %v4611 = vmax.f32 %v4601, 0.0
        %v4612 = vld [vmem:[#allocation10 + $0x100] sm:$0xf]
        %v4613 = vld [vmem:[#allocation10 + $0x104] sm:$0xf]
        %v4614 = vld [vmem:[#allocation10 + $0x108] sm:$0xf]
        %v4615 = vld [vmem:[#allocation10 + $0x10c] sm:$0xf]
        %v4616 = vld [vmem:[#allocation10 + $0x110] sm:$0xf]
        %v4617 = vld [vmem:[#allocation10 + $0x114] sm:$0xf]
        %v4618 = vld [vmem:[#allocation10 + $0x118] sm:$0xf]
        %v4619 = vld [vmem:[#allocation10 + $0x11c] sm:$0xf]
        %v4620 = vld [vmem:[#allocation10 + $0x120] sm:$0xf]
        %v4621 = vld [vmem:[#allocation10 + $0x124] sm:$0xf]
        %v4622 = vld [vmem:[#allocation10 + $0x128] sm:$0xf]
        %v4623 = vld [vmem:[#allocation10 + $0x12c] sm:$0xf]
        %v4624 = vld [vmem:[#allocation10 + $0x130] sm:$0xf]
        %v4625 = vld [vmem:[#allocation10 + $0x134] sm:$0xf]
        %v4626 = vld [vmem:[#allocation10 + $0x138] sm:$0xf]
        %v4627 = vld [vmem:[#allocation10 + $0x13c] sm:$0xf]
        %v4628 = vld [vmem:[#allocation12 + $0x4] sm:$0x1]
        %v4629 = vpack.c.bf16 %v4605, %v4604
        %v4630 = vpack.c.bf16 %v4607, %v4606
        %v4631 = vpack.c.bf16 %v4609, %v4608
        %v4632 = vpack.c.bf16 %v4611, %v4610
        %v4633 = vlaneseq
        %v4634 = vshrl.u32 %v4633, 7
        %v4635 = vsub.s32 0, %v4634
        %v4636 = vrot.slane %v4628, %v4635
        %v4653 = vunpack.c.l.b16 %v4612
        %v4654 = vunpack.c.l.b16 %v4613
        %v4655 = vunpack.c.l.b16 %v4614
        %v4656 = vunpack.c.l.b16 %v4615
        %v4657 = vunpack.c.l.b16 %v4616
        %v4658 = vunpack.c.l.b16 %v4617
        %v4659 = vunpack.c.l.b16 %v4618
        %v4660 = vunpack.c.l.b16 %v4619
        %v4661 = vunpack.c.l.b16 %v4620
        %v4662 = vunpack.c.l.b16 %v4621
        %v4663 = vunpack.c.l.b16 %v4622
        %v4664 = vunpack.c.l.b16 %v4623
        %v4665 = vunpack.c.l.b16 %v4624
        %v4666 = vunpack.c.l.b16 %v4625
        %v4667 = vunpack.c.l.b16 %v4626
        %v4668 = vunpack.c.l.b16 %v4627
        %v4669 = vpack.c.b16 %v4654, %v4653
        %v4670 = vpack.c.b16 %v4656, %v4655
        %v4671 = vpack.c.b16 %v4658, %v4657
        %v4672 = vpack.c.b16 %v4660, %v4659
        %v4673 = vpack.c.b16 %v4662, %v4661
        %v4674 = vpack.c.b16 %v4664, %v4663
        %v4675 = vpack.c.b16 %v4666, %v4665
        %v4676 = vpack.c.b16 %v4668, %v4667
        %4685 = vmatprep.subr.bf16.mxu0 0
        %4686 = vmatpush1.bf16.msra.mxu0 %v4669
        %4687 = vmatprep.subr.bf16.mxu0 0
        %4688 = vmatpush1.bf16.msra.mxu0 %v4670
        %4689 = vmatprep.subr.bf16.mxu0 0
        %4690 = vmatpush1.bf16.msra.mxu0 %v4671
        %4691 = vmatprep.subr.bf16.mxu0 0
        %4692 = vmatpush1.bf16.msra.mxu0 %v4672
        %4693 = vmatprep.subr.bf16.mxu0 0
        %4694 = vmatpush1.bf16.msra.mxu0 %v4673
        %4695 = vmatprep.subr.bf16.mxu0 0
        %4696 = vmatpush1.bf16.msra.mxu0 %v4674
        %4697 = vmatprep.subr.bf16.mxu0 0
        %4698 = vmatpush1.bf16.msra.mxu0 %v4675
        %4699 = vmatprep.subr.bf16.mxu0 0
        %4700 = vmatpush1.bf16.msra.mxu0 %v4676
        %4701 = vmatprep.subr.bf16.mxu0 0
        %4702 = vmatpush1.bf16.msra.mxu0 0
        %4703 = vmatprep.subr.bf16.mxu0 0
        %4704 = vmatpush1.bf16.msra.mxu0 0
        %4705 = vmatprep.subr.bf16.mxu0 0
        %4706 = vmatpush1.bf16.msra.mxu0 0
        %4707 = vmatprep.subr.bf16.mxu0 0
        %4708 = vmatpush1.bf16.msra.mxu0 0
        %4709 = vmatprep.subr.bf16.mxu0 0
        %4710 = vmatpush1.bf16.msra.mxu0 0
        %4711 = vmatprep.subr.bf16.mxu0 0
        %4712 = vmatpush1.bf16.msra.mxu0 0
        %4713 = vmatprep.subr.bf16.mxu0 0
        %4714 = vmatpush1.bf16.msra.mxu0 0
        %4715 = vmatprep.subr.bf16.mxu0 0
        %4716 = vmatpush1.bf16.msra.mxu0 0
        %4717 = vmatprep.mubr.bf16.mxu0 0
        %4718 = vmatmul.mubr.bf16.gmra.mrb[0].mxu0 %v4629
        %v4719 = vpop.f32.mrb[0].mxu0
        %v4720 = vadd.f32 %v4636, %v4719
        %v4721 = vpop.f32.mrb[0].mxu0
        %v4722 = vpop.f32.mrb[0].mxu0
        %v4723 = vadd.f32 %v4636, %v4722
        %v4724 = vpop.f32.mrb[0].mxu0
        %4725 = vmatprep.mubr.bf16.mxu0 0
        %4726 = vmatmul.mubr.bf16.gmra.mrb[0].mxu0 %v4630
        %v4727 = vpop.f32.mrb[0].mxu0
        %v4728 = vadd.f32 %v4636, %v4727
        %v4729 = vpop.f32.mrb[0].mxu0
        %v4730 = vpop.f32.mrb[0].mxu0
        %v4731 = vadd.f32 %v4636, %v4730
        %v4732 = vpop.f32.mrb[0].mxu0
        %4733 = vmatprep.mubr.bf16.mxu0 0
        %4734 = vmatmul.mubr.bf16.gmra.mrb[0].mxu0 %v4631
        %v4735 = vpop.f32.mrb[0].mxu0
        %v4736 = vadd.f32 %v4636, %v4735
        %v4737 = vpop.f32.mrb[0].mxu0
        %v4738 = vpop.f32.mrb[0].mxu0
        %v4739 = vadd.f32 %v4636, %v4738
        %v4740 = vpop.f32.mrb[0].mxu0
        %4741 = vmatprep.mubr.bf16.mxu0 0
        %4742 = vmatmul.mubr.bf16.gmra.mrb[0].mxu0 %v4632
        %v4743 = vpop.f32.mrb[0].mxu0
        %v4744 = vadd.f32 %v4636, %v4743
        %v4745 = vpop.f32.mrb[0].mxu0
        %v4746 = vpop.f32.mrb[0].mxu0
        %v4747 = vadd.f32 %v4636, %v4746
        %v4748 = vpop.f32.mrb[0].mxu0
        %4749 = vdwg.mxu0
        %v4750 = vmax.f32 %v4720, 0.0
        %v4751 = vmax.f32 %v4723, 0.0
        %v4752 = vmax.f32 %v4728, 0.0
        %v4753 = vmax.f32 %v4731, 0.0
        %v4754 = vmax.f32 %v4736, 0.0
        %v4755 = vmax.f32 %v4739, 0.0
        %v4756 = vmax.f32 %v4744, 0.0
        %v4757 = vmax.f32 %v4747, 0.0
        %v4758 = vld [vmem:[#allocation10 + $0x140] sm:$0xf]
        %v4759 = vld [vmem:[#allocation10 + $0x144] sm:$0xf]
        %v4760 = vld [vmem:[#allocation10 + $0x148] sm:$0xf]
        %v4761 = vld [vmem:[#allocation10 + $0x14c] sm:$0xf]
        %v4762 = vld [vmem:[#allocation10 + $0x150] sm:$0xf]
        %v4763 = vld [vmem:[#allocation10 + $0x154] sm:$0xf]
        %v4764 = vld [vmem:[#allocation10 + $0x158] sm:$0xf]
        %v4765 = vld [vmem:[#allocation10 + $0x15c] sm:$0xf]
        %v4766 = vld [vmem:[#allocation10 + $0x160] sm:$0xf]
        %v4767 = vld [vmem:[#allocation10 + $0x164] sm:$0xf]
        %v4768 = vld [vmem:[#allocation10 + $0x168] sm:$0xf]
        %v4769 = vld [vmem:[#allocation10 + $0x16c] sm:$0xf]
        %v4770 = vld [vmem:[#allocation10 + $0x170] sm:$0xf]
        %v4771 = vld [vmem:[#allocation10 + $0x174] sm:$0xf]
        %v4772 = vld [vmem:[#allocation10 + $0x178] sm:$0xf]
        %v4773 = vld [vmem:[#allocation10 + $0x17c] sm:$0xf]
        %v4774 = vld [vmem:[#allocation12 + $0x5] sm:$0x1]
        %v4775 = vpack.c.bf16 %v4751, %v4750
        %v4776 = vpack.c.bf16 %v4753, %v4752
        %v4777 = vpack.c.bf16 %v4755, %v4754
        %v4778 = vpack.c.bf16 %v4757, %v4756
        %v4779 = vlaneseq
        %v4780 = vshrl.u32 %v4779, 7
        %v4781 = vsub.s32 0, %v4780
        %v4782 = vrot.slane %v4774, %v4781
        %v4799 = vunpack.c.l.b16 %v4758
        %v4800 = vunpack.c.l.b16 %v4759
        %v4801 = vunpack.c.l.b16 %v4760
        %v4802 = vunpack.c.l.b16 %v4761
        %v4803 = vunpack.c.l.b16 %v4762
        %v4804 = vunpack.c.l.b16 %v4763
        %v4805 = vunpack.c.l.b16 %v4764
        %v4806 = vunpack.c.l.b16 %v4765
        %v4807 = vunpack.c.l.b16 %v4766
        %v4808 = vunpack.c.l.b16 %v4767
        %v4809 = vunpack.c.l.b16 %v4768
        %v4810 = vunpack.c.l.b16 %v4769
        %v4811 = vunpack.c.l.b16 %v4770
        %v4812 = vunpack.c.l.b16 %v4771
        %v4813 = vunpack.c.l.b16 %v4772
        %v4814 = vunpack.c.l.b16 %v4773
        %v4815 = vpack.c.b16 %v4800, %v4799
        %v4816 = vpack.c.b16 %v4802, %v4801
        %v4817 = vpack.c.b16 %v4804, %v4803
        %v4818 = vpack.c.b16 %v4806, %v4805
        %v4819 = vpack.c.b16 %v4808, %v4807
        %v4820 = vpack.c.b16 %v4810, %v4809
        %v4821 = vpack.c.b16 %v4812, %v4811
        %v4822 = vpack.c.b16 %v4814, %v4813
        %4831 = vmatprep.subr.bf16.mxu0 0
        %4832 = vmatpush1.bf16.msra.mxu0 %v4815
        %4833 = vmatprep.subr.bf16.mxu0 0
        %4834 = vmatpush1.bf16.msra.mxu0 %v4816
        %4835 = vmatprep.subr.bf16.mxu0 0
        %4836 = vmatpush1.bf16.msra.mxu0 %v4817
        %4837 = vmatprep.subr.bf16.mxu0 0
        %4838 = vmatpush1.bf16.msra.mxu0 %v4818
        %4839 = vmatprep.subr.bf16.mxu0 0
        %4840 = vmatpush1.bf16.msra.mxu0 %v4819
        %4841 = vmatprep.subr.bf16.mxu0 0
        %4842 = vmatpush1.bf16.msra.mxu0 %v4820
        %4843 = vmatprep.subr.bf16.mxu0 0
        %4844 = vmatpush1.bf16.msra.mxu0 %v4821
        %4845 = vmatprep.subr.bf16.mxu0 0
        %4846 = vmatpush1.bf16.msra.mxu0 %v4822
        %4847 = vmatprep.subr.bf16.mxu0 0
        %4848 = vmatpush1.bf16.msra.mxu0 0
        %4849 = vmatprep.subr.bf16.mxu0 0
        %4850 = vmatpush1.bf16.msra.mxu0 0
        %4851 = vmatprep.subr.bf16.mxu0 0
        %4852 = vmatpush1.bf16.msra.mxu0 0
        %4853 = vmatprep.subr.bf16.mxu0 0
        %4854 = vmatpush1.bf16.msra.mxu0 0
        %4855 = vmatprep.subr.bf16.mxu0 0
        %4856 = vmatpush1.bf16.msra.mxu0 0
        %4857 = vmatprep.subr.bf16.mxu0 0
        %4858 = vmatpush1.bf16.msra.mxu0 0
        %4859 = vmatprep.subr.bf16.mxu0 0
        %4860 = vmatpush1.bf16.msra.mxu0 0
        %4861 = vmatprep.subr.bf16.mxu0 0
        %4862 = vmatpush1.bf16.msra.mxu0 0
        %4863 = vmatprep.mubr.bf16.mxu0 0
        %4864 = vmatmul.mubr.bf16.gmra.mrb[0].mxu0 %v4775
        %v4865 = vpop.f32.mrb[0].mxu0
        %v4866 = vadd.f32 %v4782, %v4865
        %v4867 = vpop.f32.mrb[0].mxu0
        %v4868 = vpop.f32.mrb[0].mxu0
        %v4869 = vadd.f32 %v4782, %v4868
        %v4870 = vpop.f32.mrb[0].mxu0
        %4871 = vmatprep.mubr.bf16.mxu0 0
        %4872 = vmatmul.mubr.bf16.gmra.mrb[0].mxu0 %v4776
        %v4873 = vpop.f32.mrb[0].mxu0
        %v4874 = vadd.f32 %v4782, %v4873
        %v4875 = vpop.f32.mrb[0].mxu0
        %v4876 = vpop.f32.mrb[0].mxu0
        %v4877 = vadd.f32 %v4782, %v4876
        %v4878 = vpop.f32.mrb[0].mxu0
        %4879 = vmatprep.mubr.bf16.mxu0 0
        %4880 = vmatmul.mubr.bf16.gmra.mrb[0].mxu0 %v4777
        %v4881 = vpop.f32.mrb[0].mxu0
        %v4882 = vadd.f32 %v4782, %v4881
        %v4883 = vpop.f32.mrb[0].mxu0
        %v4884 = vpop.f32.mrb[0].mxu0
        %v4885 = vadd.f32 %v4782, %v4884
        %v4886 = vpop.f32.mrb[0].mxu0
        %4887 = vmatprep.mubr.bf16.mxu0 0
        %4888 = vmatmul.mubr.bf16.gmra.mrb[0].mxu0 %v4778
        %v4889 = vpop.f32.mrb[0].mxu0
        %v4890 = vadd.f32 %v4782, %v4889
        %v4891 = vpop.f32.mrb[0].mxu0
        %v4892 = vpop.f32.mrb[0].mxu0
        %v4893 = vadd.f32 %v4782, %v4892
        %v4894 = vpop.f32.mrb[0].mxu0
        %4895 = vdwg.mxu0
        %4896 = vst [vmem:[%s346] sm:$0xff] %v4866
        %4897 = vst [vmem:[%s346 + $0x8] sm:$0xff] %v4869
        %4898 = vst [vmem:[%s346 + $0x10] sm:$0xff] %v4874
        %4899 = vst [vmem:[%s346 + $0x18] sm:$0xff] %v4877
        %4900 = vst [vmem:[%s346 + $0x20] sm:$0xff] %v4882
        %4901 = vst [vmem:[%s346 + $0x28] sm:$0xff] %v4885
        %4902 = vst [vmem:[%s346 + $0x30] sm:$0xff] %v4890
        %4903 = vst [vmem:[%s346 + $0x38] sm:$0xff] %v4893
        %s4904 = sand.u32 %s154, 1
        %s4905 = scalar_lea.sflag [#allocation6], %s4904
        %s4906 = sand.u32 %s154, 1
        %s4907 = smul.addr %s4906, 64
        %s4908 = scalar_lea.vmem [#allocation13], %s4907
        // Predicated region
        $region61: #{tpu_custom_call.1} parent=39 // pred_check
          %p4909 = pneg %p164
        $region62: #{tpu_custom_call.1} parent=39 // pred_check_branch
          %4911 = sbr.rel (%p4909) target = $region64
        $region63: #{tpu_custom_call.1} parent=39 // pred_region
          %s4912 = smul.u32 8, %s26
          %s4914 = ssub.s32 1024, 1024
          %4915 = vsyncadd %s4905, %s4914
          %s4916 = smul.addr %s4912, 128
          %s4917 = scalar_lea.hbm %s5, %s4916
          %s4918 = sshll.u32 %s4908, 4
          %s4919 = int_to_ptr.vmem [resolvable:$true] %s4918
          %4924 = dma.vmem_to_hbm [thread:$0]  %s4919, 1024, %s4917, %s4905, 128, 128, 8
        $region64: #{tpu_custom_call.1} parent=39 // pred_fallthru
          _
      $region40: #{tpu_custom_call.1} parent=5 // pred_fallthru
        _
      %p4925 = scmp.le.s32.totalorder 2, %s21
      // Predicated region
      $region65: #{tpu_custom_call.1} parent=5 // pred_check
        %p4926 = pneg %p4925
      $region66: #{tpu_custom_call.1} parent=5 // pred_check_branch
        %4928 = sbr.rel (%p4926) target = $region68
      $region67: #{tpu_custom_call.1} parent=5 // pred_region
        %s4929 = ssub.s32 %s21, 2
        // Predicated region
        $region69: #{tpu_custom_call.1} parent=67 // pred_check
          %p4930 = pneg %p170
        $region70: #{tpu_custom_call.1} parent=67 // pred_check_branch
          %4932 = sbr.rel (%p4930) target = $region72
        $region71: #{tpu_custom_call.1} parent=67 // pred_region
          %s4933 = sand.u32 %s155, 1
          %s4934 = scalar_lea.sflag [#allocation6], %s4933
          %s4935 = sand.u32 %s155, 1
          %s4936 = smul.addr %s4935, 64
          %s4937 = scalar_lea.vmem [#allocation13], %s4936
          %4938 = dma.done %s4934, 1024
        $region72: #{tpu_custom_call.1} parent=67 // pred_fallthru
          _
      $region68: #{tpu_custom_call.1} parent=5 // pred_fallthru
        _
    $region6: #{tpu_custom_call.1} parent=1 // loop_footer
      %s25 = sadd.s32 1, %s21
    $region7: #{tpu_custom_call.1} parent=1 // loop_footer_branch
      %20 = sbr.rel target = $region3
    $region8: #{tpu_custom_call.1} parent=1 // loop_exit
      _
    %4939 = vsyncpa [#allocation5], 1
    %s4940 = scalar_lea.sflag [#allocation5], 1
    %4941 = vsyncpa %s4940, 1
    %4942 = vsyncpa [#allocation8], 1
    %s4943 = scalar_lea.sflag [#allocation8], 1
    %4944 = vsyncpa %s4943, 1
    %4945 = vsyncpa [#allocation11], 1
    %4946 = vsyncpa [#allocation6], 1
    %s4947 = scalar_lea.sflag [#allocation6], 1
    %4948 = vsyncpa %s4947, 1

</llo_original>
